<compile_context>
chip_gen: v5e
topology: v5e:2x2
jax: 0.10.0
libtpu: 0.0.40
codegen_flags: <defaults>
</compile_context>

<pallas_src>
import jax
import jax.numpy as jnp
from jax.experimental import pallas as pl
from jax.experimental.pallas import tpu as pltpu

BN_EPS = 1e-5            # torch.nn.BatchNorm1d default
LAYER_SIZE = 128         # hardcoded in patchDeformationMLP
PATCH_DIM = 2            # template_sphere=False
PATCH_DEFORM_DIM = 3

# ---- packed per-primitive "vec" row slab layout (each row padded to cpad lanes) ----
R_PW1, R_PB1, R_PG1, R_PBT1 = 0, 2, 3, 4        # patch conv1 weight rows / bias / BN
R_PB2, R_PG2, R_PBT2 = 5, 6, 7                  # patch conv2 bias / BN
R_PB3 = 8                                       # patch conv3 bias
R_DG1, R_DBT1 = 9, 10                           # decoder BN1
R_DB2, R_DG2, R_DBT2 = 11, 12, 13               # decoder conv2 bias / BN2
R_DB3, R_DG3, R_DBT3 = 14, 15, 16               # decoder conv3 bias / BN3
R_DB4 = 17                                      # decoder conv4 bias
NUM_ROWS = 18

# ---- MXU weight-slab indices (each (cpad, cpad), zero-padded) ----
S_PW2, S_PW3, S_DW1A, S_DW2, S_DW3, S_DW4 = range(6)
NUM_SLABS = 6


# ----------------------------- kernel -----------------------------

def _make_kernel(B, N, cpad):
    M = B * N

    def kernel(g_ref, lat_ref, wmx_ref, vec_ref, out_ref):
        wdt = wmx_ref.dtype

        def row(r):
            return vec_ref[r:r + 1, :]                          # (1, cpad)

        def mxu(h, s):
            # cast LHS to the weight dtype only at the MXU boundary; f32 accumulate
            return jnp.dot(h.astype(wdt), wmx_ref[s],
                           preferred_element_type=jnp.float32)

        def bn_relu(h, r_gamma, r_beta):
            # training-mode BatchNorm1d over all B*N points; single-pass stats
            # (var = E[x^2] - mean^2) folded into one scale+shift FMA.
            mean = jnp.mean(h, axis=0, keepdims=True)
            var = jnp.maximum(
                jnp.mean(h * h, axis=0, keepdims=True) - mean * mean, 0.0)
            s = row(r_gamma) * jax.lax.rsqrt(var + BN_EPS)       # EUP (free slot)
            return jnp.maximum(h * s + (row(r_beta) - mean * s), 0.0)

        # ---- patchDeformationMLP conv1: (M,2)@(2,128); K=2 -> 2 VPU broadcast-FMAs
        g = g_ref[...]                                           # (M, 2)
        h = g[:, 0:1] * row(R_PW1) + g[:, 1:2] * row(R_PW1 + 1) + row(R_PB1)
        h = bn_relu(h, R_PG1, R_PBT1)

        # ---- patch conv2 (128x128) -> MXU
        h = mxu(h, S_PW2) + row(R_PB2)
        h = bn_relu(h, R_PG2, R_PBT2)

        # ---- patch conv3 (out=3, tanh) -> padded MXU slab; padded lanes = tanh(0)=0
        t = jnp.tanh(mxu(h, S_PW3) + row(R_PB3))

        # ---- decoder conv1 = patch half (t @ dw1a on MXU) + latent half precomputed
        # per batch row in the wrapper, broadcast to the N points of each row with a
        # single tile-aligned broadcast + merge-reshape (N is a multiple of 8).
        latm = jnp.broadcast_to(lat_ref[...][:, None, :], (B, N, cpad)).reshape(M, cpad)
        y = mxu(t, S_DW1A) + latm
        y = bn_relu(y, R_DG1, R_DBT1)

        # ---- decoder conv2 / conv3 -> MXU
        y = mxu(y, S_DW2) + row(R_DB2)
        y = bn_relu(y, R_DG2, R_DBT2)
        y = mxu(y, S_DW3) + row(R_DB3)
        y = bn_relu(y, R_DG3, R_DBT3)

        # ---- decoder conv4 (n3 -> dim) -> padded MXU slab; padded output lanes are
        # tanh(0)*0.5 = 0, so the (M, cpad) store is lane-dense and unmasked.
        out_ref[...] = jnp.tanh(mxu(y, S_DW4) + row(R_DB4)) * 0.5

    return kernel


def _atlas_fused(g, lat, wmx, vec, *, B, N, cpad):
    """Run all primitives' patchDeformation + decoder in one pallas_call."""
    P, M, _ = g.shape
    nr = vec.shape[1]
    # TODO(synk): at realistic AtlasNet sizes (c_dim=1024, sampling_point=2500, large B)
    # add an M-tile grid axis with per-tile BN partial sums and set vmem_limit_bytes
    # (v7x has 64 MiB VMEM / 2 TCs); unnecessary at these demo shapes.
    return pl.pallas_call(
        _make_kernel(B, N, cpad),
        out_shape=jax.ShapeDtypeStruct((P, M, cpad), jnp.float32),
        grid=(P,),
        in_specs=[
            pl.BlockSpec((None, M, PATCH_DIM), lambda i: (i, 0, 0)),       # rand grids
            pl.BlockSpec((None, B, cpad), lambda i: (i, 0, 0)),            # latent term
            pl.BlockSpec((None, NUM_SLABS, cpad, cpad), lambda i: (i, 0, 0, 0)),  # MXU weights
            pl.BlockSpec((None, nr, cpad), lambda i: (i, 0, 0)),           # packed row slab
        ],
        out_specs=pl.BlockSpec((None, M, cpad), lambda i: (i, 0, 0)),
        compiler_params=pltpu.CompilerParams(dimension_semantics=("parallel",)),
    )(g, lat, wmx, vec)


# ----------------------------- parameter setup / packing -----------------------------

def _conv_params(key, c_in, c_out):
    # torch Conv1d default: uniform(-1/sqrt(fan_in), 1/sqrt(fan_in))
    kw, kb = jax.random.split(key)
    bound = 1.0 / (c_in ** 0.5)
    w = jax.random.uniform(kw, (c_in, c_out), jnp.float32, -bound, bound)
    b = jax.random.uniform(kb, (c_out,), jnp.float32, -bound, bound)
    return w, b


def _bn_params(c):
    return jnp.ones((c,), jnp.float32), jnp.zeros((c,), jnp.float32)


def _pad_row(v, width):
    v = jnp.asarray(v, jnp.float32).reshape(-1)
    return jnp.pad(v, (0, width - v.shape[0]))


def _pad_mat(w, size):
    w = jnp.asarray(w, jnp.float32)
    return jnp.pad(w, ((0, size - w.shape[0]), (0, size - w.shape[1])))


def init_raw_params(key, c_dim=128, dim=2, primitive_num=2):
    """Per-primitive parameters in plain (unpacked) form, torch-default init."""
    nlat = PATCH_DEFORM_DIM + c_dim
    n2, n3 = nlat // 2, nlat // 4
    raw = []
    for _ in range(primitive_num):
        keys = jax.random.split(key, 8)
        key = keys[0]
        pw1, pb1 = _conv_params(keys[1], PATCH_DIM, LAYER_SIZE)
        pg1, pbt1 = _bn_params(LAYER_SIZE)
        pw2, pb2 = _conv_params(keys[2], LAYER_SIZE, LAYER_SIZE)
        pg2, pbt2 = _bn_params(LAYER_SIZE)
        pw3, pb3 = _conv_params(keys[3], LAYER_SIZE, PATCH_DEFORM_DIM)
        dw1, db1 = _conv_params(keys[4], nlat, nlat)
        dg1, dbt1 = _bn_params(nlat)
        dw2, db2 = _conv_params(keys[5], nlat, n2)
        dg2, dbt2 = _bn_params(n2)
        dw3, db3 = _conv_params(keys[6], n2, n3)
        dg3, dbt3 = _bn_params(n3)
        dw4, db4 = _conv_params(keys[7], n3, dim)
        raw.append(dict(pw1=pw1, pb1=pb1, pg1=pg1, pbt1=pbt1,
                        pw2=pw2, pb2=pb2, pg2=pg2, pbt2=pbt2,
                        pw3=pw3, pb3=pb3,
                        dw1=dw1, db1=db1, dg1=dg1, dbt1=dbt1,
                        dw2=dw2, db2=db2, dg2=dg2, dbt2=dbt2,
                        dw3=dw3, db3=db3, dg3=dg3, dbt3=dbt3,
                        dw4=dw4, db4=db4))
    meta = dict(c_dim=c_dim, dim=dim, nlat=nlat, n2=n2, n3=n3)
    return raw, meta


def pack_params(raw, meta, mxu_dtype=jnp.bfloat16):
    """Pack per-primitive params into the kernel's 4 DMA-friendly slabs."""
    dim, nlat = meta["dim"], meta["nlat"]
    cpad = -(-max(nlat, LAYER_SIZE) // 128) * 128            # padded channel width
    nr_pad = -(-NUM_ROWS // 8) * 8

    wmx_l, vec_l, dw1b_l, db1_l = [], [], [], []
    for r in raw:
        dw1a = r["dw1"][:PATCH_DEFORM_DIM]                   # (3, nlat)  patch half
        dw1b = r["dw1"][PATCH_DEFORM_DIM:]                   # (c_dim, nlat) latent half

        # MXU weight slab: six zero-padded (cpad, cpad) matrices, stored in mxu_dtype
        # (bf16 halves the dominant per-step DMA; accumulation stays f32 in-kernel).
        wmx_l.append(jnp.stack([
            _pad_mat(r["pw2"], cpad), _pad_mat(r["pw3"], cpad), _pad_mat(dw1a, cpad),
            _pad_mat(r["dw2"], cpad), _pad_mat(r["dw3"], cpad), _pad_mat(r["dw4"], cpad),
        ]).astype(mxu_dtype))

        # Packed row slab (biases / BN affine / patch conv1 weight), zero-padded lanes.
        rows = [r["pw1"][0], r["pw1"][1], r["pb1"], r["pg1"], r["pbt1"],
                r["pb2"], r["pg2"], r["pbt2"], r["pb3"],
                r["dg1"], r["dbt1"], r["db2"], r["dg2"], r["dbt2"],
                r["db3"], r["dg3"], r["dbt3"], r["db4"]]
        vec = jnp.stack([_pad_row(v, cpad) for v in rows])
        vec_l.append(jnp.pad(vec, ((0, nr_pad - NUM_ROWS), (0, 0))))

        # latent half of decoder conv1, pre-padded so the wrapper einsum emits (B, cpad)
        dw1b_l.append(jnp.pad(dw1b, ((0, 0), (0, cpad - nlat))))
        db1_l.append(_pad_row(r["db1"], cpad))

    return dict(wmx=jnp.stack(wmx_l),          # (P, 6, cpad, cpad) mxu_dtype
                vec=jnp.stack(vec_l),          # (P, NR_pad, cpad)  f32
                dw1b=jnp.stack(dw1b_l),        # (P, c_dim, cpad)   f32
                db1=jnp.stack(db1_l),          # (P, cpad)          f32
                dim=dim, cpad=cpad)


# ----------------------------- forward (matches AtlasNetV2.forward) -----------------------------

def _make_grids(key, P, B, N):
    # torch: rand_grid ~ U(0,1); generated directly point-major (P, B, N, 2).
    return jax.random.uniform(key, (P, B, N, PATCH_DIM), dtype=jnp.float32)


def atlasnet_v2_forward(x, params, grids):
    """x: (B, c_dim); grids: (P, B, N, 2).  Returns list of (B, N, dim), one per primitive."""
    B = x.shape[0]
    P, _, N, _ = grids.shape
    dim, cpad = params["dim"], params["cpad"]
    M = B * N
    g = grids.reshape(P, M, PATCH_DIM)

    # latent half of decoder conv1 (+ its bias), once per batch row per primitive,
    # already in the cpad-lane space (no runtime pad).
    lat = jnp.einsum("bc,pcn->pbn", x, params["dw1b"]) + params["db1"][:, None, :]

    out = _atlas_fused(g, lat, params["wmx"], params["vec"],
                       B=B, N=N, cpad=cpad)                   # (P, M, cpad)
    out = out[:, :, :dim].reshape(P, B, N, dim)
    return [out[i] for i in range(P)]


# ----------------------------- pure-JAX reference (unfused, unpadded, f32) -----------------------------

def _reference_forward(x, raw, grids):
    B = x.shape[0]
    P, _, N, _ = grids.shape

    def cbr(h, w, b, gm, bt):
        h = h @ w + b
        m = h.mean(axis=0, keepdims=True)
        v = jnp.mean((h - m) ** 2, axis=0, keepdims=True)      # biased var (torch fwd)
        return jnp.maximum((h - m) / jnp.sqrt(v + BN_EPS) * gm + bt, 0.0)

    outs = []
    for p in range(P):
        r = raw[p]
        g = grids[p].reshape(B * N, PATCH_DIM)
        h = cbr(g, r["pw1"], r["pb1"], r["pg1"], r["pbt1"])
        h = cbr(h, r["pw2"], r["pb2"], r["pg2"], r["pbt2"])
        h = jnp.tanh(h @ r["pw3"] + r["pb3"])
        y = jnp.concatenate([h, jnp.repeat(x, N, axis=0)], axis=1)
        y = cbr(y, r["dw1"], r["db1"], r["dg1"], r["dbt1"])
        y = cbr(y, r["dw2"], r["db2"], r["dg2"], r["dbt2"])
        y = cbr(y, r["dw3"], r["db3"], r["dg3"], r["dbt3"])
        y = jnp.tanh(y @ r["dw4"] + r["db4"]) * 0.5
        outs.append(y.reshape(B, N, -1))
    return outs


if __name__ == "__main__":
    # Small shapes consistent with the module: B=2, c_dim=32, dim=2,
    # sampling_point=256, primitives_num=2  =>  N = 128 points per primitive.
    B, C_DIM, DIM = 2, 32, 2
    SAMPLING_POINT, PRIMITIVES = 256, 2
    N = SAMPLING_POINT // PRIMITIVES

    root = jax.random.PRNGKey(0)
    k_param, k_x, k_grid = jax.random.split(root, 3)

    raw, meta = init_raw_params(k_param, c_dim=C_DIM, dim=DIM, primitive_num=PRIMITIVES)
    x = jax.random.normal(k_x, (B, C_DIM), jnp.float32)
    grids = _make_grids(k_grid, PRIMITIVES, B, N)

    refs = _reference_forward(x, raw, grids)

    # 1) structural check: same kernel with f32 MXU slabs must match the plain math tightly.
    outs32 = atlasnet_v2_forward(x, pack_params(raw, meta, mxu_dtype=jnp.float32), grids)
    outs32 = [jax.block_until_ready(o) for o in outs32]
    for o, r in zip(outs32, refs):
        err = float(jnp.max(jnp.abs(o - r)))
        assert err < 2e-3, f"f32 kernel vs reference max abs err {err}"

    # 2) production path: bf16 MXU weight slab (halves the dominant per-step DMA).
    #    Only bf16 weight/LHS quantization at the MXU boundary differs from the f32
    #    reference, so the tolerance is correspondingly looser.
    outs = atlasnet_v2_forward(x, pack_params(raw, meta, mxu_dtype=jnp.bfloat16), grids)
    outs = [jax.block_until_ready(o) for o in outs]
    assert len(outs) == PRIMITIVES
    for o, r in zip(outs, refs):
        assert o.shape == (B, N, DIM)
        assert bool(jnp.all(jnp.isfinite(o)))
        assert bool(jnp.all(jnp.abs(o) <= 0.5 + 1e-6))          # tanh(.)/2 range
        err = float(jnp.max(jnp.abs(o - r)))
        assert err < 8e-2, f"bf16 kernel vs f32 reference max abs err {err}"

    print("KERNEL_OK")
</pallas_src>

<mosaic_0001>
module attributes {stable_mosaic.version = 11 : i64} {
  func.func @kernel(%arg0: i32, %arg1: memref<1x256x2xf32, #tpu.memory_space<vmem>>, %arg2: memref<1x2x128xf32, #tpu.memory_space<vmem>>, %arg3: memref<1x6x128x128xf32, #tpu.memory_space<vmem>>, %arg4: memref<1x24x128xf32, #tpu.memory_space<vmem>>, %arg5: memref<1x256x128xf32, #tpu.memory_space<vmem>>) attributes {dimension_semantics = [#tpu.dimension_semantics<parallel>], iteration_bounds = array<i64: 2>, scalar_prefetch = 0 : i64, scratch_operands = 0 : i64, tpu.core_type = #tpu.core_type<tc>, window_params = [{transform_indices = @transform_0, window_bounds = array<i64: 1, 256, 2>}, {transform_indices = @transform_1, window_bounds = array<i64: 1, 2, 128>}, {transform_indices = @transform_2, window_bounds = array<i64: 1, 6, 128, 128>}, {transform_indices = @transform_3, window_bounds = array<i64: 1, 24, 128>}, {transform_indices = @transform_4, window_bounds = array<i64: 1, 256, 128>}]} {
    %c0 = arith.constant 0 : index
    %c0_0 = arith.constant 0 : index
    %c0_1 = arith.constant 0 : index
    %0 = vector.load %arg1[%c0, %c0_0, %c0_1] : memref<1x256x2xf32, #tpu.memory_space<vmem>>, vector<1x256x2xf32>
    %1 = vector.shape_cast %0 : vector<1x256x2xf32> to vector<256x2xf32>
    %2 = vector.extract_strided_slice %1 {offsets = [0, 0], sizes = [256, 1], strides = [1, 1]} : vector<256x2xf32> to vector<256x1xf32>
    %c0_2 = arith.constant 0 : index
    %c0_3 = arith.constant 0 : index
    %c0_4 = arith.constant 0 : index
    %3 = vector.load %arg4[%c0_2, %c0_3, %c0_4] : memref<1x24x128xf32, #tpu.memory_space<vmem>>, vector<1x1x128xf32>
    %4 = vector.shape_cast %3 : vector<1x1x128xf32> to vector<1x128xf32>
    %5 = vector.broadcast %2 : vector<256x1xf32> to vector<256x128xf32>
    %6 = vector.broadcast %4 : vector<1x128xf32> to vector<256x128xf32>
    %7 = arith.mulf %5, %6 : vector<256x128xf32>
    %8 = vector.extract_strided_slice %1 {offsets = [0, 1], sizes = [256, 1], strides = [1, 1]} : vector<256x2xf32> to vector<256x1xf32>
    %c0_5 = arith.constant 0 : index
    %c1 = arith.constant 1 : index
    %c0_6 = arith.constant 0 : index
    %9 = vector.load %arg4[%c0_5, %c1, %c0_6] : memref<1x24x128xf32, #tpu.memory_space<vmem>>, vector<1x1x128xf32>
    %10 = vector.shape_cast %9 : vector<1x1x128xf32> to vector<1x128xf32>
    %11 = vector.broadcast %8 : vector<256x1xf32> to vector<256x128xf32>
    %12 = vector.broadcast %10 : vector<1x128xf32> to vector<256x128xf32>
    %13 = arith.mulf %11, %12 : vector<256x128xf32>
    %14 = arith.addf %7, %13 : vector<256x128xf32>
    %c0_7 = arith.constant 0 : index
    %c2 = arith.constant 2 : index
    %c0_8 = arith.constant 0 : index
    %15 = vector.load %arg4[%c0_7, %c2, %c0_8] : memref<1x24x128xf32, #tpu.memory_space<vmem>>, vector<1x1x128xf32>
    %16 = vector.shape_cast %15 : vector<1x1x128xf32> to vector<1x128xf32>
    %17 = vector.broadcast %16 : vector<1x128xf32> to vector<256x128xf32>
    %18 = arith.addf %14, %17 : vector<256x128xf32>
    %cst = arith.constant dense<0.000000e+00> : vector<128xf32>
    %19 = vector.multi_reduction <add>, %18, %cst [0] : vector<256x128xf32> to vector<128xf32>
    %20 = vector.shape_cast %19 : vector<128xf32> to vector<1x128xf32>
    %cst_9 = arith.constant 2.560000e+02 : f32
    %21 = vector.broadcast %cst_9 : f32 to vector<1x128xf32>
    %22 = arith.divf %20, %21 : vector<1x128xf32>
    %23 = arith.mulf %18, %18 : vector<256x128xf32>
    %cst_10 = arith.constant dense<0.000000e+00> : vector<128xf32>
    %24 = vector.multi_reduction <add>, %23, %cst_10 [0] : vector<256x128xf32> to vector<128xf32>
    %25 = vector.shape_cast %24 : vector<128xf32> to vector<1x128xf32>
    %cst_11 = arith.constant 2.560000e+02 : f32
    %26 = vector.broadcast %cst_11 : f32 to vector<1x128xf32>
    %27 = arith.divf %25, %26 : vector<1x128xf32>
    %28 = arith.mulf %22, %22 : vector<1x128xf32>
    %29 = arith.subf %27, %28 : vector<1x128xf32>
    %cst_12 = arith.constant 0.000000e+00 : f32
    %30 = vector.broadcast %cst_12 : f32 to vector<1x128xf32>
    %31 = arith.maximumf %29, %30 : vector<1x128xf32>
    %c0_13 = arith.constant 0 : index
    %c3 = arith.constant 3 : index
    %c0_14 = arith.constant 0 : index
    %32 = vector.load %arg4[%c0_13, %c3, %c0_14] : memref<1x24x128xf32, #tpu.memory_space<vmem>>, vector<1x1x128xf32>
    %33 = vector.shape_cast %32 : vector<1x1x128xf32> to vector<1x128xf32>
    %cst_15 = arith.constant 9.99999974E-6 : f32
    %34 = vector.broadcast %cst_15 : f32 to vector<1x128xf32>
    %35 = arith.addf %31, %34 : vector<1x128xf32>
    %36 = math.rsqrt %35 : vector<1x128xf32>
    %37 = arith.mulf %33, %36 : vector<1x128xf32>
    %38 = vector.broadcast %37 : vector<1x128xf32> to vector<256x128xf32>
    %39 = arith.mulf %18, %38 : vector<256x128xf32>
    %c0_16 = arith.constant 0 : index
    %c4 = arith.constant 4 : index
    %c0_17 = arith.constant 0 : index
    %40 = vector.load %arg4[%c0_16, %c4, %c0_17] : memref<1x24x128xf32, #tpu.memory_space<vmem>>, vector<1x1x128xf32>
    %41 = vector.shape_cast %40 : vector<1x1x128xf32> to vector<1x128xf32>
    %42 = arith.mulf %22, %37 : vector<1x128xf32>
    %43 = arith.subf %41, %42 : vector<1x128xf32>
    %44 = vector.broadcast %43 : vector<1x128xf32> to vector<256x128xf32>
    %45 = arith.addf %39, %44 : vector<256x128xf32>
    %cst_18 = arith.constant 0.000000e+00 : f32
    %46 = vector.broadcast %cst_18 : f32 to vector<256x128xf32>
    %47 = arith.maximumf %45, %46 : vector<256x128xf32>
    %c0_19 = arith.constant 0 : index
    %c0_20 = arith.constant 0 : index
    %c0_21 = arith.constant 0 : index
    %c0_22 = arith.constant 0 : index
    %48 = vector.load %arg3[%c0_19, %c0_20, %c0_21, %c0_22] : memref<1x6x128x128xf32, #tpu.memory_space<vmem>>, vector<1x1x128x128xf32>
    %49 = vector.shape_cast %48 : vector<1x1x128x128xf32> to vector<128x128xf32>
    %cst_23 = arith.constant dense<0.000000e+00> : vector<256x128xf32>
    %50 = tpu.matmul %47, %49, %cst_23 {dimension_numbers = #tpu.dot_dimension_numbers<[1], [0], [0], [1], [0, 0, 1, 1], [], []>} : vector<256x128xf32>, vector<128x128xf32>, vector<256x128xf32> -> vector<256x128xf32>
    %c0_24 = arith.constant 0 : index
    %c5 = arith.constant 5 : index
    %c0_25 = arith.constant 0 : index
    %51 = vector.load %arg4[%c0_24, %c5, %c0_25] : memref<1x24x128xf32, #tpu.memory_space<vmem>>, vector<1x1x128xf32>
    %52 = vector.shape_cast %51 : vector<1x1x128xf32> to vector<1x128xf32>
    %53 = vector.broadcast %52 : vector<1x128xf32> to vector<256x128xf32>
    %54 = arith.addf %50, %53 : vector<256x128xf32>
    %cst_26 = arith.constant dense<0.000000e+00> : vector<128xf32>
    %55 = vector.multi_reduction <add>, %54, %cst_26 [0] : vector<256x128xf32> to vector<128xf32>
    %56 = vector.shape_cast %55 : vector<128xf32> to vector<1x128xf32>
    %cst_27 = arith.constant 2.560000e+02 : f32
    %57 = vector.broadcast %cst_27 : f32 to vector<1x128xf32>
    %58 = arith.divf %56, %57 : vector<1x128xf32>
    %59 = arith.mulf %54, %54 : vector<256x128xf32>
    %cst_28 = arith.constant dense<0.000000e+00> : vector<128xf32>
    %60 = vector.multi_reduction <add>, %59, %cst_28 [0] : vector<256x128xf32> to vector<128xf32>
    %61 = vector.shape_cast %60 : vector<128xf32> to vector<1x128xf32>
    %cst_29 = arith.constant 2.560000e+02 : f32
    %62 = vector.broadcast %cst_29 : f32 to vector<1x128xf32>
    %63 = arith.divf %61, %62 : vector<1x128xf32>
    %64 = arith.mulf %58, %58 : vector<1x128xf32>
    %65 = arith.subf %63, %64 : vector<1x128xf32>
    %cst_30 = arith.constant 0.000000e+00 : f32
    %66 = vector.broadcast %cst_30 : f32 to vector<1x128xf32>
    %67 = arith.maximumf %65, %66 : vector<1x128xf32>
    %c0_31 = arith.constant 0 : index
    %c6 = arith.constant 6 : index
    %c0_32 = arith.constant 0 : index
    %68 = vector.load %arg4[%c0_31, %c6, %c0_32] : memref<1x24x128xf32, #tpu.memory_space<vmem>>, vector<1x1x128xf32>
    %69 = vector.shape_cast %68 : vector<1x1x128xf32> to vector<1x128xf32>
    %cst_33 = arith.constant 9.99999974E-6 : f32
    %70 = vector.broadcast %cst_33 : f32 to vector<1x128xf32>
    %71 = arith.addf %67, %70 : vector<1x128xf32>
    %72 = math.rsqrt %71 : vector<1x128xf32>
    %73 = arith.mulf %69, %72 : vector<1x128xf32>
    %74 = vector.broadcast %73 : vector<1x128xf32> to vector<256x128xf32>
    %75 = arith.mulf %54, %74 : vector<256x128xf32>
    %c0_34 = arith.constant 0 : index
    %c7 = arith.constant 7 : index
    %c0_35 = arith.constant 0 : index
    %76 = vector.load %arg4[%c0_34, %c7, %c0_35] : memref<1x24x128xf32, #tpu.memory_space<vmem>>, vector<1x1x128xf32>
    %77 = vector.shape_cast %76 : vector<1x1x128xf32> to vector<1x128xf32>
    %78 = arith.mulf %58, %73 : vector<1x128xf32>
    %79 = arith.subf %77, %78 : vector<1x128xf32>
    %80 = vector.broadcast %79 : vector<1x128xf32> to vector<256x128xf32>
    %81 = arith.addf %75, %80 : vector<256x128xf32>
    %cst_36 = arith.constant 0.000000e+00 : f32
    %82 = vector.broadcast %cst_36 : f32 to vector<256x128xf32>
    %83 = arith.maximumf %81, %82 : vector<256x128xf32>
    %c0_37 = arith.constant 0 : index
    %c1_38 = arith.constant 1 : index
    %c0_39 = arith.constant 0 : index
    %c0_40 = arith.constant 0 : index
    %84 = vector.load %arg3[%c0_37, %c1_38, %c0_39, %c0_40] : memref<1x6x128x128xf32, #tpu.memory_space<vmem>>, vector<1x1x128x128xf32>
    %85 = vector.shape_cast %84 : vector<1x1x128x128xf32> to vector<128x128xf32>
    %cst_41 = arith.constant dense<0.000000e+00> : vector<256x128xf32>
    %86 = tpu.matmul %83, %85, %cst_41 {dimension_numbers = #tpu.dot_dimension_numbers<[1], [0], [0], [1], [0, 0, 1, 1], [], []>} : vector<256x128xf32>, vector<128x128xf32>, vector<256x128xf32> -> vector<256x128xf32>
    %c0_42 = arith.constant 0 : index
    %c8 = arith.constant 8 : index
    %c0_43 = arith.constant 0 : index
    %87 = vector.load %arg4[%c0_42, %c8, %c0_43] : memref<1x24x128xf32, #tpu.memory_space<vmem>>, vector<1x1x128xf32>
    %88 = vector.shape_cast %87 : vector<1x1x128xf32> to vector<1x128xf32>
    %89 = vector.broadcast %88 : vector<1x128xf32> to vector<256x128xf32>
    %90 = arith.addf %86, %89 : vector<256x128xf32>
    %91 = math.tanh %90 : vector<256x128xf32>
    %c0_44 = arith.constant 0 : index
    %c0_45 = arith.constant 0 : index
    %c0_46 = arith.constant 0 : index
    %92 = vector.load %arg2[%c0_44, %c0_45, %c0_46] : memref<1x2x128xf32, #tpu.memory_space<vmem>>, vector<1x2x128xf32>
    %93 = vector.shape_cast %92 : vector<1x2x128xf32> to vector<2x128xf32>
    %94 = vector.shape_cast %93 : vector<2x128xf32> to vector<2x1x128xf32>
    %95 = vector.shape_cast %94 : vector<2x1x128xf32> to vector<2x1x128xf32>
    %96 = vector.broadcast %95 : vector<2x1x128xf32> to vector<2x128x128xf32>
    %97 = vector.shape_cast %96 : vector<2x128x128xf32> to vector<256x128xf32>
    %c0_47 = arith.constant 0 : index
    %c2_48 = arith.constant 2 : index
    %c0_49 = arith.constant 0 : index
    %c0_50 = arith.constant 0 : index
    %98 = vector.load %arg3[%c0_47, %c2_48, %c0_49, %c0_50] : memref<1x6x128x128xf32, #tpu.memory_space<vmem>>, vector<1x1x128x128xf32>
    %99 = vector.shape_cast %98 : vector<1x1x128x128xf32> to vector<128x128xf32>
    %cst_51 = arith.constant dense<0.000000e+00> : vector<256x128xf32>
    %100 = tpu.matmul %91, %99, %cst_51 {dimension_numbers = #tpu.dot_dimension_numbers<[1], [0], [0], [1], [0, 0, 1, 1], [], []>} : vector<256x128xf32>, vector<128x128xf32>, vector<256x128xf32> -> vector<256x128xf32>
    %101 = arith.addf %100, %97 : vector<256x128xf32>
    %cst_52 = arith.constant dense<0.000000e+00> : vector<128xf32>
    %102 = vector.multi_reduction <add>, %101, %cst_52 [0] : vector<256x128xf32> to vector<128xf32>
    %103 = vector.shape_cast %102 : vector<128xf32> to vector<1x128xf32>
    %cst_53 = arith.constant 2.560000e+02 : f32
    %104 = vector.broadcast %cst_53 : f32 to vector<1x128xf32>
    %105 = arith.divf %103, %104 : vector<1x128xf32>
    %106 = arith.mulf %101, %101 : vector<256x128xf32>
    %cst_54 = arith.constant dense<0.000000e+00> : vector<128xf32>
    %107 = vector.multi_reduction <add>, %106, %cst_54 [0] : vector<256x128xf32> to vector<128xf32>
    %108 = vector.shape_cast %107 : vector<128xf32> to vector<1x128xf32>
    %cst_55 = arith.constant 2.560000e+02 : f32
    %109 = vector.broadcast %cst_55 : f32 to vector<1x128xf32>
    %110 = arith.divf %108, %109 : vector<1x128xf32>
    %111 = arith.mulf %105, %105 : vector<1x128xf32>
    %112 = arith.subf %110, %111 : vector<1x128xf32>
    %cst_56 = arith.constant 0.000000e+00 : f32
    %113 = vector.broadcast %cst_56 : f32 to vector<1x128xf32>
    %114 = arith.maximumf %112, %113 : vector<1x128xf32>
    %c0_57 = arith.constant 0 : index
    %c9 = arith.constant 9 : index
    %c0_58 = arith.constant 0 : index
    %115 = vector.load %arg4[%c0_57, %c9, %c0_58] : memref<1x24x128xf32, #tpu.memory_space<vmem>>, vector<1x1x128xf32>
    %116 = vector.shape_cast %115 : vector<1x1x128xf32> to vector<1x128xf32>
    %cst_59 = arith.constant 9.99999974E-6 : f32
    %117 = vector.broadcast %cst_59 : f32 to vector<1x128xf32>
    %118 = arith.addf %114, %117 : vector<1x128xf32>
    %119 = math.rsqrt %118 : vector<1x128xf32>
    %120 = arith.mulf %116, %119 : vector<1x128xf32>
    %121 = vector.broadcast %120 : vector<1x128xf32> to vector<256x128xf32>
    %122 = arith.mulf %101, %121 : vector<256x128xf32>
    %c0_60 = arith.constant 0 : index
    %c10 = arith.constant 10 : index
    %c0_61 = arith.constant 0 : index
    %123 = vector.load %arg4[%c0_60, %c10, %c0_61] : memref<1x24x128xf32, #tpu.memory_space<vmem>>, vector<1x1x128xf32>
    %124 = vector.shape_cast %123 : vector<1x1x128xf32> to vector<1x128xf32>
    %125 = arith.mulf %105, %120 : vector<1x128xf32>
    %126 = arith.subf %124, %125 : vector<1x128xf32>
    %127 = vector.broadcast %126 : vector<1x128xf32> to vector<256x128xf32>
    %128 = arith.addf %122, %127 : vector<256x128xf32>
    %cst_62 = arith.constant 0.000000e+00 : f32
    %129 = vector.broadcast %cst_62 : f32 to vector<256x128xf32>
    %130 = arith.maximumf %128, %129 : vector<256x128xf32>
    %c0_63 = arith.constant 0 : index
    %c3_64 = arith.constant 3 : index
    %c0_65 = arith.constant 0 : index
    %c0_66 = arith.constant 0 : index
    %131 = vector.load %arg3[%c0_63, %c3_64, %c0_65, %c0_66] : memref<1x6x128x128xf32, #tpu.memory_space<vmem>>, vector<1x1x128x128xf32>
    %132 = vector.shape_cast %131 : vector<1x1x128x128xf32> to vector<128x128xf32>
    %cst_67 = arith.constant dense<0.000000e+00> : vector<256x128xf32>
    %133 = tpu.matmul %130, %132, %cst_67 {dimension_numbers = #tpu.dot_dimension_numbers<[1], [0], [0], [1], [0, 0, 1, 1], [], []>} : vector<256x128xf32>, vector<128x128xf32>, vector<256x128xf32> -> vector<256x128xf32>
    %c0_68 = arith.constant 0 : index
    %c11 = arith.constant 11 : index
    %c0_69 = arith.constant 0 : index
    %134 = vector.load %arg4[%c0_68, %c11, %c0_69] : memref<1x24x128xf32, #tpu.memory_space<vmem>>, vector<1x1x128xf32>
    %135 = vector.shape_cast %134 : vector<1x1x128xf32> to vector<1x128xf32>
    %136 = vector.broadcast %135 : vector<1x128xf32> to vector<256x128xf32>
    %137 = arith.addf %133, %136 : vector<256x128xf32>
    %cst_70 = arith.constant dense<0.000000e+00> : vector<128xf32>
    %138 = vector.multi_reduction <add>, %137, %cst_70 [0] : vector<256x128xf32> to vector<128xf32>
    %139 = vector.shape_cast %138 : vector<128xf32> to vector<1x128xf32>
    %cst_71 = arith.constant 2.560000e+02 : f32
    %140 = vector.broadcast %cst_71 : f32 to vector<1x128xf32>
    %141 = arith.divf %139, %140 : vector<1x128xf32>
    %142 = arith.mulf %137, %137 : vector<256x128xf32>
    %cst_72 = arith.constant dense<0.000000e+00> : vector<128xf32>
    %143 = vector.multi_reduction <add>, %142, %cst_72 [0] : vector<256x128xf32> to vector<128xf32>
    %144 = vector.shape_cast %143 : vector<128xf32> to vector<1x128xf32>
    %cst_73 = arith.constant 2.560000e+02 : f32
    %145 = vector.broadcast %cst_73 : f32 to vector<1x128xf32>
    %146 = arith.divf %144, %145 : vector<1x128xf32>
    %147 = arith.mulf %141, %141 : vector<1x128xf32>
    %148 = arith.subf %146, %147 : vector<1x128xf32>
    %cst_74 = arith.constant 0.000000e+00 : f32
    %149 = vector.broadcast %cst_74 : f32 to vector<1x128xf32>
    %150 = arith.maximumf %148, %149 : vector<1x128xf32>
    %c0_75 = arith.constant 0 : index
    %c12 = arith.constant 12 : index
    %c0_76 = arith.constant 0 : index
    %151 = vector.load %arg4[%c0_75, %c12, %c0_76] : memref<1x24x128xf32, #tpu.memory_space<vmem>>, vector<1x1x128xf32>
    %152 = vector.shape_cast %151 : vector<1x1x128xf32> to vector<1x128xf32>
    %cst_77 = arith.constant 9.99999974E-6 : f32
    %153 = vector.broadcast %cst_77 : f32 to vector<1x128xf32>
    %154 = arith.addf %150, %153 : vector<1x128xf32>
    %155 = math.rsqrt %154 : vector<1x128xf32>
    %156 = arith.mulf %152, %155 : vector<1x128xf32>
    %157 = vector.broadcast %156 : vector<1x128xf32> to vector<256x128xf32>
    %158 = arith.mulf %137, %157 : vector<256x128xf32>
    %c0_78 = arith.constant 0 : index
    %c13 = arith.constant 13 : index
    %c0_79 = arith.constant 0 : index
    %159 = vector.load %arg4[%c0_78, %c13, %c0_79] : memref<1x24x128xf32, #tpu.memory_space<vmem>>, vector<1x1x128xf32>
    %160 = vector.shape_cast %159 : vector<1x1x128xf32> to vector<1x128xf32>
    %161 = arith.mulf %141, %156 : vector<1x128xf32>
    %162 = arith.subf %160, %161 : vector<1x128xf32>
    %163 = vector.broadcast %162 : vector<1x128xf32> to vector<256x128xf32>
    %164 = arith.addf %158, %163 : vector<256x128xf32>
    %cst_80 = arith.constant 0.000000e+00 : f32
    %165 = vector.broadcast %cst_80 : f32 to vector<256x128xf32>
    %166 = arith.maximumf %164, %165 : vector<256x128xf32>
    %c0_81 = arith.constant 0 : index
    %c4_82 = arith.constant 4 : index
    %c0_83 = arith.constant 0 : index
    %c0_84 = arith.constant 0 : index
    %167 = vector.load %arg3[%c0_81, %c4_82, %c0_83, %c0_84] : memref<1x6x128x128xf32, #tpu.memory_space<vmem>>, vector<1x1x128x128xf32>
    %168 = vector.shape_cast %167 : vector<1x1x128x128xf32> to vector<128x128xf32>
    %cst_85 = arith.constant dense<0.000000e+00> : vector<256x128xf32>
    %169 = tpu.matmul %166, %168, %cst_85 {dimension_numbers = #tpu.dot_dimension_numbers<[1], [0], [0], [1], [0, 0, 1, 1], [], []>} : vector<256x128xf32>, vector<128x128xf32>, vector<256x128xf32> -> vector<256x128xf32>
    %c0_86 = arith.constant 0 : index
    %c14 = arith.constant 14 : index
    %c0_87 = arith.constant 0 : index
    %170 = vector.load %arg4[%c0_86, %c14, %c0_87] : memref<1x24x128xf32, #tpu.memory_space<vmem>>, vector<1x1x128xf32>
    %171 = vector.shape_cast %170 : vector<1x1x128xf32> to vector<1x128xf32>
    %172 = vector.broadcast %171 : vector<1x128xf32> to vector<256x128xf32>
    %173 = arith.addf %169, %172 : vector<256x128xf32>
    %cst_88 = arith.constant dense<0.000000e+00> : vector<128xf32>
    %174 = vector.multi_reduction <add>, %173, %cst_88 [0] : vector<256x128xf32> to vector<128xf32>
    %175 = vector.shape_cast %174 : vector<128xf32> to vector<1x128xf32>
    %cst_89 = arith.constant 2.560000e+02 : f32
    %176 = vector.broadcast %cst_89 : f32 to vector<1x128xf32>
    %177 = arith.divf %175, %176 : vector<1x128xf32>
    %178 = arith.mulf %173, %173 : vector<256x128xf32>
    %cst_90 = arith.constant dense<0.000000e+00> : vector<128xf32>
    %179 = vector.multi_reduction <add>, %178, %cst_90 [0] : vector<256x128xf32> to vector<128xf32>
    %180 = vector.shape_cast %179 : vector<128xf32> to vector<1x128xf32>
    %cst_91 = arith.constant 2.560000e+02 : f32
    %181 = vector.broadcast %cst_91 : f32 to vector<1x128xf32>
    %182 = arith.divf %180, %181 : vector<1x128xf32>
    %183 = arith.mulf %177, %177 : vector<1x128xf32>
    %184 = arith.subf %182, %183 : vector<1x128xf32>
    %cst_92 = arith.constant 0.000000e+00 : f32
    %185 = vector.broadcast %cst_92 : f32 to vector<1x128xf32>
    %186 = arith.maximumf %184, %185 : vector<1x128xf32>
    %c0_93 = arith.constant 0 : index
    %c15 = arith.constant 15 : index
    %c0_94 = arith.constant 0 : index
    %187 = vector.load %arg4[%c0_93, %c15, %c0_94] : memref<1x24x128xf32, #tpu.memory_space<vmem>>, vector<1x1x128xf32>
    %188 = vector.shape_cast %187 : vector<1x1x128xf32> to vector<1x128xf32>
    %cst_95 = arith.constant 9.99999974E-6 : f32
    %189 = vector.broadcast %cst_95 : f32 to vector<1x128xf32>
    %190 = arith.addf %186, %189 : vector<1x128xf32>
    %191 = math.rsqrt %190 : vector<1x128xf32>
    %192 = arith.mulf %188, %191 : vector<1x128xf32>
    %193 = vector.broadcast %192 : vector<1x128xf32> to vector<256x128xf32>
    %194 = arith.mulf %173, %193 : vector<256x128xf32>
    %c0_96 = arith.constant 0 : index
    %c16 = arith.constant 16 : index
    %c0_97 = arith.constant 0 : index
    %195 = vector.load %arg4[%c0_96, %c16, %c0_97] : memref<1x24x128xf32, #tpu.memory_space<vmem>>, vector<1x1x128xf32>
    %196 = vector.shape_cast %195 : vector<1x1x128xf32> to vector<1x128xf32>
    %197 = arith.mulf %177, %192 : vector<1x128xf32>
    %198 = arith.subf %196, %197 : vector<1x128xf32>
    %199 = vector.broadcast %198 : vector<1x128xf32> to vector<256x128xf32>
    %200 = arith.addf %194, %199 : vector<256x128xf32>
    %cst_98 = arith.constant 0.000000e+00 : f32
    %201 = vector.broadcast %cst_98 : f32 to vector<256x128xf32>
    %202 = arith.maximumf %200, %201 : vector<256x128xf32>
    %c0_99 = arith.constant 0 : index
    %c5_100 = arith.constant 5 : index
    %c0_101 = arith.constant 0 : index
    %c0_102 = arith.constant 0 : index
    %203 = vector.load %arg3[%c0_99, %c5_100, %c0_101, %c0_102] : memref<1x6x128x128xf32, #tpu.memory_space<vmem>>, vector<1x1x128x128xf32>
    %204 = vector.shape_cast %203 : vector<1x1x128x128xf32> to vector<128x128xf32>
    %cst_103 = arith.constant dense<0.000000e+00> : vector<256x128xf32>
    %205 = tpu.matmul %202, %204, %cst_103 {dimension_numbers = #tpu.dot_dimension_numbers<[1], [0], [0], [1], [0, 0, 1, 1], [], []>} : vector<256x128xf32>, vector<128x128xf32>, vector<256x128xf32> -> vector<256x128xf32>
    %c0_104 = arith.constant 0 : index
    %c17 = arith.constant 17 : index
    %c0_105 = arith.constant 0 : index
    %206 = vector.load %arg4[%c0_104, %c17, %c0_105] : memref<1x24x128xf32, #tpu.memory_space<vmem>>, vector<1x1x128xf32>
    %207 = vector.shape_cast %206 : vector<1x1x128xf32> to vector<1x128xf32>
    %208 = vector.broadcast %207 : vector<1x128xf32> to vector<256x128xf32>
    %209 = arith.addf %205, %208 : vector<256x128xf32>
    %210 = math.tanh %209 : vector<256x128xf32>
    %cst_106 = arith.constant 5.000000e-01 : f32
    %211 = vector.broadcast %cst_106 : f32 to vector<256x128xf32>
    %212 = arith.mulf %210, %211 : vector<256x128xf32>
    %c0_107 = arith.constant 0 : index
    %c0_108 = arith.constant 0 : index
    %c0_109 = arith.constant 0 : index
    %213 = vector.load %arg5[%c0_107, %c0_108, %c0_109] : memref<1x256x128xf32, #tpu.memory_space<vmem>>, vector<1x256x128xf32>
    %214 = vector.shape_cast %213 : vector<1x256x128xf32> to vector<256x128xf32>
    %215 = vector.shape_cast %212 : vector<256x128xf32> to vector<1x256x128xf32>
    tpu.vector_store %arg5[%c0_107, %c0_108, %c0_109], %215 {strides = array<i32>} : memref<1x256x128xf32, #tpu.memory_space<vmem>>, vector<1x256x128xf32>,
    return
  }
  func.func @transform_0(%arg0: i32) -> (i32, i32, i32) {
    %c0_i32 = arith.constant 0 : i32
    %c0_i32_0 = arith.constant 0 : i32
    %c0_i32_1 = arith.constant 0 : i32
    return %arg0, %c0_i32, %c0_i32_0 : i32, i32, i32
  }
  func.func @transform_1(%arg0: i32) -> (i32, i32, i32) {
    %c0_i32 = arith.constant 0 : i32
    %c0_i32_0 = arith.constant 0 : i32
    %c0_i32_1 = arith.constant 0 : i32
    return %arg0, %c0_i32, %c0_i32_0 : i32, i32, i32
  }
  func.func @transform_2(%arg0: i32) -> (i32, i32, i32, i32) {
    %c0_i32 = arith.constant 0 : i32
    %c0_i32_0 = arith.constant 0 : i32
    %c0_i32_1 = arith.constant 0 : i32
    %c0_i32_2 = arith.constant 0 : i32
    return %arg0, %c0_i32, %c0_i32_0, %c0_i32_1 : i32, i32, i32, i32
  }
  func.func @transform_3(%arg0: i32) -> (i32, i32, i32) {
    %c0_i32 = arith.constant 0 : i32
    %c0_i32_0 = arith.constant 0 : i32
    %c0_i32_1 = arith.constant 0 : i32
    return %arg0, %c0_i32, %c0_i32_0 : i32, i32, i32
  }
  func.func @transform_4(%arg0: i32) -> (i32, i32, i32) {
    %c0_i32 = arith.constant 0 : i32
    %c0_i32_0 = arith.constant 0 : i32
    %c0_i32_1 = arith.constant 0 : i32
    return %arg0, %c0_i32, %c0_i32_0 : i32, i32, i32
  }
}

</mosaic_0001>

<llo_original>
// kernel: tpu_custom_call.1
$region0: #{tpu_custom_call.1}
  #allocation0 [shape = 'u32[]', space=smem, size = 0x4, offset = 0x4, fixed_abs, tag = 'smem constant byte address 0x4 - core index']
  #allocation1 [shape = 'u32[72,128]{1,0:T(1,128)}', space=vmem, size = 0x9000, scoped, tag = 'internal scratch']
  %s0 = inlined_call_operand.vmem [shape: f32[2,256,2], index: 0, kind: input, shape index: {}]
  %s1 = inlined_call_operand.vmem [shape: f32[2,2,128], index: 1, kind: input, shape index: {}]
  %s2 = inlined_call_operand.hbm [shape: f32[2,6,128,128], index: 2, kind: input, shape index: {}]
  %s3 = inlined_call_operand.vmem [shape: f32[2,24,128], index: 3, kind: input, shape index: {}]
  %s4 = inlined_call_operand.hbm [shape: f32[2,256,128], index: 4, kind: output, shape index: {}]
  %s5 = sld [smem:[#allocation0]]
  $region53: #{tpu_custom_call.1} parent=0
    _
  %s7 = ssub.s32 1, %s5
  %s8 = scalar_select 0, %s7, %s5
  $region1: #{tpu_custom_call.1} parent=0
    #allocation2 [shape = 'u8[786432]{0}', space=vmem, size = 0xc0000, scoped, tag = 'input window, operand 2']
    #allocation3 [shape = 's32[2]{0}', space=sflag, size = 0x8, scoped, tag = 'scoped memory for tpu_custom_call.1']
    #allocation4 [shape = 's32[2]{0}', space=sflag, size = 0x8, scoped, tag = 'scoped memory for tpu_custom_call.1']
    #allocation5 [shape = 'u8[262144]{0}', space=vmem, size = 0x40000, scoped, tag = 'output window, operand 0']
    %9 = vsyncpa [#allocation3], 0
    %s10 = scalar_lea.sflag [#allocation3], 1
    %11 = vsyncpa %s10, 0
    %12 = vsyncpa [#allocation4], 0
    %s13 = scalar_lea.sflag [#allocation4], 1
    %14 = vsyncpa %s13, 0
    loop: start=0, step=1, limit=4
    $region2: #{tpu_custom_call.1} parent=1 // loop_pre_header
      _
    $region3: #{tpu_custom_call.1} parent=1 // loop_header
      %s16 = sphi 0, %s20
      %p17 = scmp.ge.s32.totalorder %s16, 4
      %s26 = sphi 0, %s28
      %s29 = sphi 0, %s26
      %s30 = sphi 0, %s29
      %s46 = sphi 0, %s30
      %s52 = sphi 0, %s54
      %s55 = sphi 0, %s52
      %s56 = sphi 0, %s55
      %s72 = sphi 0, %s56
      %s78 = sphi 0, %s80
      %s81 = sphi 0, %s78
      %s82 = sphi 0, %s81
      %s98 = sphi 0, %s82
      %s104 = sphi 0, %s106
      %s107 = sphi 0, %s104
      %s108 = sphi 0, %s107
      %s124 = sphi 0, %s108
      %s130 = sphi 0, %s132
      %s133 = sphi 0, %s130
      %s134 = sphi 0, %s133
      %s150 = sphi 0, %s134
    $region4: #{tpu_custom_call.1} parent=1 // loop_header_branch
      %19 = sbr.rel (%p17) target = $region8
    $region5: #{tpu_custom_call.1} parent=1 // loop_body
      %s21 = ssub.s32 %s16, 1
      %s22 = ssub.s32 %s16, 2
      %s23 = sadd.s32 %s16, 1
      %s24 = ssub.s32 %s16, %s23
      %p25 = scmp.eq.s32.totalorder %s24, 0
      %s27 = sadd.s32 %s26, 1
      %s28 = scalar_select %p25, %s26, %s27
      %p31 = pneg %p25
      %p32 = scmp.eq.s32.totalorder %s16, 1
      %p33 = por %p31, %p32
      %p34 = scmp.ne.s32.totalorder %s26, %s29
      %p35 = scmp.eq.s32.totalorder %s16, 0
      %p36 = por %p34, %p35
      %p37 = scmp.ne.s32.totalorder %s26, %s29
      %p38 = scmp.eq.s32.totalorder %s21, 1
      %p39 = por %p37, %p38
      %p40 = scmp.ne.s32.totalorder %s29, %s30
      %p41 = scmp.eq.s32.totalorder %s21, 0
      %p42 = por %p40, %p41
      %p43 = scmp.ne.s32.totalorder %s29, %s30
      %p44 = scmp.eq.s32.totalorder %s22, 1
      %p45 = por %p43, %p44
      %p47 = scmp.ne.s32.totalorder %s30, %s46
      %p48 = scmp.eq.s32.totalorder %s22, 0
      %p49 = por %p47, %p48
      %s50 = ssub.s32 %s16, %s23
      %p51 = scmp.eq.s32.totalorder %s50, 0
      %s53 = sadd.s32 %s52, 1
      %s54 = scalar_select %p51, %s52, %s53
      %p57 = pneg %p51
      %p58 = scmp.eq.s32.totalorder %s16, 1
      %p59 = por %p57, %p58
      %p60 = scmp.ne.s32.totalorder %s52, %s55
      %p61 = scmp.eq.s32.totalorder %s16, 0
      %p62 = por %p60, %p61
      %p63 = scmp.ne.s32.totalorder %s52, %s55
      %p64 = scmp.eq.s32.totalorder %s21, 1
      %p65 = por %p63, %p64
      %p66 = scmp.ne.s32.totalorder %s55, %s56
      %p67 = scmp.eq.s32.totalorder %s21, 0
      %p68 = por %p66, %p67
      %p69 = scmp.ne.s32.totalorder %s55, %s56
      %p70 = scmp.eq.s32.totalorder %s22, 1
      %p71 = por %p69, %p70
      %p73 = scmp.ne.s32.totalorder %s56, %s72
      %p74 = scmp.eq.s32.totalorder %s22, 0
      %p75 = por %p73, %p74
      %s76 = ssub.s32 %s16, %s23
      %p77 = scmp.eq.s32.totalorder %s76, 0
      %s79 = sadd.s32 %s78, 1
      %s80 = scalar_select %p77, %s78, %s79
      %p83 = pneg %p77
      %p84 = scmp.eq.s32.totalorder %s16, 1
      %p85 = por %p83, %p84
      %p86 = scmp.ne.s32.totalorder %s78, %s81
      %p87 = scmp.eq.s32.totalorder %s16, 0
      %p88 = por %p86, %p87
      %p89 = scmp.ne.s32.totalorder %s78, %s81
      %p90 = scmp.eq.s32.totalorder %s21, 1
      %p91 = por %p89, %p90
      %p92 = scmp.ne.s32.totalorder %s81, %s82
      %p93 = scmp.eq.s32.totalorder %s21, 0
      %p94 = por %p92, %p93
      %p95 = scmp.ne.s32.totalorder %s81, %s82
      %p96 = scmp.eq.s32.totalorder %s22, 1
      %p97 = por %p95, %p96
      %p99 = scmp.ne.s32.totalorder %s82, %s98
      %p100 = scmp.eq.s32.totalorder %s22, 0
      %p101 = por %p99, %p100
      %s102 = ssub.s32 %s16, %s23
      %p103 = scmp.eq.s32.totalorder %s102, 0
      %s105 = sadd.s32 %s104, 1
      %s106 = scalar_select %p103, %s104, %s105
      %p109 = pneg %p103
      %p110 = scmp.eq.s32.totalorder %s16, 1
      %p111 = por %p109, %p110
      %p112 = scmp.ne.s32.totalorder %s104, %s107
      %p113 = scmp.eq.s32.totalorder %s16, 0
      %p114 = por %p112, %p113
      %p115 = scmp.ne.s32.totalorder %s104, %s107
      %p116 = scmp.eq.s32.totalorder %s21, 1
      %p117 = por %p115, %p116
      %p118 = scmp.ne.s32.totalorder %s107, %s108
      %p119 = scmp.eq.s32.totalorder %s21, 0
      %p120 = por %p118, %p119
      %p121 = scmp.ne.s32.totalorder %s107, %s108
      %p122 = scmp.eq.s32.totalorder %s22, 1
      %p123 = por %p121, %p122
      %p125 = scmp.ne.s32.totalorder %s108, %s124
      %p126 = scmp.eq.s32.totalorder %s22, 0
      %p127 = por %p125, %p126
      %s128 = ssub.s32 %s16, %s23
      %p129 = scmp.eq.s32.totalorder %s128, 0
      %s131 = sadd.s32 %s130, 1
      %s132 = scalar_select %p129, %s130, %s131
      %p135 = pneg %p129
      %p136 = scmp.eq.s32.totalorder %s16, 1
      %p137 = por %p135, %p136
      %p138 = scmp.ne.s32.totalorder %s130, %s133
      %p139 = scmp.eq.s32.totalorder %s16, 0
      %p140 = por %p138, %p139
      %p141 = scmp.ne.s32.totalorder %s130, %s133
      %p142 = scmp.eq.s32.totalorder %s21, 1
      %p143 = por %p141, %p142
      %p144 = scmp.ne.s32.totalorder %s133, %s134
      %p145 = scmp.eq.s32.totalorder %s21, 0
      %p146 = por %p144, %p145
      %p147 = scmp.ne.s32.totalorder %s133, %s134
      %p148 = scmp.eq.s32.totalorder %s22, 1
      %p149 = por %p147, %p148
      %p151 = scmp.ne.s32.totalorder %s134, %s150
      %p152 = scmp.eq.s32.totalorder %s22, 0
      %p153 = por %p151, %p152
      %p154 = scmp.le.s32.totalorder 1, %s16
      %p155 = scmp.lt.s32.totalorder %s16, 3
      %p156 = pnand %p154, %p155
      %p157 = pneg %p156
      // Predicated region
      $region9: #{tpu_custom_call.1} parent=5 // pred_check
        _
      $region10: #{tpu_custom_call.1} parent=5 // pred_check_branch
        %159 = sbr.rel (%p156) target = $region12
      $region11: #{tpu_custom_call.1} parent=5 // pred_region
        %s160 = ssub.s32 %s16, 1
      $region12: #{tpu_custom_call.1} parent=5 // pred_fallthru
        _
      %p161 = scmp.lt.s32.totalorder %s16, 2
      // Predicated region
      $region13: #{tpu_custom_call.1} parent=5 // pred_check
        %p162 = pneg %p161
      $region14: #{tpu_custom_call.1} parent=5 // pred_check_branch
        %164 = sbr.rel (%p162) target = $region16
      $region15: #{tpu_custom_call.1} parent=5 // pred_region
        // Predicated region
        $region17: #{tpu_custom_call.1} parent=15 // pred_check
          %p165 = pneg %p36
        $region18: #{tpu_custom_call.1} parent=15 // pred_check_branch
          %167 = sbr.rel (%p165) target = $region20
        $region19: #{tpu_custom_call.1} parent=15 // pred_region
          %p168 = scmp.lt.s32.totalorder %s16, 1
          %s169 = scalar_select %p168, %s16, 1
          %s170 = smul.addr %s169, 32
          %s171 = smul.addr %s170, 8
          %s172 = scalar_lea.vmem %s0, %s171
        $region20: #{tpu_custom_call.1} parent=15 // pred_fallthru
          _
        // Predicated region
        $region21: #{tpu_custom_call.1} parent=15 // pred_check
          %p173 = pneg %p62
        $region22: #{tpu_custom_call.1} parent=15 // pred_check_branch
          %175 = sbr.rel (%p173) target = $region24
        $region23: #{tpu_custom_call.1} parent=15 // pred_region
          %p176 = scmp.lt.s32.totalorder %s16, 1
          %s177 = scalar_select %p176, %s16, 1
          %s178 = smul.addr %s177, 2
          %s179 = scalar_lea.vmem %s1, %s178
        $region24: #{tpu_custom_call.1} parent=15 // pred_fallthru
          _
        // Predicated region
        $region25: #{tpu_custom_call.1} parent=15 // pred_check
          %p180 = pneg %p88
        $region26: #{tpu_custom_call.1} parent=15 // pred_check_branch
          %182 = sbr.rel (%p180) target = $region28
        $region27: #{tpu_custom_call.1} parent=15 // pred_region
          %s183 = sand.u32 %s78, 1
          %s184 = scalar_lea.sflag [#allocation3], %s183
          %s185 = sand.u32 %s78, 1
          %s186 = smul.addr %s185, 768
          %s187 = scalar_lea.vmem [#allocation2], %s186
          %189 = vsyncadd %s184, 0
          %s190 = smul.addr %s16, 96
          %s191 = smul.addr %s190, 8
          %s192 = scalar_lea.hbm %s2, %s191
          %s193 = sshll.u32 %s192, 4
          %s194 = int_to_ptr.hbm [resolvable:$true] %s193
          %s195 = sshll.u32 %s187, 4
          %s196 = int_to_ptr.vmem [resolvable:$true] %s195
          %201 = dma.hbm_to_vmem [thread:$0]  %s194, 12288, %s196, %s184, 128, 128, 8
        $region28: #{tpu_custom_call.1} parent=15 // pred_fallthru
          _
        // Predicated region
        $region29: #{tpu_custom_call.1} parent=15 // pred_check
          %p202 = pneg %p114
        $region30: #{tpu_custom_call.1} parent=15 // pred_check_branch
          %204 = sbr.rel (%p202) target = $region32
        $region31: #{tpu_custom_call.1} parent=15 // pred_region
          %p205 = scmp.lt.s32.totalorder %s16, 1
          %s206 = scalar_select %p205, %s16, 1
          %s207 = smul.addr %s206, 3
          %s208 = smul.addr %s207, 8
          %s209 = scalar_lea.vmem %s3, %s208
        $region32: #{tpu_custom_call.1} parent=15 // pred_fallthru
          _
      $region16: #{tpu_custom_call.1} parent=5 // pred_fallthru
        _
      %p210 = scmp.le.s32.totalorder 1, %s16
      %p211 = scmp.lt.s32.totalorder %s16, 3
      %p212 = pnand %p210, %p211
      %p213 = pneg %p212
      // Predicated region
      $region33: #{tpu_custom_call.1} parent=5 // pred_check
        _
      $region34: #{tpu_custom_call.1} parent=5 // pred_check_branch
        %215 = sbr.rel (%p212) target = $region36
      $region35: #{tpu_custom_call.1} parent=5 // pred_region
        %s216 = ssub.s32 %s16, 1
        %s217 = sand.u32 %s81, 1
        %s218 = scalar_lea.sflag [#allocation3], %s217
        %s219 = sand.u32 %s81, 1
        %s220 = smul.addr %s219, 768
        %s221 = scalar_lea.vmem [#allocation2], %s220
        // Predicated region
        $region37: #{tpu_custom_call.1} parent=35 // pred_check
          %p222 = pneg %p94
        $region38: #{tpu_custom_call.1} parent=35 // pred_check_branch
          %224 = sbr.rel (%p222) target = $region40
        $region39: #{tpu_custom_call.1} parent=35 // pred_region
          %226 = dma.done %s218, 12288
        $region40: #{tpu_custom_call.1} parent=35 // pred_fallthru
          _
        %p227 = scmp.lt.s32.totalorder %s21, 1
        %s228 = scalar_select %p227, %s21, 1
        %s229 = smul.addr %s228, 32
        %s230 = smul.addr %s229, 8
        %s231 = scalar_lea.vmem %s0, %s230
        %p232 = pneg %p42
        %p233 = pneg %p39
        %p234 = scmp.lt.s32.totalorder %s21, 1
        %s235 = scalar_select %p234, %s21, 1
        %s236 = smul.addr %s235, 2
        %s237 = scalar_lea.vmem %s1, %s236
        %p238 = pneg %p68
        %p239 = pneg %p65
        %s240 = sand.u32 %s81, 1
        %s241 = scalar_lea.sflag [#allocation3], %s240
        %s242 = sand.u32 %s81, 1
        %s243 = smul.addr %s242, 768
        %s244 = scalar_lea.vmem [#allocation2], %s243
        %p245 = pneg %p94
        %p246 = pneg %p91
        %p247 = scmp.lt.s32.totalorder %s21, 1
        %s248 = scalar_select %p247, %s21, 1
        %s249 = smul.addr %s248, 3
        %s250 = smul.addr %s249, 8
        %s251 = scalar_lea.vmem %s3, %s250
        %p252 = pneg %p120
        %p253 = pneg %p117
        %p254 = pneg %p146
        %p255 = pneg %p143
        %s256 = sand.u32 %s133, 1
        %s257 = scalar_lea.sflag [#allocation4], %s256
        %s258 = sand.u32 %s133, 1
        %s259 = smul.addr %s258, 256
        %s260 = scalar_lea.vmem [#allocation5], %s259
        %p261 = scmp.lt.s32.totalorder %s21, 1
        %s262 = scalar_select %p261, %s21, 1
        %s263 = smul.addr %s262, 32
        %s264 = smul.addr %s263, 8
        %s265 = scalar_lea.vmem %s0, %s264
        %p266 = scmp.lt.s32.totalorder %s21, 1
        %s267 = scalar_select %p266, %s21, 1
        %s268 = smul.addr %s267, 2
        %s269 = scalar_lea.vmem %s1, %s268
        %p270 = scmp.lt.s32.totalorder %s21, 1
        %s271 = scalar_select %p270, %s21, 1
        %s272 = smul.addr %s271, 3
        %s273 = smul.addr %s272, 8
        %s274 = scalar_lea.vmem %s3, %s273
        %v275 = vld [vmem:[%s265] sm:$0xff]
        %v276 = vld [vmem:[%s265 + $0x8] sm:$0xff]
        %v277 = vld [vmem:[%s265 + $0x10] sm:$0xff]
        %v278 = vld [vmem:[%s265 + $0x18] sm:$0xff]
        %v279 = vld [vmem:[%s265 + $0x20] sm:$0xff]
        %v280 = vld [vmem:[%s265 + $0x28] sm:$0xff]
        %v281 = vld [vmem:[%s265 + $0x30] sm:$0xff]
        %v282 = vld [vmem:[%s265 + $0x38] sm:$0xff]
        %v283 = vld [vmem:[%s265 + $0x40] sm:$0xff]
        %v284 = vld [vmem:[%s265 + $0x48] sm:$0xff]
        %v285 = vld [vmem:[%s265 + $0x50] sm:$0xff]
        %v286 = vld [vmem:[%s265 + $0x58] sm:$0xff]
        %v287 = vld [vmem:[%s265 + $0x60] sm:$0xff]
        %v288 = vld [vmem:[%s265 + $0x68] sm:$0xff]
        %v289 = vld [vmem:[%s265 + $0x70] sm:$0xff]
        %v290 = vld [vmem:[%s265 + $0x78] sm:$0xff]
        %v291 = vld [vmem:[%s265 + $0x80] sm:$0xff]
        %v292 = vld [vmem:[%s265 + $0x88] sm:$0xff]
        %v293 = vld [vmem:[%s265 + $0x90] sm:$0xff]
        %v294 = vld [vmem:[%s265 + $0x98] sm:$0xff]
        %v295 = vld [vmem:[%s265 + $0xa0] sm:$0xff]
        %v296 = vld [vmem:[%s265 + $0xa8] sm:$0xff]
        %v297 = vld [vmem:[%s265 + $0xb0] sm:$0xff]
        %v298 = vld [vmem:[%s265 + $0xb8] sm:$0xff]
        %v299 = vld [vmem:[%s265 + $0xc0] sm:$0xff]
        %v300 = vld [vmem:[%s265 + $0xc8] sm:$0xff]
        %v301 = vld [vmem:[%s265 + $0xd0] sm:$0xff]
        %v302 = vld [vmem:[%s265 + $0xd8] sm:$0xff]
        %v303 = vld [vmem:[%s265 + $0xe0] sm:$0xff]
        %v304 = vld [vmem:[%s265 + $0xe8] sm:$0xff]
        %v305 = vld [vmem:[%s265 + $0xf0] sm:$0xff]
        %v306 = vld [vmem:[%s265 + $0xf8] sm:$0xff]
        %v307 = vld [vmem:[%s274] sm:$0x1]
        %309 = vset.pattern.permute.xlu0 0
        %310 = vperm.xlu0 %309, %v275
        %v311 = vpop.permute.xlu0 %310
        %314 = vset.pattern.permute.xlu0 0
        %315 = vperm.xlu0 %314, %v276
        %v316 = vpop.permute.xlu0 %315
        %319 = vset.pattern.permute.xlu0 0
        %320 = vperm.xlu0 %319, %v277
        %v321 = vpop.permute.xlu0 %320
        %324 = vset.pattern.permute.xlu0 0
        %325 = vperm.xlu0 %324, %v278
        %v326 = vpop.permute.xlu0 %325
        %329 = vset.pattern.permute.xlu0 0
        %330 = vperm.xlu0 %329, %v279
        %v331 = vpop.permute.xlu0 %330
        %334 = vset.pattern.permute.xlu0 0
        %335 = vperm.xlu0 %334, %v280
        %v336 = vpop.permute.xlu0 %335
        %339 = vset.pattern.permute.xlu0 0
        %340 = vperm.xlu0 %339, %v281
        %v341 = vpop.permute.xlu0 %340
        %344 = vset.pattern.permute.xlu0 0
        %345 = vperm.xlu0 %344, %v282
        %v346 = vpop.permute.xlu0 %345
        %349 = vset.pattern.permute.xlu0 0
        %350 = vperm.xlu0 %349, %v283
        %v351 = vpop.permute.xlu0 %350
        %354 = vset.pattern.permute.xlu0 0
        %355 = vperm.xlu0 %354, %v284
        %v356 = vpop.permute.xlu0 %355
        %359 = vset.pattern.permute.xlu0 0
        %360 = vperm.xlu0 %359, %v285
        %v361 = vpop.permute.xlu0 %360
        %364 = vset.pattern.permute.xlu0 0
        %365 = vperm.xlu0 %364, %v286
        %v366 = vpop.permute.xlu0 %365
        %369 = vset.pattern.permute.xlu0 0
        %370 = vperm.xlu0 %369, %v287
        %v371 = vpop.permute.xlu0 %370
        %374 = vset.pattern.permute.xlu0 0
        %375 = vperm.xlu0 %374, %v288
        %v376 = vpop.permute.xlu0 %375
        %379 = vset.pattern.permute.xlu0 0
        %380 = vperm.xlu0 %379, %v289
        %v381 = vpop.permute.xlu0 %380
        %384 = vset.pattern.permute.xlu0 0
        %385 = vperm.xlu0 %384, %v290
        %v386 = vpop.permute.xlu0 %385
        %389 = vset.pattern.permute.xlu0 0
        %390 = vperm.xlu0 %389, %v291
        %v391 = vpop.permute.xlu0 %390
        %394 = vset.pattern.permute.xlu0 0
        %395 = vperm.xlu0 %394, %v292
        %v396 = vpop.permute.xlu0 %395
        %399 = vset.pattern.permute.xlu0 0
        %400 = vperm.xlu0 %399, %v293
        %v401 = vpop.permute.xlu0 %400
        %404 = vset.pattern.permute.xlu0 0
        %405 = vperm.xlu0 %404, %v294
        %v406 = vpop.permute.xlu0 %405
        %409 = vset.pattern.permute.xlu0 0
        %410 = vperm.xlu0 %409, %v295
        %v411 = vpop.permute.xlu0 %410
        %414 = vset.pattern.permute.xlu0 0
        %415 = vperm.xlu0 %414, %v296
        %v416 = vpop.permute.xlu0 %415
        %419 = vset.pattern.permute.xlu0 0
        %420 = vperm.xlu0 %419, %v297
        %v421 = vpop.permute.xlu0 %420
        %424 = vset.pattern.permute.xlu0 0
        %425 = vperm.xlu0 %424, %v298
        %v426 = vpop.permute.xlu0 %425
        %429 = vset.pattern.permute.xlu0 0
        %430 = vperm.xlu0 %429, %v299
        %v431 = vpop.permute.xlu0 %430
        %434 = vset.pattern.permute.xlu0 0
        %435 = vperm.xlu0 %434, %v300
        %v436 = vpop.permute.xlu0 %435
        %439 = vset.pattern.permute.xlu0 0
        %440 = vperm.xlu0 %439, %v301
        %v441 = vpop.permute.xlu0 %440
        %444 = vset.pattern.permute.xlu0 0
        %445 = vperm.xlu0 %444, %v302
        %v446 = vpop.permute.xlu0 %445
        %449 = vset.pattern.permute.xlu0 0
        %450 = vperm.xlu0 %449, %v303
        %v451 = vpop.permute.xlu0 %450
        %454 = vset.pattern.permute.xlu0 0
        %455 = vperm.xlu0 %454, %v304
        %v456 = vpop.permute.xlu0 %455
        %459 = vset.pattern.permute.xlu0 0
        %460 = vperm.xlu0 %459, %v305
        %v461 = vpop.permute.xlu0 %460
        %464 = vset.pattern.permute.xlu0 0
        %465 = vperm.xlu0 %464, %v306
        %v466 = vpop.permute.xlu0 %465
        %v468 = vperm.slane %v307, 0
        %v469 = vmul.f32 %v311, %v468
        %v470 = vmul.f32 %v316, %v468
        %v471 = vmul.f32 %v321, %v468
        %v472 = vmul.f32 %v326, %v468
        %v473 = vmul.f32 %v331, %v468
        %v474 = vmul.f32 %v336, %v468
        %v475 = vmul.f32 %v341, %v468
        %v476 = vmul.f32 %v346, %v468
        %v477 = vmul.f32 %v351, %v468
        %v478 = vmul.f32 %v356, %v468
        %v479 = vmul.f32 %v361, %v468
        %v480 = vmul.f32 %v366, %v468
        %v481 = vmul.f32 %v371, %v468
        %v482 = vmul.f32 %v376, %v468
        %v483 = vmul.f32 %v381, %v468
        %v484 = vmul.f32 %v386, %v468
        %v485 = vmul.f32 %v391, %v468
        %v486 = vmul.f32 %v396, %v468
        %v487 = vmul.f32 %v401, %v468
        %v488 = vmul.f32 %v406, %v468
        %v489 = vmul.f32 %v411, %v468
        %v490 = vmul.f32 %v416, %v468
        %v491 = vmul.f32 %v421, %v468
        %v492 = vmul.f32 %v426, %v468
        %v493 = vmul.f32 %v431, %v468
        %v494 = vmul.f32 %v436, %v468
        %v495 = vmul.f32 %v441, %v468
        %v496 = vmul.f32 %v446, %v468
        %v497 = vmul.f32 %v451, %v468
        %v498 = vmul.f32 %v456, %v468
        %v499 = vmul.f32 %v461, %v468
        %v500 = vmul.f32 %v466, %v468
        %v501 = vld [vmem:[%s274 + $0x1] sm:$0x1]
        %502 = vset.pattern.permute.xlu0 1
        %503 = vperm.xlu0 %502, %v275
        %v504 = vpop.permute.xlu0 %503
        %506 = vset.pattern.permute.xlu0 1
        %507 = vperm.xlu0 %506, %v276
        %v508 = vpop.permute.xlu0 %507
        %510 = vset.pattern.permute.xlu0 1
        %511 = vperm.xlu0 %510, %v277
        %v512 = vpop.permute.xlu0 %511
        %514 = vset.pattern.permute.xlu0 1
        %515 = vperm.xlu0 %514, %v278
        %v516 = vpop.permute.xlu0 %515
        %518 = vset.pattern.permute.xlu0 1
        %519 = vperm.xlu0 %518, %v279
        %v520 = vpop.permute.xlu0 %519
        %522 = vset.pattern.permute.xlu0 1
        %523 = vperm.xlu0 %522, %v280
        %v524 = vpop.permute.xlu0 %523
        %526 = vset.pattern.permute.xlu0 1
        %527 = vperm.xlu0 %526, %v281
        %v528 = vpop.permute.xlu0 %527
        %530 = vset.pattern.permute.xlu0 1
        %531 = vperm.xlu0 %530, %v282
        %v532 = vpop.permute.xlu0 %531
        %534 = vset.pattern.permute.xlu0 1
        %535 = vperm.xlu0 %534, %v283
        %v536 = vpop.permute.xlu0 %535
        %538 = vset.pattern.permute.xlu0 1
        %539 = vperm.xlu0 %538, %v284
        %v540 = vpop.permute.xlu0 %539
        %542 = vset.pattern.permute.xlu0 1
        %543 = vperm.xlu0 %542, %v285
        %v544 = vpop.permute.xlu0 %543
        %546 = vset.pattern.permute.xlu0 1
        %547 = vperm.xlu0 %546, %v286
        %v548 = vpop.permute.xlu0 %547
        %550 = vset.pattern.permute.xlu0 1
        %551 = vperm.xlu0 %550, %v287
        %v552 = vpop.permute.xlu0 %551
        %554 = vset.pattern.permute.xlu0 1
        %555 = vperm.xlu0 %554, %v288
        %v556 = vpop.permute.xlu0 %555
        %558 = vset.pattern.permute.xlu0 1
        %559 = vperm.xlu0 %558, %v289
        %v560 = vpop.permute.xlu0 %559
        %562 = vset.pattern.permute.xlu0 1
        %563 = vperm.xlu0 %562, %v290
        %v564 = vpop.permute.xlu0 %563
        %566 = vset.pattern.permute.xlu0 1
        %567 = vperm.xlu0 %566, %v291
        %v568 = vpop.permute.xlu0 %567
        %570 = vset.pattern.permute.xlu0 1
        %571 = vperm.xlu0 %570, %v292
        %v572 = vpop.permute.xlu0 %571
        %574 = vset.pattern.permute.xlu0 1
        %575 = vperm.xlu0 %574, %v293
        %v576 = vpop.permute.xlu0 %575
        %578 = vset.pattern.permute.xlu0 1
        %579 = vperm.xlu0 %578, %v294
        %v580 = vpop.permute.xlu0 %579
        %582 = vset.pattern.permute.xlu0 1
        %583 = vperm.xlu0 %582, %v295
        %v584 = vpop.permute.xlu0 %583
        %586 = vset.pattern.permute.xlu0 1
        %587 = vperm.xlu0 %586, %v296
        %v588 = vpop.permute.xlu0 %587
        %590 = vset.pattern.permute.xlu0 1
        %591 = vperm.xlu0 %590, %v297
        %v592 = vpop.permute.xlu0 %591
        %594 = vset.pattern.permute.xlu0 1
        %595 = vperm.xlu0 %594, %v298
        %v596 = vpop.permute.xlu0 %595
        %598 = vset.pattern.permute.xlu0 1
        %599 = vperm.xlu0 %598, %v299
        %v600 = vpop.permute.xlu0 %599
        %602 = vset.pattern.permute.xlu0 1
        %603 = vperm.xlu0 %602, %v300
        %v604 = vpop.permute.xlu0 %603
        %606 = vset.pattern.permute.xlu0 1
        %607 = vperm.xlu0 %606, %v301
        %v608 = vpop.permute.xlu0 %607
        %610 = vset.pattern.permute.xlu0 1
        %611 = vperm.xlu0 %610, %v302
        %v612 = vpop.permute.xlu0 %611
        %614 = vset.pattern.permute.xlu0 1
        %615 = vperm.xlu0 %614, %v303
        %v616 = vpop.permute.xlu0 %615
        %618 = vset.pattern.permute.xlu0 1
        %619 = vperm.xlu0 %618, %v304
        %v620 = vpop.permute.xlu0 %619
        %622 = vset.pattern.permute.xlu0 1
        %623 = vperm.xlu0 %622, %v305
        %v624 = vpop.permute.xlu0 %623
        %626 = vset.pattern.permute.xlu0 1
        %627 = vperm.xlu0 %626, %v306
        %v628 = vpop.permute.xlu0 %627
        %v630 = vperm.slane %v501, 0
        %v631 = vmul.f32 %v504, %v630
        %v632 = vmul.f32 %v508, %v630
        %v633 = vmul.f32 %v512, %v630
        %v634 = vmul.f32 %v516, %v630
        %v635 = vmul.f32 %v520, %v630
        %v636 = vmul.f32 %v524, %v630
        %v637 = vmul.f32 %v528, %v630
        %v638 = vmul.f32 %v532, %v630
        %v639 = vmul.f32 %v536, %v630
        %v640 = vmul.f32 %v540, %v630
        %v641 = vmul.f32 %v544, %v630
        %v642 = vmul.f32 %v548, %v630
        %v643 = vmul.f32 %v552, %v630
        %v644 = vmul.f32 %v556, %v630
        %v645 = vmul.f32 %v560, %v630
        %v646 = vmul.f32 %v564, %v630
        %v647 = vmul.f32 %v568, %v630
        %v648 = vmul.f32 %v572, %v630
        %v649 = vmul.f32 %v576, %v630
        %v650 = vmul.f32 %v580, %v630
        %v651 = vmul.f32 %v584, %v630
        %v652 = vmul.f32 %v588, %v630
        %v653 = vmul.f32 %v592, %v630
        %v654 = vmul.f32 %v596, %v630
        %v655 = vmul.f32 %v600, %v630
        %v656 = vmul.f32 %v604, %v630
        %v657 = vmul.f32 %v608, %v630
        %v658 = vmul.f32 %v612, %v630
        %v659 = vmul.f32 %v616, %v630
        %v660 = vmul.f32 %v620, %v630
        %v661 = vmul.f32 %v624, %v630
        %v662 = vmul.f32 %v628, %v630
        %v663 = vadd.f32 %v469, %v631
        %v664 = vadd.f32 %v470, %v632
        %v665 = vadd.f32 %v471, %v633
        %v666 = vadd.f32 %v472, %v634
        %v667 = vadd.f32 %v473, %v635
        %v668 = vadd.f32 %v474, %v636
        %v669 = vadd.f32 %v475, %v637
        %v670 = vadd.f32 %v476, %v638
        %v671 = vadd.f32 %v477, %v639
        %v672 = vadd.f32 %v478, %v640
        %v673 = vadd.f32 %v479, %v641
        %v674 = vadd.f32 %v480, %v642
        %v675 = vadd.f32 %v481, %v643
        %v676 = vadd.f32 %v482, %v644
        %v677 = vadd.f32 %v483, %v645
        %v678 = vadd.f32 %v484, %v646
        %v679 = vadd.f32 %v485, %v647
        %v680 = vadd.f32 %v486, %v648
        %v681 = vadd.f32 %v487, %v649
        %v682 = vadd.f32 %v488, %v650
        %v683 = vadd.f32 %v489, %v651
        %v684 = vadd.f32 %v490, %v652
        %v685 = vadd.f32 %v491, %v653
        %v686 = vadd.f32 %v492, %v654
        %v687 = vadd.f32 %v493, %v655
        %v688 = vadd.f32 %v494, %v656
        %v689 = vadd.f32 %v495, %v657
        %v690 = vadd.f32 %v496, %v658
        %v691 = vadd.f32 %v497, %v659
        %v692 = vadd.f32 %v498, %v660
        %v693 = vadd.f32 %v499, %v661
        %v694 = vadd.f32 %v500, %v662
        %v695 = vld [vmem:[%s274 + $0x2] sm:$0x1]
        %v696 = vperm.slane %v695, 0
        %v697 = vadd.f32 %v663, %v696
        %v698 = vadd.f32 %v664, %v696
        %v699 = vadd.f32 %v665, %v696
        %v700 = vadd.f32 %v666, %v696
        %v701 = vadd.f32 %v667, %v696
        %v702 = vadd.f32 %v668, %v696
        %v703 = vadd.f32 %v669, %v696
        %v704 = vadd.f32 %v670, %v696
        %v705 = vadd.f32 %v671, %v696
        %v706 = vadd.f32 %v672, %v696
        %v707 = vadd.f32 %v673, %v696
        %v708 = vadd.f32 %v674, %v696
        %v709 = vadd.f32 %v675, %v696
        %v710 = vadd.f32 %v676, %v696
        %v711 = vadd.f32 %v677, %v696
        %v712 = vadd.f32 %v678, %v696
        %v713 = vadd.f32 %v679, %v696
        %v714 = vadd.f32 %v680, %v696
        %v715 = vadd.f32 %v681, %v696
        %v716 = vadd.f32 %v682, %v696
        %v717 = vadd.f32 %v683, %v696
        %v718 = vadd.f32 %v684, %v696
        %v719 = vadd.f32 %v685, %v696
        %v720 = vadd.f32 %v686, %v696
        %v721 = vadd.f32 %v687, %v696
        %v722 = vadd.f32 %v688, %v696
        %v723 = vadd.f32 %v689, %v696
        %v724 = vadd.f32 %v690, %v696
        %v725 = vadd.f32 %v691, %v696
        %v726 = vadd.f32 %v692, %v696
        %v727 = vadd.f32 %v693, %v696
        %v728 = vadd.f32 %v694, %v696
        %v729 = vadd.f32 %v697, %v698
        %v730 = vadd.f32 %v729, %v699
        %v731 = vadd.f32 %v730, %v700
        %v732 = vadd.f32 %v731, %v701
        %v733 = vadd.f32 %v732, %v702
        %v734 = vadd.f32 %v733, %v703
        %v735 = vadd.f32 %v734, %v704
        %v736 = vadd.f32 %v735, %v705
        %v737 = vadd.f32 %v736, %v706
        %v738 = vadd.f32 %v737, %v707
        %v739 = vadd.f32 %v738, %v708
        %v740 = vadd.f32 %v739, %v709
        %v741 = vadd.f32 %v740, %v710
        %v742 = vadd.f32 %v741, %v711
        %v743 = vadd.f32 %v742, %v712
        %v744 = vadd.f32 %v743, %v713
        %v745 = vadd.f32 %v744, %v714
        %v746 = vadd.f32 %v745, %v715
        %v747 = vadd.f32 %v746, %v716
        %v748 = vadd.f32 %v747, %v717
        %v749 = vadd.f32 %v748, %v718
        %v750 = vadd.f32 %v749, %v719
        %v751 = vadd.f32 %v750, %v720
        %v752 = vadd.f32 %v751, %v721
        %v753 = vadd.f32 %v752, %v722
        %v754 = vadd.f32 %v753, %v723
        %v755 = vadd.f32 %v754, %v724
        %v756 = vadd.f32 %v755, %v725
        %v757 = vadd.f32 %v756, %v726
        %v758 = vadd.f32 %v757, %v727
        %v759 = vadd.f32 %v758, %v728
        %v760 = vrot.slane %v759, 4
        %v761 = vadd.f32 %v759, %v760
        %v762 = vrot.slane %v761, 2
        %v763 = vadd.f32 %v761, %v762
        %v764 = vrot.slane %v763, 1
        %v765 = vadd.f32 %v763, %v764
        %v766 = vrcp.pop 256.0
        %v767 = vmul.f32 256.0, %v766
        %v768 = vsub.f32 1.0, %v767
        %v769 = vmul.f32 %v766, %v768
        %v770 = vadd.f32 %v766, %v769
        %vm771 = vweird.f32 %v766
        %v772 = vsel %vm771, %v766, %v770
        %v773 = vmul.f32 %v765, %v772
        %v774 = vmul.f32 %v697, %v697
        %v775 = vmul.f32 %v698, %v698
        %v776 = vmul.f32 %v699, %v699
        %v777 = vmul.f32 %v700, %v700
        %v778 = vmul.f32 %v701, %v701
        %v779 = vmul.f32 %v702, %v702
        %v780 = vmul.f32 %v703, %v703
        %v781 = vmul.f32 %v704, %v704
        %v782 = vmul.f32 %v705, %v705
        %v783 = vmul.f32 %v706, %v706
        %v784 = vmul.f32 %v707, %v707
        %v785 = vmul.f32 %v708, %v708
        %v786 = vmul.f32 %v709, %v709
        %v787 = vmul.f32 %v710, %v710
        %v788 = vmul.f32 %v711, %v711
        %v789 = vmul.f32 %v712, %v712
        %v790 = vmul.f32 %v713, %v713
        %v791 = vmul.f32 %v714, %v714
        %v792 = vmul.f32 %v715, %v715
        %v793 = vmul.f32 %v716, %v716
        %v794 = vmul.f32 %v717, %v717
        %v795 = vmul.f32 %v718, %v718
        %v796 = vmul.f32 %v719, %v719
        %v797 = vmul.f32 %v720, %v720
        %v798 = vmul.f32 %v721, %v721
        %v799 = vmul.f32 %v722, %v722
        %v800 = vmul.f32 %v723, %v723
        %v801 = vmul.f32 %v724, %v724
        %v802 = vmul.f32 %v725, %v725
        %v803 = vmul.f32 %v726, %v726
        %v804 = vmul.f32 %v727, %v727
        %v805 = vmul.f32 %v728, %v728
        %v806 = vadd.f32 %v774, %v775
        %v807 = vadd.f32 %v806, %v776
        %v808 = vadd.f32 %v807, %v777
        %v809 = vadd.f32 %v808, %v778
        %v810 = vadd.f32 %v809, %v779
        %v811 = vadd.f32 %v810, %v780
        %v812 = vadd.f32 %v811, %v781
        %v813 = vadd.f32 %v812, %v782
        %v814 = vadd.f32 %v813, %v783
        %v815 = vadd.f32 %v814, %v784
        %v816 = vadd.f32 %v815, %v785
        %v817 = vadd.f32 %v816, %v786
        %v818 = vadd.f32 %v817, %v787
        %v819 = vadd.f32 %v818, %v788
        %v820 = vadd.f32 %v819, %v789
        %v821 = vadd.f32 %v820, %v790
        %v822 = vadd.f32 %v821, %v791
        %v823 = vadd.f32 %v822, %v792
        %v824 = vadd.f32 %v823, %v793
        %v825 = vadd.f32 %v824, %v794
        %v826 = vadd.f32 %v825, %v795
        %v827 = vadd.f32 %v826, %v796
        %v828 = vadd.f32 %v827, %v797
        %v829 = vadd.f32 %v828, %v798
        %v830 = vadd.f32 %v829, %v799
        %v831 = vadd.f32 %v830, %v800
        %v832 = vadd.f32 %v831, %v801
        %v833 = vadd.f32 %v832, %v802
        %v834 = vadd.f32 %v833, %v803
        %v835 = vadd.f32 %v834, %v804
        %v836 = vadd.f32 %v835, %v805
        %v837 = vrot.slane %v836, 4
        %v838 = vadd.f32 %v836, %v837
        %v839 = vrot.slane %v838, 2
        %v840 = vadd.f32 %v838, %v839
        %v841 = vrot.slane %v840, 1
        %v842 = vadd.f32 %v840, %v841
        %v843 = vmul.f32 %v842, %v772
        %v844 = vmul.f32 %v773, %v773
        %v845 = vsub.f32 %v843, %v844
        %v846 = vmax.f32 %v845, 0.0
        %v847 = vld [vmem:[%s274 + $0x3] sm:$0x1]
        %v848 = vadd.f32 %v846, 1e-05
        %v849 = vrsqrt.pop %v848
        %v850 = vmul.f32 %v849, %v848
        %v851 = vmul.f32 %v850, %v849
        %v852 = vmul.f32 0.5, %v851
        %v853 = vsub.f32 1.5, %v852
        %v854 = vmul.f32 %v849, %v853
        %vm855 = vweird.f32 %v848
        %vm856 = vweird.f32 %v849
        %vm857 = vmor %vm855, %vm856
        %v858 = vsel %vm857, %v849, %v854
        %v859 = vmul.f32 %v847, %v858
        %v860 = vperm.slane %v859, 0
        %v861 = vmul.f32 %v697, %v860
        %v862 = vmul.f32 %v698, %v860
        %v863 = vmul.f32 %v699, %v860
        %v864 = vmul.f32 %v700, %v860
        %v865 = vmul.f32 %v701, %v860
        %v866 = vmul.f32 %v702, %v860
        %v867 = vmul.f32 %v703, %v860
        %v868 = vmul.f32 %v704, %v860
        %v869 = vmul.f32 %v705, %v860
        %v870 = vmul.f32 %v706, %v860
        %v871 = vmul.f32 %v707, %v860
        %v872 = vmul.f32 %v708, %v860
        %v873 = vmul.f32 %v709, %v860
        %v874 = vmul.f32 %v710, %v860
        %v875 = vmul.f32 %v711, %v860
        %v876 = vmul.f32 %v712, %v860
        %v877 = vmul.f32 %v713, %v860
        %v878 = vmul.f32 %v714, %v860
        %v879 = vmul.f32 %v715, %v860
        %v880 = vmul.f32 %v716, %v860
        %v881 = vmul.f32 %v717, %v860
        %v882 = vmul.f32 %v718, %v860
        %v883 = vmul.f32 %v719, %v860
        %v884 = vmul.f32 %v720, %v860
        %v885 = vmul.f32 %v721, %v860
        %v886 = vmul.f32 %v722, %v860
        %v887 = vmul.f32 %v723, %v860
        %v888 = vmul.f32 %v724, %v860
        %v889 = vmul.f32 %v725, %v860
        %v890 = vmul.f32 %v726, %v860
        %v891 = vmul.f32 %v727, %v860
        %v892 = vmul.f32 %v728, %v860
        %v893 = vld [vmem:[%s274 + $0x4] sm:$0x1]
        %v894 = vmul.f32 %v773, %v859
        %v895 = vsub.f32 %v893, %v894
        %v896 = vperm.slane %v895, 0
        %v897 = vadd.f32 %v861, %v896
        %v898 = vadd.f32 %v862, %v896
        %v899 = vadd.f32 %v863, %v896
        %v900 = vadd.f32 %v864, %v896
        %v901 = vadd.f32 %v865, %v896
        %v902 = vadd.f32 %v866, %v896
        %v903 = vadd.f32 %v867, %v896
        %v904 = vadd.f32 %v868, %v896
        %v905 = vadd.f32 %v869, %v896
        %v906 = vadd.f32 %v870, %v896
        %v907 = vadd.f32 %v871, %v896
        %v908 = vadd.f32 %v872, %v896
        %v909 = vadd.f32 %v873, %v896
        %v910 = vadd.f32 %v874, %v896
        %v911 = vadd.f32 %v875, %v896
        %v912 = vadd.f32 %v876, %v896
        %v913 = vadd.f32 %v877, %v896
        %v914 = vadd.f32 %v878, %v896
        %v915 = vadd.f32 %v879, %v896
        %v916 = vadd.f32 %v880, %v896
        %v917 = vadd.f32 %v881, %v896
        %v918 = vadd.f32 %v882, %v896
        %v919 = vadd.f32 %v883, %v896
        %v920 = vadd.f32 %v884, %v896
        %v921 = vadd.f32 %v885, %v896
        %v922 = vadd.f32 %v886, %v896
        %v923 = vadd.f32 %v887, %v896
        %v924 = vadd.f32 %v888, %v896
        %v925 = vadd.f32 %v889, %v896
        %v926 = vadd.f32 %v890, %v896
        %v927 = vadd.f32 %v891, %v896
        %v928 = vadd.f32 %v892, %v896
        %v929 = vmax.f32 %v897, 0.0
        %v930 = vmax.f32 %v898, 0.0
        %v931 = vmax.f32 %v899, 0.0
        %v932 = vmax.f32 %v900, 0.0
        %v933 = vmax.f32 %v901, 0.0
        %v934 = vmax.f32 %v902, 0.0
        %v935 = vmax.f32 %v903, 0.0
        %v936 = vmax.f32 %v904, 0.0
        %v937 = vmax.f32 %v905, 0.0
        %v938 = vmax.f32 %v906, 0.0
        %v939 = vmax.f32 %v907, 0.0
        %v940 = vmax.f32 %v908, 0.0
        %v941 = vmax.f32 %v909, 0.0
        %v942 = vmax.f32 %v910, 0.0
        %v943 = vmax.f32 %v911, 0.0
        %v944 = vmax.f32 %v912, 0.0
        %v945 = vmax.f32 %v913, 0.0
        %v946 = vmax.f32 %v914, 0.0
        %v947 = vmax.f32 %v915, 0.0
        %v948 = vmax.f32 %v916, 0.0
        %v949 = vmax.f32 %v917, 0.0
        %v950 = vmax.f32 %v918, 0.0
        %v951 = vmax.f32 %v919, 0.0
        %v952 = vmax.f32 %v920, 0.0
        %v953 = vmax.f32 %v921, 0.0
        %v954 = vmax.f32 %v922, 0.0
        %v955 = vmax.f32 %v923, 0.0
        %v956 = vmax.f32 %v924, 0.0
        %v957 = vmax.f32 %v925, 0.0
        %v958 = vmax.f32 %v926, 0.0
        %v959 = vmax.f32 %v927, 0.0
        %v960 = vmax.f32 %v928, 0.0
        %v961 = vld [vmem:[%s221] sm:$0xff]
        %v962 = vld [vmem:[%s221 + $0x8] sm:$0xff]
        %v963 = vld [vmem:[%s221 + $0x10] sm:$0xff]
        %v964 = vld [vmem:[%s221 + $0x18] sm:$0xff]
        %v965 = vld [vmem:[%s221 + $0x20] sm:$0xff]
        %v966 = vld [vmem:[%s221 + $0x28] sm:$0xff]
        %v967 = vld [vmem:[%s221 + $0x30] sm:$0xff]
        %v968 = vld [vmem:[%s221 + $0x38] sm:$0xff]
        %v969 = vld [vmem:[%s221 + $0x40] sm:$0xff]
        %v970 = vld [vmem:[%s221 + $0x48] sm:$0xff]
        %v971 = vld [vmem:[%s221 + $0x50] sm:$0xff]
        %v972 = vld [vmem:[%s221 + $0x58] sm:$0xff]
        %v973 = vld [vmem:[%s221 + $0x60] sm:$0xff]
        %v974 = vld [vmem:[%s221 + $0x68] sm:$0xff]
        %v975 = vld [vmem:[%s221 + $0x70] sm:$0xff]
        %v976 = vld [vmem:[%s221 + $0x78] sm:$0xff]
        %v977 = vld [vmem:[%s274 + $0x5] sm:$0x1]
        %v978 = vperm.slane %v977, 0
        %979 = vmatpush.msra.mxu0 %v976
        %980 = vmatpush.msra.mxu0 %v975
        %981 = vmatpush.msra.mxu0 %v974
        %982 = vmatpush.msra.mxu0 %v973
        %983 = vmatpush.msra.mxu0 %v972
        %984 = vmatpush.msra.mxu0 %v971
        %985 = vmatpush.msra.mxu0 %v970
        %986 = vmatpush.msra.mxu0 %v969
        %987 = vmatpush.msra.mxu0 %v968
        %988 = vmatpush.msra.mxu0 %v967
        %989 = vmatpush.msra.mxu0 %v966
        %990 = vmatpush.msra.mxu0 %v965
        %991 = vmatpush.msra.mxu0 %v964
        %992 = vmatpush.msra.mxu0 %v963
        %993 = vmatpush.msra.mxu0 %v962
        %994 = vmatpush.msra.mxu0 %v961
        %995 = vmatmul.f32.gmra.mxu0 %v929
        %v996 = vpop.f32.mrf.mxu0
        %v997 = vadd.f32 %v978, %v996
        %998 = vmatmul.f32.gmra.mxu0 %v930
        %v999 = vpop.f32.mrf.mxu0
        %v1000 = vadd.f32 %v978, %v999
        %1001 = vmatmul.f32.gmra.mxu0 %v931
        %v1002 = vpop.f32.mrf.mxu0
        %v1003 = vadd.f32 %v978, %v1002
        %1004 = vmatmul.f32.gmra.mxu0 %v932
        %v1005 = vpop.f32.mrf.mxu0
        %v1006 = vadd.f32 %v978, %v1005
        %1007 = vmatmul.f32.gmra.mxu0 %v933
        %v1008 = vpop.f32.mrf.mxu0
        %v1009 = vadd.f32 %v978, %v1008
        %1010 = vmatmul.f32.gmra.mxu0 %v934
        %v1011 = vpop.f32.mrf.mxu0
        %v1012 = vadd.f32 %v978, %v1011
        %1013 = vmatmul.f32.gmra.mxu0 %v935
        %v1014 = vpop.f32.mrf.mxu0
        %v1015 = vadd.f32 %v978, %v1014
        %1016 = vmatmul.f32.gmra.mxu0 %v936
        %v1017 = vpop.f32.mrf.mxu0
        %v1018 = vadd.f32 %v978, %v1017
        %1019 = vmatmul.f32.gmra.mxu0 %v937
        %v1020 = vpop.f32.mrf.mxu0
        %v1021 = vadd.f32 %v978, %v1020
        %1022 = vmatmul.f32.gmra.mxu0 %v938
        %v1023 = vpop.f32.mrf.mxu0
        %v1024 = vadd.f32 %v978, %v1023
        %1025 = vmatmul.f32.gmra.mxu0 %v939
        %v1026 = vpop.f32.mrf.mxu0
        %v1027 = vadd.f32 %v978, %v1026
        %1028 = vmatmul.f32.gmra.mxu0 %v940
        %v1029 = vpop.f32.mrf.mxu0
        %v1030 = vadd.f32 %v978, %v1029
        %1031 = vmatmul.f32.gmra.mxu0 %v941
        %v1032 = vpop.f32.mrf.mxu0
        %v1033 = vadd.f32 %v978, %v1032
        %1034 = vmatmul.f32.gmra.mxu0 %v942
        %v1035 = vpop.f32.mrf.mxu0
        %v1036 = vadd.f32 %v978, %v1035
        %1037 = vmatmul.f32.gmra.mxu0 %v943
        %v1038 = vpop.f32.mrf.mxu0
        %v1039 = vadd.f32 %v978, %v1038
        %1040 = vmatmul.f32.gmra.mxu0 %v944
        %v1041 = vpop.f32.mrf.mxu0
        %v1042 = vadd.f32 %v978, %v1041
        %1043 = vmatmul.f32.gmra.mxu0 %v945
        %v1044 = vpop.f32.mrf.mxu0
        %v1045 = vadd.f32 %v978, %v1044
        %1046 = vmatmul.f32.gmra.mxu0 %v946
        %v1047 = vpop.f32.mrf.mxu0
        %v1048 = vadd.f32 %v978, %v1047
        %1049 = vmatmul.f32.gmra.mxu0 %v947
        %v1050 = vpop.f32.mrf.mxu0
        %v1051 = vadd.f32 %v978, %v1050
        %1052 = vmatmul.f32.gmra.mxu0 %v948
        %v1053 = vpop.f32.mrf.mxu0
        %v1054 = vadd.f32 %v978, %v1053
        %1055 = vmatmul.f32.gmra.mxu0 %v949
        %v1056 = vpop.f32.mrf.mxu0
        %v1057 = vadd.f32 %v978, %v1056
        %1058 = vmatmul.f32.gmra.mxu0 %v950
        %v1059 = vpop.f32.mrf.mxu0
        %v1060 = vadd.f32 %v978, %v1059
        %1061 = vmatmul.f32.gmra.mxu0 %v951
        %v1062 = vpop.f32.mrf.mxu0
        %v1063 = vadd.f32 %v978, %v1062
        %1064 = vmatmul.f32.gmra.mxu0 %v952
        %v1065 = vpop.f32.mrf.mxu0
        %v1066 = vadd.f32 %v978, %v1065
        %1067 = vmatmul.f32.gmra.mxu0 %v953
        %v1068 = vpop.f32.mrf.mxu0
        %v1069 = vadd.f32 %v978, %v1068
        %1070 = vmatmul.f32.gmra.mxu0 %v954
        %v1071 = vpop.f32.mrf.mxu0
        %v1072 = vadd.f32 %v978, %v1071
        %1073 = vmatmul.f32.gmra.mxu0 %v955
        %v1074 = vpop.f32.mrf.mxu0
        %v1075 = vadd.f32 %v978, %v1074
        %1076 = vmatmul.f32.gmra.mxu0 %v956
        %v1077 = vpop.f32.mrf.mxu0
        %v1078 = vadd.f32 %v978, %v1077
        %1079 = vmatmul.f32.gmra.mxu0 %v957
        %v1080 = vpop.f32.mrf.mxu0
        %v1081 = vadd.f32 %v978, %v1080
        %1082 = vmatmul.f32.gmra.mxu0 %v958
        %v1083 = vpop.f32.mrf.mxu0
        %v1084 = vadd.f32 %v978, %v1083
        %1085 = vmatmul.f32.gmra.mxu0 %v959
        %v1086 = vpop.f32.mrf.mxu0
        %v1087 = vadd.f32 %v978, %v1086
        %1088 = vmatmul.f32.gmra.mxu0 %v960
        %v1089 = vpop.f32.mrf.mxu0
        %v1090 = vadd.f32 %v978, %v1089
        %1091 = vdwg.mxu0
        %v1092 = vadd.f32 %v997, %v1000
        %v1093 = vadd.f32 %v1092, %v1003
        %v1094 = vadd.f32 %v1093, %v1006
        %v1095 = vadd.f32 %v1094, %v1009
        %v1096 = vadd.f32 %v1095, %v1012
        %v1097 = vadd.f32 %v1096, %v1015
        %v1098 = vadd.f32 %v1097, %v1018
        %v1099 = vadd.f32 %v1098, %v1021
        %v1100 = vadd.f32 %v1099, %v1024
        %v1101 = vadd.f32 %v1100, %v1027
        %v1102 = vadd.f32 %v1101, %v1030
        %v1103 = vadd.f32 %v1102, %v1033
        %v1104 = vadd.f32 %v1103, %v1036
        %v1105 = vadd.f32 %v1104, %v1039
        %v1106 = vadd.f32 %v1105, %v1042
        %v1107 = vadd.f32 %v1106, %v1045
        %v1108 = vadd.f32 %v1107, %v1048
        %v1109 = vadd.f32 %v1108, %v1051
        %v1110 = vadd.f32 %v1109, %v1054
        %v1111 = vadd.f32 %v1110, %v1057
        %v1112 = vadd.f32 %v1111, %v1060
        %v1113 = vadd.f32 %v1112, %v1063
        %v1114 = vadd.f32 %v1113, %v1066
        %v1115 = vadd.f32 %v1114, %v1069
        %v1116 = vadd.f32 %v1115, %v1072
        %v1117 = vadd.f32 %v1116, %v1075
        %v1118 = vadd.f32 %v1117, %v1078
        %v1119 = vadd.f32 %v1118, %v1081
        %v1120 = vadd.f32 %v1119, %v1084
        %v1121 = vadd.f32 %v1120, %v1087
        %v1122 = vadd.f32 %v1121, %v1090
        %v1123 = vrot.slane %v1122, 4
        %v1124 = vadd.f32 %v1122, %v1123
        %v1125 = vrot.slane %v1124, 2
        %v1126 = vadd.f32 %v1124, %v1125
        %v1127 = vrot.slane %v1126, 1
        %v1128 = vadd.f32 %v1126, %v1127
        %v1129 = vmul.f32 %v1128, %v772
        %v1130 = vmul.f32 %v997, %v997
        %v1131 = vmul.f32 %v1000, %v1000
        %v1132 = vmul.f32 %v1003, %v1003
        %v1133 = vmul.f32 %v1006, %v1006
        %v1134 = vmul.f32 %v1009, %v1009
        %v1135 = vmul.f32 %v1012, %v1012
        %v1136 = vmul.f32 %v1015, %v1015
        %v1137 = vmul.f32 %v1018, %v1018
        %v1138 = vmul.f32 %v1021, %v1021
        %v1139 = vmul.f32 %v1024, %v1024
        %v1140 = vmul.f32 %v1027, %v1027
        %v1141 = vmul.f32 %v1030, %v1030
        %v1142 = vmul.f32 %v1033, %v1033
        %v1143 = vmul.f32 %v1036, %v1036
        %v1144 = vmul.f32 %v1039, %v1039
        %v1145 = vmul.f32 %v1042, %v1042
        %v1146 = vmul.f32 %v1045, %v1045
        %v1147 = vmul.f32 %v1048, %v1048
        %v1148 = vmul.f32 %v1051, %v1051
        %v1149 = vmul.f32 %v1054, %v1054
        %v1150 = vmul.f32 %v1057, %v1057
        %v1151 = vmul.f32 %v1060, %v1060
        %v1152 = vmul.f32 %v1063, %v1063
        %v1153 = vmul.f32 %v1066, %v1066
        %v1154 = vmul.f32 %v1069, %v1069
        %v1155 = vmul.f32 %v1072, %v1072
        %v1156 = vmul.f32 %v1075, %v1075
        %v1157 = vmul.f32 %v1078, %v1078
        %v1158 = vmul.f32 %v1081, %v1081
        %v1159 = vmul.f32 %v1084, %v1084
        %v1160 = vmul.f32 %v1087, %v1087
        %v1161 = vmul.f32 %v1090, %v1090
        %v1162 = vadd.f32 %v1130, %v1131
        %v1163 = vadd.f32 %v1162, %v1132
        %v1164 = vadd.f32 %v1163, %v1133
        %v1165 = vadd.f32 %v1164, %v1134
        %v1166 = vadd.f32 %v1165, %v1135
        %v1167 = vadd.f32 %v1166, %v1136
        %v1168 = vadd.f32 %v1167, %v1137
        %v1169 = vadd.f32 %v1168, %v1138
        %v1170 = vadd.f32 %v1169, %v1139
        %v1171 = vadd.f32 %v1170, %v1140
        %v1172 = vadd.f32 %v1171, %v1141
        %v1173 = vadd.f32 %v1172, %v1142
        %v1174 = vadd.f32 %v1173, %v1143
        %v1175 = vadd.f32 %v1174, %v1144
        %v1176 = vadd.f32 %v1175, %v1145
        %v1177 = vadd.f32 %v1176, %v1146
        %v1178 = vadd.f32 %v1177, %v1147
        %v1179 = vadd.f32 %v1178, %v1148
        %v1180 = vadd.f32 %v1179, %v1149
        %v1181 = vadd.f32 %v1180, %v1150
        %v1182 = vadd.f32 %v1181, %v1151
        %v1183 = vadd.f32 %v1182, %v1152
        %v1184 = vadd.f32 %v1183, %v1153
        %v1185 = vadd.f32 %v1184, %v1154
        %v1186 = vadd.f32 %v1185, %v1155
        %v1187 = vadd.f32 %v1186, %v1156
        %v1188 = vadd.f32 %v1187, %v1157
        %v1189 = vadd.f32 %v1188, %v1158
        %v1190 = vadd.f32 %v1189, %v1159
        %v1191 = vadd.f32 %v1190, %v1160
        %v1192 = vadd.f32 %v1191, %v1161
        %v1193 = vrot.slane %v1192, 4
        %v1194 = vadd.f32 %v1192, %v1193
        %v1195 = vrot.slane %v1194, 2
        %v1196 = vadd.f32 %v1194, %v1195
        %v1197 = vrot.slane %v1196, 1
        %v1198 = vadd.f32 %v1196, %v1197
        %v1199 = vmul.f32 %v1198, %v772
        %v1200 = vmul.f32 %v1129, %v1129
        %v1201 = vsub.f32 %v1199, %v1200
        %v1202 = vmax.f32 %v1201, 0.0
        %v1203 = vld [vmem:[%s274 + $0x6] sm:$0x1]
        %v1204 = vadd.f32 %v1202, 1e-05
        %v1205 = vrsqrt.pop %v1204
        %v1206 = vmul.f32 %v1205, %v1204
        %v1207 = vmul.f32 %v1206, %v1205
        %v1208 = vmul.f32 0.5, %v1207
        %v1209 = vsub.f32 1.5, %v1208
        %v1210 = vmul.f32 %v1205, %v1209
        %vm1211 = vweird.f32 %v1204
        %vm1212 = vweird.f32 %v1205
        %vm1213 = vmor %vm1211, %vm1212
        %v1214 = vsel %vm1213, %v1205, %v1210
        %v1215 = vmul.f32 %v1203, %v1214
        %v1216 = vperm.slane %v1215, 0
        %v1217 = vmul.f32 %v997, %v1216
        %v1218 = vmul.f32 %v1000, %v1216
        %v1219 = vmul.f32 %v1003, %v1216
        %v1220 = vmul.f32 %v1006, %v1216
        %v1221 = vmul.f32 %v1009, %v1216
        %v1222 = vmul.f32 %v1012, %v1216
        %v1223 = vmul.f32 %v1015, %v1216
        %v1224 = vmul.f32 %v1018, %v1216
        %v1225 = vmul.f32 %v1021, %v1216
        %v1226 = vmul.f32 %v1024, %v1216
        %v1227 = vmul.f32 %v1027, %v1216
        %v1228 = vmul.f32 %v1030, %v1216
        %v1229 = vmul.f32 %v1033, %v1216
        %v1230 = vmul.f32 %v1036, %v1216
        %v1231 = vmul.f32 %v1039, %v1216
        %v1232 = vmul.f32 %v1042, %v1216
        %v1233 = vmul.f32 %v1045, %v1216
        %v1234 = vmul.f32 %v1048, %v1216
        %v1235 = vmul.f32 %v1051, %v1216
        %v1236 = vmul.f32 %v1054, %v1216
        %v1237 = vmul.f32 %v1057, %v1216
        %v1238 = vmul.f32 %v1060, %v1216
        %v1239 = vmul.f32 %v1063, %v1216
        %v1240 = vmul.f32 %v1066, %v1216
        %v1241 = vmul.f32 %v1069, %v1216
        %v1242 = vmul.f32 %v1072, %v1216
        %v1243 = vmul.f32 %v1075, %v1216
        %v1244 = vmul.f32 %v1078, %v1216
        %v1245 = vmul.f32 %v1081, %v1216
        %v1246 = vmul.f32 %v1084, %v1216
        %v1247 = vmul.f32 %v1087, %v1216
        %v1248 = vmul.f32 %v1090, %v1216
        %v1249 = vld [vmem:[%s274 + $0x7] sm:$0x1]
        %v1250 = vmul.f32 %v1129, %v1215
        %v1251 = vsub.f32 %v1249, %v1250
        %v1252 = vperm.slane %v1251, 0
        %v1253 = vadd.f32 %v1217, %v1252
        %v1254 = vadd.f32 %v1218, %v1252
        %v1255 = vadd.f32 %v1219, %v1252
        %v1256 = vadd.f32 %v1220, %v1252
        %v1257 = vadd.f32 %v1221, %v1252
        %v1258 = vadd.f32 %v1222, %v1252
        %v1259 = vadd.f32 %v1223, %v1252
        %v1260 = vadd.f32 %v1224, %v1252
        %v1261 = vadd.f32 %v1225, %v1252
        %v1262 = vadd.f32 %v1226, %v1252
        %v1263 = vadd.f32 %v1227, %v1252
        %v1264 = vadd.f32 %v1228, %v1252
        %v1265 = vadd.f32 %v1229, %v1252
        %v1266 = vadd.f32 %v1230, %v1252
        %v1267 = vadd.f32 %v1231, %v1252
        %v1268 = vadd.f32 %v1232, %v1252
        %v1269 = vadd.f32 %v1233, %v1252
        %v1270 = vadd.f32 %v1234, %v1252
        %v1271 = vadd.f32 %v1235, %v1252
        %v1272 = vadd.f32 %v1236, %v1252
        %v1273 = vadd.f32 %v1237, %v1252
        %v1274 = vadd.f32 %v1238, %v1252
        %v1275 = vadd.f32 %v1239, %v1252
        %v1276 = vadd.f32 %v1240, %v1252
        %v1277 = vadd.f32 %v1241, %v1252
        %v1278 = vadd.f32 %v1242, %v1252
        %v1279 = vadd.f32 %v1243, %v1252
        %v1280 = vadd.f32 %v1244, %v1252
        %v1281 = vadd.f32 %v1245, %v1252
        %v1282 = vadd.f32 %v1246, %v1252
        %v1283 = vadd.f32 %v1247, %v1252
        %v1284 = vadd.f32 %v1248, %v1252
        %v1285 = vmax.f32 %v1253, 0.0
        %v1286 = vmax.f32 %v1254, 0.0
        %v1287 = vmax.f32 %v1255, 0.0
        %v1288 = vmax.f32 %v1256, 0.0
        %v1289 = vmax.f32 %v1257, 0.0
        %v1290 = vmax.f32 %v1258, 0.0
        %v1291 = vmax.f32 %v1259, 0.0
        %v1292 = vmax.f32 %v1260, 0.0
        %v1293 = vmax.f32 %v1261, 0.0
        %v1294 = vmax.f32 %v1262, 0.0
        %v1295 = vmax.f32 %v1263, 0.0
        %v1296 = vmax.f32 %v1264, 0.0
        %v1297 = vmax.f32 %v1265, 0.0
        %v1298 = vmax.f32 %v1266, 0.0
        %v1299 = vmax.f32 %v1267, 0.0
        %v1300 = vmax.f32 %v1268, 0.0
        %v1301 = vmax.f32 %v1269, 0.0
        %v1302 = vmax.f32 %v1270, 0.0
        %v1303 = vmax.f32 %v1271, 0.0
        %v1304 = vmax.f32 %v1272, 0.0
        %v1305 = vmax.f32 %v1273, 0.0
        %v1306 = vmax.f32 %v1274, 0.0
        %v1307 = vmax.f32 %v1275, 0.0
        %v1308 = vmax.f32 %v1276, 0.0
        %v1309 = vmax.f32 %v1277, 0.0
        %v1310 = vmax.f32 %v1278, 0.0
        %v1311 = vmax.f32 %v1279, 0.0
        %v1312 = vmax.f32 %v1280, 0.0
        %v1313 = vmax.f32 %v1281, 0.0
        %v1314 = vmax.f32 %v1282, 0.0
        %v1315 = vmax.f32 %v1283, 0.0
        %v1316 = vmax.f32 %v1284, 0.0
        %s1317 = scalar_lea.vmem %s221, 128 [#allocation2]
        %v1318 = vld [vmem:[%s1317] sm:$0xff]
        %v1319 = vld [vmem:[%s1317 + $0x8] sm:$0xff]
        %v1320 = vld [vmem:[%s1317 + $0x10] sm:$0xff]
        %v1321 = vld [vmem:[%s1317 + $0x18] sm:$0xff]
        %v1322 = vld [vmem:[%s1317 + $0x20] sm:$0xff]
        %v1323 = vld [vmem:[%s1317 + $0x28] sm:$0xff]
        %v1324 = vld [vmem:[%s1317 + $0x30] sm:$0xff]
        %v1325 = vld [vmem:[%s1317 + $0x38] sm:$0xff]
        %v1326 = vld [vmem:[%s1317 + $0x40] sm:$0xff]
        %v1327 = vld [vmem:[%s1317 + $0x48] sm:$0xff]
        %v1328 = vld [vmem:[%s1317 + $0x50] sm:$0xff]
        %v1329 = vld [vmem:[%s1317 + $0x58] sm:$0xff]
        %v1330 = vld [vmem:[%s1317 + $0x60] sm:$0xff]
        %v1331 = vld [vmem:[%s1317 + $0x68] sm:$0xff]
        %v1332 = vld [vmem:[%s1317 + $0x70] sm:$0xff]
        %v1333 = vld [vmem:[%s1317 + $0x78] sm:$0xff]
        %v1334 = vld [vmem:[%s274 + $0x8] sm:$0x1]
        %v1335 = vperm.slane %v1334, 0
        %1336 = vmatpush.msra.mxu0 %v1333
        %1337 = vmatpush.msra.mxu0 %v1332
        %1338 = vmatpush.msra.mxu0 %v1331
        %1339 = vmatpush.msra.mxu0 %v1330
        %1340 = vmatpush.msra.mxu0 %v1329
        %1341 = vmatpush.msra.mxu0 %v1328
        %1342 = vmatpush.msra.mxu0 %v1327
        %1343 = vmatpush.msra.mxu0 %v1326
        %1344 = vmatpush.msra.mxu0 %v1325
        %1345 = vmatpush.msra.mxu0 %v1324
        %1346 = vmatpush.msra.mxu0 %v1323
        %1347 = vmatpush.msra.mxu0 %v1322
        %1348 = vmatpush.msra.mxu0 %v1321
        %1349 = vmatpush.msra.mxu0 %v1320
        %1350 = vmatpush.msra.mxu0 %v1319
        %1351 = vmatpush.msra.mxu0 %v1318
        %1352 = vmatmul.f32.gmra.mxu0 %v1285
        %v1353 = vpop.f32.mrf.mxu0
        %v1354 = vadd.f32 %v1335, %v1353
        %1355 = vmatmul.f32.gmra.mxu0 %v1286
        %v1356 = vpop.f32.mrf.mxu0
        %v1357 = vadd.f32 %v1335, %v1356
        %1358 = vmatmul.f32.gmra.mxu0 %v1287
        %v1359 = vpop.f32.mrf.mxu0
        %v1360 = vadd.f32 %v1335, %v1359
        %1361 = vmatmul.f32.gmra.mxu0 %v1288
        %v1362 = vpop.f32.mrf.mxu0
        %v1363 = vadd.f32 %v1335, %v1362
        %1364 = vmatmul.f32.gmra.mxu0 %v1289
        %v1365 = vpop.f32.mrf.mxu0
        %v1366 = vadd.f32 %v1335, %v1365
        %1367 = vmatmul.f32.gmra.mxu0 %v1290
        %v1368 = vpop.f32.mrf.mxu0
        %v1369 = vadd.f32 %v1335, %v1368
        %1370 = vmatmul.f32.gmra.mxu0 %v1291
        %v1371 = vpop.f32.mrf.mxu0
        %v1372 = vadd.f32 %v1335, %v1371
        %1373 = vmatmul.f32.gmra.mxu0 %v1292
        %v1374 = vpop.f32.mrf.mxu0
        %v1375 = vadd.f32 %v1335, %v1374
        %1376 = vmatmul.f32.gmra.mxu0 %v1293
        %v1377 = vpop.f32.mrf.mxu0
        %v1378 = vadd.f32 %v1335, %v1377
        %1379 = vmatmul.f32.gmra.mxu0 %v1294
        %v1380 = vpop.f32.mrf.mxu0
        %v1381 = vadd.f32 %v1335, %v1380
        %1382 = vmatmul.f32.gmra.mxu0 %v1295
        %v1383 = vpop.f32.mrf.mxu0
        %v1384 = vadd.f32 %v1335, %v1383
        %1385 = vmatmul.f32.gmra.mxu0 %v1296
        %v1386 = vpop.f32.mrf.mxu0
        %v1387 = vadd.f32 %v1335, %v1386
        %1388 = vmatmul.f32.gmra.mxu0 %v1297
        %v1389 = vpop.f32.mrf.mxu0
        %v1390 = vadd.f32 %v1335, %v1389
        %1391 = vmatmul.f32.gmra.mxu0 %v1298
        %v1392 = vpop.f32.mrf.mxu0
        %v1393 = vadd.f32 %v1335, %v1392
        %1394 = vmatmul.f32.gmra.mxu0 %v1299
        %v1395 = vpop.f32.mrf.mxu0
        %v1396 = vadd.f32 %v1335, %v1395
        %1397 = vmatmul.f32.gmra.mxu0 %v1300
        %v1398 = vpop.f32.mrf.mxu0
        %v1399 = vadd.f32 %v1335, %v1398
        %1400 = vmatmul.f32.gmra.mxu0 %v1301
        %v1401 = vpop.f32.mrf.mxu0
        %v1402 = vadd.f32 %v1335, %v1401
        %1403 = vmatmul.f32.gmra.mxu0 %v1302
        %v1404 = vpop.f32.mrf.mxu0
        %v1405 = vadd.f32 %v1335, %v1404
        %1406 = vmatmul.f32.gmra.mxu0 %v1303
        %v1407 = vpop.f32.mrf.mxu0
        %v1408 = vadd.f32 %v1335, %v1407
        %1409 = vmatmul.f32.gmra.mxu0 %v1304
        %v1410 = vpop.f32.mrf.mxu0
        %v1411 = vadd.f32 %v1335, %v1410
        %1412 = vmatmul.f32.gmra.mxu0 %v1305
        %v1413 = vpop.f32.mrf.mxu0
        %v1414 = vadd.f32 %v1335, %v1413
        %1415 = vmatmul.f32.gmra.mxu0 %v1306
        %v1416 = vpop.f32.mrf.mxu0
        %v1417 = vadd.f32 %v1335, %v1416
        %1418 = vmatmul.f32.gmra.mxu0 %v1307
        %v1419 = vpop.f32.mrf.mxu0
        %v1420 = vadd.f32 %v1335, %v1419
        %1421 = vmatmul.f32.gmra.mxu0 %v1308
        %v1422 = vpop.f32.mrf.mxu0
        %v1423 = vadd.f32 %v1335, %v1422
        %1424 = vmatmul.f32.gmra.mxu0 %v1309
        %v1425 = vpop.f32.mrf.mxu0
        %v1426 = vadd.f32 %v1335, %v1425
        %1427 = vmatmul.f32.gmra.mxu0 %v1310
        %v1428 = vpop.f32.mrf.mxu0
        %v1429 = vadd.f32 %v1335, %v1428
        %1430 = vmatmul.f32.gmra.mxu0 %v1311
        %v1431 = vpop.f32.mrf.mxu0
        %v1432 = vadd.f32 %v1335, %v1431
        %1433 = vmatmul.f32.gmra.mxu0 %v1312
        %v1434 = vpop.f32.mrf.mxu0
        %v1435 = vadd.f32 %v1335, %v1434
        %1436 = vmatmul.f32.gmra.mxu0 %v1313
        %v1437 = vpop.f32.mrf.mxu0
        %v1438 = vadd.f32 %v1335, %v1437
        %1439 = vmatmul.f32.gmra.mxu0 %v1314
        %v1440 = vpop.f32.mrf.mxu0
        %v1441 = vadd.f32 %v1335, %v1440
        %1442 = vmatmul.f32.gmra.mxu0 %v1315
        %v1443 = vpop.f32.mrf.mxu0
        %v1444 = vadd.f32 %v1335, %v1443
        %1445 = vmatmul.f32.gmra.mxu0 %v1316
        %v1446 = vpop.f32.mrf.mxu0
        %v1447 = vadd.f32 %v1335, %v1446
        %1448 = vdwg.mxu0
        %v1449 = vtanh.pop %v1354
        %v1450 = vtanh.pop %v1357
        %v1451 = vtanh.pop %v1360
        %v1452 = vtanh.pop %v1363
        %v1453 = vtanh.pop %v1366
        %v1454 = vtanh.pop %v1369
        %v1455 = vtanh.pop %v1372
        %v1456 = vtanh.pop %v1375
        %v1457 = vtanh.pop %v1378
        %v1458 = vtanh.pop %v1381
        %v1459 = vtanh.pop %v1384
        %v1460 = vtanh.pop %v1387
        %v1461 = vtanh.pop %v1390
        %v1462 = vtanh.pop %v1393
        %v1463 = vtanh.pop %v1396
        %v1464 = vtanh.pop %v1399
        %v1465 = vtanh.pop %v1402
        %v1466 = vtanh.pop %v1405
        %v1467 = vtanh.pop %v1408
        %v1468 = vtanh.pop %v1411
        %v1469 = vtanh.pop %v1414
        %v1470 = vtanh.pop %v1417
        %v1471 = vtanh.pop %v1420
        %v1472 = vtanh.pop %v1423
        %v1473 = vtanh.pop %v1426
        %v1474 = vtanh.pop %v1429
        %v1475 = vtanh.pop %v1432
        %v1476 = vtanh.pop %v1435
        %v1477 = vtanh.pop %v1438
        %v1478 = vtanh.pop %v1441
        %v1479 = vtanh.pop %v1444
        %v1480 = vtanh.pop %v1447
        %v1481 = vld [vmem:[%s269] sm:$0x3]
        %v1483 = vrot.slane %v1481, 1
        %v1484 = vperm.slane %v1481, 0
        %v1485 = vperm.slane %v1483, 0
        %s1488 = scalar_lea.vmem %s221, 256 [#allocation2]
        %v1489 = vld [vmem:[%s1488] sm:$0xff]
        %v1490 = vld [vmem:[%s1488 + $0x8] sm:$0xff]
        %v1491 = vld [vmem:[%s1488 + $0x10] sm:$0xff]
        %v1492 = vld [vmem:[%s1488 + $0x18] sm:$0xff]
        %v1493 = vld [vmem:[%s1488 + $0x20] sm:$0xff]
        %v1494 = vld [vmem:[%s1488 + $0x28] sm:$0xff]
        %v1495 = vld [vmem:[%s1488 + $0x30] sm:$0xff]
        %v1496 = vld [vmem:[%s1488 + $0x38] sm:$0xff]
        %v1497 = vld [vmem:[%s1488 + $0x40] sm:$0xff]
        %v1498 = vld [vmem:[%s1488 + $0x48] sm:$0xff]
        %v1499 = vld [vmem:[%s1488 + $0x50] sm:$0xff]
        %v1500 = vld [vmem:[%s1488 + $0x58] sm:$0xff]
        %v1501 = vld [vmem:[%s1488 + $0x60] sm:$0xff]
        %v1502 = vld [vmem:[%s1488 + $0x68] sm:$0xff]
        %v1503 = vld [vmem:[%s1488 + $0x70] sm:$0xff]
        %v1504 = vld [vmem:[%s1488 + $0x78] sm:$0xff]
        %1505 = vmatpush.msra.mxu0 %v1504
        %1506 = vmatpush.msra.mxu0 %v1503
        %1507 = vmatpush.msra.mxu0 %v1502
        %1508 = vmatpush.msra.mxu0 %v1501
        %1509 = vmatpush.msra.mxu0 %v1500
        %1510 = vmatpush.msra.mxu0 %v1499
        %1511 = vmatpush.msra.mxu0 %v1498
        %1512 = vmatpush.msra.mxu0 %v1497
        %1513 = vmatpush.msra.mxu0 %v1496
        %1514 = vmatpush.msra.mxu0 %v1495
        %1515 = vmatpush.msra.mxu0 %v1494
        %1516 = vmatpush.msra.mxu0 %v1493
        %1517 = vmatpush.msra.mxu0 %v1492
        %1518 = vmatpush.msra.mxu0 %v1491
        %1519 = vmatpush.msra.mxu0 %v1490
        %1520 = vmatpush.msra.mxu0 %v1489
        %1521 = vmatmul.f32.gmra.mxu0 %v1449
        %v1522 = vpop.f32.mrf.mxu0
        %v1523 = vadd.f32 %v1484, %v1522
        %1524 = vmatmul.f32.gmra.mxu0 %v1450
        %v1525 = vpop.f32.mrf.mxu0
        %v1526 = vadd.f32 %v1484, %v1525
        %1527 = vmatmul.f32.gmra.mxu0 %v1451
        %v1528 = vpop.f32.mrf.mxu0
        %v1529 = vadd.f32 %v1484, %v1528
        %1530 = vmatmul.f32.gmra.mxu0 %v1452
        %v1531 = vpop.f32.mrf.mxu0
        %v1532 = vadd.f32 %v1484, %v1531
        %1533 = vmatmul.f32.gmra.mxu0 %v1453
        %v1534 = vpop.f32.mrf.mxu0
        %v1535 = vadd.f32 %v1484, %v1534
        %1536 = vmatmul.f32.gmra.mxu0 %v1454
        %v1537 = vpop.f32.mrf.mxu0
        %v1538 = vadd.f32 %v1484, %v1537
        %1539 = vmatmul.f32.gmra.mxu0 %v1455
        %v1540 = vpop.f32.mrf.mxu0
        %v1541 = vadd.f32 %v1484, %v1540
        %1542 = vmatmul.f32.gmra.mxu0 %v1456
        %v1543 = vpop.f32.mrf.mxu0
        %v1544 = vadd.f32 %v1484, %v1543
        %1545 = vmatmul.f32.gmra.mxu0 %v1457
        %v1546 = vpop.f32.mrf.mxu0
        %v1547 = vadd.f32 %v1484, %v1546
        %1548 = vmatmul.f32.gmra.mxu0 %v1458
        %v1549 = vpop.f32.mrf.mxu0
        %v1550 = vadd.f32 %v1484, %v1549
        %1551 = vmatmul.f32.gmra.mxu0 %v1459
        %v1552 = vpop.f32.mrf.mxu0
        %v1553 = vadd.f32 %v1484, %v1552
        %1554 = vmatmul.f32.gmra.mxu0 %v1460
        %v1555 = vpop.f32.mrf.mxu0
        %v1556 = vadd.f32 %v1484, %v1555
        %1557 = vmatmul.f32.gmra.mxu0 %v1461
        %v1558 = vpop.f32.mrf.mxu0
        %v1559 = vadd.f32 %v1484, %v1558
        %1560 = vmatmul.f32.gmra.mxu0 %v1462
        %v1561 = vpop.f32.mrf.mxu0
        %v1562 = vadd.f32 %v1484, %v1561
        %1563 = vmatmul.f32.gmra.mxu0 %v1463
        %v1564 = vpop.f32.mrf.mxu0
        %v1565 = vadd.f32 %v1484, %v1564
        %1566 = vmatmul.f32.gmra.mxu0 %v1464
        %v1567 = vpop.f32.mrf.mxu0
        %v1568 = vadd.f32 %v1484, %v1567
        %1569 = vmatmul.f32.gmra.mxu0 %v1465
        %v1570 = vpop.f32.mrf.mxu0
        %v1571 = vadd.f32 %v1485, %v1570
        %1572 = vmatmul.f32.gmra.mxu0 %v1466
        %v1573 = vpop.f32.mrf.mxu0
        %v1574 = vadd.f32 %v1485, %v1573
        %1575 = vmatmul.f32.gmra.mxu0 %v1467
        %v1576 = vpop.f32.mrf.mxu0
        %v1577 = vadd.f32 %v1485, %v1576
        %1578 = vmatmul.f32.gmra.mxu0 %v1468
        %v1579 = vpop.f32.mrf.mxu0
        %v1580 = vadd.f32 %v1485, %v1579
        %1581 = vmatmul.f32.gmra.mxu0 %v1469
        %v1582 = vpop.f32.mrf.mxu0
        %v1583 = vadd.f32 %v1485, %v1582
        %1584 = vmatmul.f32.gmra.mxu0 %v1470
        %v1585 = vpop.f32.mrf.mxu0
        %v1586 = vadd.f32 %v1485, %v1585
        %1587 = vmatmul.f32.gmra.mxu0 %v1471
        %v1588 = vpop.f32.mrf.mxu0
        %v1589 = vadd.f32 %v1485, %v1588
        %1590 = vmatmul.f32.gmra.mxu0 %v1472
        %v1591 = vpop.f32.mrf.mxu0
        %v1592 = vadd.f32 %v1485, %v1591
        %1593 = vmatmul.f32.gmra.mxu0 %v1473
        %v1594 = vpop.f32.mrf.mxu0
        %v1595 = vadd.f32 %v1485, %v1594
        %1596 = vmatmul.f32.gmra.mxu0 %v1474
        %v1597 = vpop.f32.mrf.mxu0
        %v1598 = vadd.f32 %v1485, %v1597
        %1599 = vmatmul.f32.gmra.mxu0 %v1475
        %v1600 = vpop.f32.mrf.mxu0
        %v1601 = vadd.f32 %v1485, %v1600
        %1602 = vmatmul.f32.gmra.mxu0 %v1476
        %v1603 = vpop.f32.mrf.mxu0
        %v1604 = vadd.f32 %v1485, %v1603
        %1605 = vmatmul.f32.gmra.mxu0 %v1477
        %v1606 = vpop.f32.mrf.mxu0
        %v1607 = vadd.f32 %v1485, %v1606
        %1608 = vmatmul.f32.gmra.mxu0 %v1478
        %v1609 = vpop.f32.mrf.mxu0
        %v1610 = vadd.f32 %v1485, %v1609
        %1611 = vmatmul.f32.gmra.mxu0 %v1479
        %v1612 = vpop.f32.mrf.mxu0
        %v1613 = vadd.f32 %v1485, %v1612
        %1614 = vmatmul.f32.gmra.mxu0 %v1480
        %v1615 = vpop.f32.mrf.mxu0
        %v1616 = vadd.f32 %v1485, %v1615
        %1617 = vdwg.mxu0
        %v1618 = vadd.f32 %v1523, %v1526
        %v1619 = vadd.f32 %v1618, %v1529
        %v1620 = vadd.f32 %v1619, %v1532
        %v1621 = vadd.f32 %v1620, %v1535
        %v1622 = vadd.f32 %v1621, %v1538
        %v1623 = vadd.f32 %v1622, %v1541
        %v1624 = vadd.f32 %v1623, %v1544
        %v1625 = vadd.f32 %v1624, %v1547
        %v1626 = vadd.f32 %v1625, %v1550
        %v1627 = vadd.f32 %v1626, %v1553
        %v1628 = vadd.f32 %v1627, %v1556
        %v1629 = vadd.f32 %v1628, %v1559
        %v1630 = vadd.f32 %v1629, %v1562
        %v1631 = vadd.f32 %v1630, %v1565
        %v1632 = vadd.f32 %v1631, %v1568
        %v1633 = vadd.f32 %v1632, %v1571
        %v1634 = vadd.f32 %v1633, %v1574
        %v1635 = vadd.f32 %v1634, %v1577
        %v1636 = vadd.f32 %v1635, %v1580
        %v1637 = vadd.f32 %v1636, %v1583
        %v1638 = vadd.f32 %v1637, %v1586
        %v1639 = vadd.f32 %v1638, %v1589
        %v1640 = vadd.f32 %v1639, %v1592
        %v1641 = vadd.f32 %v1640, %v1595
        %v1642 = vadd.f32 %v1641, %v1598
        %v1643 = vadd.f32 %v1642, %v1601
        %v1644 = vadd.f32 %v1643, %v1604
        %v1645 = vadd.f32 %v1644, %v1607
        %v1646 = vadd.f32 %v1645, %v1610
        %v1647 = vadd.f32 %v1646, %v1613
        %v1648 = vadd.f32 %v1647, %v1616
        %v1649 = vrot.slane %v1648, 4
        %v1650 = vadd.f32 %v1648, %v1649
        %v1651 = vrot.slane %v1650, 2
        %v1652 = vadd.f32 %v1650, %v1651
        %v1653 = vrot.slane %v1652, 1
        %v1654 = vadd.f32 %v1652, %v1653
        %v1655 = vmul.f32 %v1654, %v772
        %v1656 = vmul.f32 %v1523, %v1523
        %v1657 = vmul.f32 %v1526, %v1526
        %v1658 = vmul.f32 %v1529, %v1529
        %v1659 = vmul.f32 %v1532, %v1532
        %v1660 = vmul.f32 %v1535, %v1535
        %v1661 = vmul.f32 %v1538, %v1538
        %v1662 = vmul.f32 %v1541, %v1541
        %v1663 = vmul.f32 %v1544, %v1544
        %v1664 = vmul.f32 %v1547, %v1547
        %v1665 = vmul.f32 %v1550, %v1550
        %v1666 = vmul.f32 %v1553, %v1553
        %v1667 = vmul.f32 %v1556, %v1556
        %v1668 = vmul.f32 %v1559, %v1559
        %v1669 = vmul.f32 %v1562, %v1562
        %v1670 = vmul.f32 %v1565, %v1565
        %v1671 = vmul.f32 %v1568, %v1568
        %v1672 = vmul.f32 %v1571, %v1571
        %v1673 = vmul.f32 %v1574, %v1574
        %v1674 = vmul.f32 %v1577, %v1577
        %v1675 = vmul.f32 %v1580, %v1580
        %v1676 = vmul.f32 %v1583, %v1583
        %v1677 = vmul.f32 %v1586, %v1586
        %v1678 = vmul.f32 %v1589, %v1589
        %v1679 = vmul.f32 %v1592, %v1592
        %v1680 = vmul.f32 %v1595, %v1595
        %v1681 = vmul.f32 %v1598, %v1598
        %v1682 = vmul.f32 %v1601, %v1601
        %v1683 = vmul.f32 %v1604, %v1604
        %v1684 = vmul.f32 %v1607, %v1607
        %v1685 = vmul.f32 %v1610, %v1610
        %v1686 = vmul.f32 %v1613, %v1613
        %v1687 = vmul.f32 %v1616, %v1616
        %v1688 = vadd.f32 %v1656, %v1657
        %v1689 = vadd.f32 %v1688, %v1658
        %v1690 = vadd.f32 %v1689, %v1659
        %v1691 = vadd.f32 %v1690, %v1660
        %v1692 = vadd.f32 %v1691, %v1661
        %v1693 = vadd.f32 %v1692, %v1662
        %v1694 = vadd.f32 %v1693, %v1663
        %v1695 = vadd.f32 %v1694, %v1664
        %v1696 = vadd.f32 %v1695, %v1665
        %v1697 = vadd.f32 %v1696, %v1666
        %v1698 = vadd.f32 %v1697, %v1667
        %v1699 = vadd.f32 %v1698, %v1668
        %v1700 = vadd.f32 %v1699, %v1669
        %v1701 = vadd.f32 %v1700, %v1670
        %v1702 = vadd.f32 %v1701, %v1671
        %v1703 = vadd.f32 %v1702, %v1672
        %v1704 = vadd.f32 %v1703, %v1673
        %v1705 = vadd.f32 %v1704, %v1674
        %v1706 = vadd.f32 %v1705, %v1675
        %v1707 = vadd.f32 %v1706, %v1676
        %v1708 = vadd.f32 %v1707, %v1677
        %v1709 = vadd.f32 %v1708, %v1678
        %v1710 = vadd.f32 %v1709, %v1679
        %v1711 = vadd.f32 %v1710, %v1680
        %v1712 = vadd.f32 %v1711, %v1681
        %v1713 = vadd.f32 %v1712, %v1682
        %v1714 = vadd.f32 %v1713, %v1683
        %v1715 = vadd.f32 %v1714, %v1684
        %v1716 = vadd.f32 %v1715, %v1685
        %v1717 = vadd.f32 %v1716, %v1686
        %v1718 = vadd.f32 %v1717, %v1687
        %v1719 = vrot.slane %v1718, 4
        %v1720 = vadd.f32 %v1718, %v1719
        %v1721 = vrot.slane %v1720, 2
        %v1722 = vadd.f32 %v1720, %v1721
        %v1723 = vrot.slane %v1722, 1
        %v1724 = vadd.f32 %v1722, %v1723
        %v1725 = vmul.f32 %v1724, %v772
        %v1726 = vmul.f32 %v1655, %v1655
        %v1727 = vsub.f32 %v1725, %v1726
        %v1728 = vmax.f32 %v1727, 0.0
        %v1729 = vld [vmem:[%s274 + $0x9] sm:$0x1]
        %v1730 = vadd.f32 %v1728, 1e-05
        %v1731 = vrsqrt.pop %v1730
        %v1732 = vmul.f32 %v1731, %v1730
        %v1733 = vmul.f32 %v1732, %v1731
        %v1734 = vmul.f32 0.5, %v1733
        %v1735 = vsub.f32 1.5, %v1734
        %v1736 = vmul.f32 %v1731, %v1735
        %vm1737 = vweird.f32 %v1730
        %vm1738 = vweird.f32 %v1731
        %vm1739 = vmor %vm1737, %vm1738
        %v1740 = vsel %vm1739, %v1731, %v1736
        %v1741 = vmul.f32 %v1729, %v1740
        %v1742 = vperm.slane %v1741, 0
        %v1743 = vmul.f32 %v1523, %v1742
        %v1744 = vmul.f32 %v1526, %v1742
        %v1745 = vmul.f32 %v1529, %v1742
        %v1746 = vmul.f32 %v1532, %v1742
        %v1747 = vmul.f32 %v1535, %v1742
        %v1748 = vmul.f32 %v1538, %v1742
        %v1749 = vmul.f32 %v1541, %v1742
        %v1750 = vmul.f32 %v1544, %v1742
        %v1751 = vmul.f32 %v1547, %v1742
        %v1752 = vmul.f32 %v1550, %v1742
        %v1753 = vmul.f32 %v1553, %v1742
        %v1754 = vmul.f32 %v1556, %v1742
        %v1755 = vmul.f32 %v1559, %v1742
        %v1756 = vmul.f32 %v1562, %v1742
        %v1757 = vmul.f32 %v1565, %v1742
        %v1758 = vmul.f32 %v1568, %v1742
        %v1759 = vmul.f32 %v1571, %v1742
        %v1760 = vmul.f32 %v1574, %v1742
        %v1761 = vmul.f32 %v1577, %v1742
        %v1762 = vmul.f32 %v1580, %v1742
        %v1763 = vmul.f32 %v1583, %v1742
        %v1764 = vmul.f32 %v1586, %v1742
        %v1765 = vmul.f32 %v1589, %v1742
        %v1766 = vmul.f32 %v1592, %v1742
        %v1767 = vmul.f32 %v1595, %v1742
        %v1768 = vmul.f32 %v1598, %v1742
        %v1769 = vmul.f32 %v1601, %v1742
        %v1770 = vmul.f32 %v1604, %v1742
        %v1771 = vmul.f32 %v1607, %v1742
        %v1772 = vmul.f32 %v1610, %v1742
        %v1773 = vmul.f32 %v1613, %v1742
        %v1774 = vmul.f32 %v1616, %v1742
        %v1775 = vld [vmem:[%s274 + $0xa] sm:$0x1]
        %v1776 = vmul.f32 %v1655, %v1741
        %v1777 = vsub.f32 %v1775, %v1776
        %v1778 = vperm.slane %v1777, 0
        %v1779 = vadd.f32 %v1743, %v1778
        %v1780 = vadd.f32 %v1744, %v1778
        %v1781 = vadd.f32 %v1745, %v1778
        %v1782 = vadd.f32 %v1746, %v1778
        %v1783 = vadd.f32 %v1747, %v1778
        %v1784 = vadd.f32 %v1748, %v1778
        %v1785 = vadd.f32 %v1749, %v1778
        %v1786 = vadd.f32 %v1750, %v1778
        %v1787 = vadd.f32 %v1751, %v1778
        %v1788 = vadd.f32 %v1752, %v1778
        %v1789 = vadd.f32 %v1753, %v1778
        %v1790 = vadd.f32 %v1754, %v1778
        %v1791 = vadd.f32 %v1755, %v1778
        %v1792 = vadd.f32 %v1756, %v1778
        %v1793 = vadd.f32 %v1757, %v1778
        %v1794 = vadd.f32 %v1758, %v1778
        %v1795 = vadd.f32 %v1759, %v1778
        %v1796 = vadd.f32 %v1760, %v1778
        %v1797 = vadd.f32 %v1761, %v1778
        %v1798 = vadd.f32 %v1762, %v1778
        %v1799 = vadd.f32 %v1763, %v1778
        %v1800 = vadd.f32 %v1764, %v1778
        %v1801 = vadd.f32 %v1765, %v1778
        %v1802 = vadd.f32 %v1766, %v1778
        %v1803 = vadd.f32 %v1767, %v1778
        %v1804 = vadd.f32 %v1768, %v1778
        %v1805 = vadd.f32 %v1769, %v1778
        %v1806 = vadd.f32 %v1770, %v1778
        %v1807 = vadd.f32 %v1771, %v1778
        %v1808 = vadd.f32 %v1772, %v1778
        %v1809 = vadd.f32 %v1773, %v1778
        %v1810 = vadd.f32 %v1774, %v1778
        %v1811 = vmax.f32 %v1779, 0.0
        %v1812 = vmax.f32 %v1780, 0.0
        %v1813 = vmax.f32 %v1781, 0.0
        %v1814 = vmax.f32 %v1782, 0.0
        %v1815 = vmax.f32 %v1783, 0.0
        %v1816 = vmax.f32 %v1784, 0.0
        %v1817 = vmax.f32 %v1785, 0.0
        %v1818 = vmax.f32 %v1786, 0.0
        %v1819 = vmax.f32 %v1787, 0.0
        %v1820 = vmax.f32 %v1788, 0.0
        %v1821 = vmax.f32 %v1789, 0.0
        %v1822 = vmax.f32 %v1790, 0.0
        %v1823 = vmax.f32 %v1791, 0.0
        %v1824 = vmax.f32 %v1792, 0.0
        %v1825 = vmax.f32 %v1793, 0.0
        %v1826 = vmax.f32 %v1794, 0.0
        %v1827 = vmax.f32 %v1795, 0.0
        %v1828 = vmax.f32 %v1796, 0.0
        %v1829 = vmax.f32 %v1797, 0.0
        %v1830 = vmax.f32 %v1798, 0.0
        %v1831 = vmax.f32 %v1799, 0.0
        %v1832 = vmax.f32 %v1800, 0.0
        %v1833 = vmax.f32 %v1801, 0.0
        %v1834 = vmax.f32 %v1802, 0.0
        %v1835 = vmax.f32 %v1803, 0.0
        %v1836 = vmax.f32 %v1804, 0.0
        %v1837 = vmax.f32 %v1805, 0.0
        %v1838 = vmax.f32 %v1806, 0.0
        %v1839 = vmax.f32 %v1807, 0.0
        %v1840 = vmax.f32 %v1808, 0.0
        %v1841 = vmax.f32 %v1809, 0.0
        %v1842 = vmax.f32 %v1810, 0.0
        %s1843 = scalar_lea.vmem %s221, 384 [#allocation2]
        %v1844 = vld [vmem:[%s1843] sm:$0xff]
        %v1845 = vld [vmem:[%s1843 + $0x8] sm:$0xff]
        %v1846 = vld [vmem:[%s1843 + $0x10] sm:$0xff]
        %v1847 = vld [vmem:[%s1843 + $0x18] sm:$0xff]
        %v1848 = vld [vmem:[%s1843 + $0x20] sm:$0xff]
        %v1849 = vld [vmem:[%s1843 + $0x28] sm:$0xff]
        %v1850 = vld [vmem:[%s1843 + $0x30] sm:$0xff]
        %v1851 = vld [vmem:[%s1843 + $0x38] sm:$0xff]
        %v1852 = vld [vmem:[%s1843 + $0x40] sm:$0xff]
        %v1853 = vld [vmem:[%s1843 + $0x48] sm:$0xff]
        %v1854 = vld [vmem:[%s1843 + $0x50] sm:$0xff]
        %v1855 = vld [vmem:[%s1843 + $0x58] sm:$0xff]
        %v1856 = vld [vmem:[%s1843 + $0x60] sm:$0xff]
        %v1857 = vld [vmem:[%s1843 + $0x68] sm:$0xff]
        %v1858 = vld [vmem:[%s1843 + $0x70] sm:$0xff]
        %v1859 = vld [vmem:[%s1843 + $0x78] sm:$0xff]
        %v1860 = vld [vmem:[%s274 + $0xb] sm:$0x1]
        %v1861 = vperm.slane %v1860, 0
        %1862 = vmatpush.msra.mxu0 %v1859
        %1863 = vmatpush.msra.mxu0 %v1858
        %1864 = vmatpush.msra.mxu0 %v1857
        %1865 = vmatpush.msra.mxu0 %v1856
        %1866 = vmatpush.msra.mxu0 %v1855
        %1867 = vmatpush.msra.mxu0 %v1854
        %1868 = vmatpush.msra.mxu0 %v1853
        %1869 = vmatpush.msra.mxu0 %v1852
        %1870 = vmatpush.msra.mxu0 %v1851
        %1871 = vmatpush.msra.mxu0 %v1850
        %1872 = vmatpush.msra.mxu0 %v1849
        %1873 = vmatpush.msra.mxu0 %v1848
        %1874 = vmatpush.msra.mxu0 %v1847
        %1875 = vmatpush.msra.mxu0 %v1846
        %1876 = vmatpush.msra.mxu0 %v1845
        %1877 = vmatpush.msra.mxu0 %v1844
        %1878 = vmatmul.f32.gmra.mxu0 %v1811
        %v1879 = vpop.f32.mrf.mxu0
        %v1880 = vadd.f32 %v1861, %v1879
        %1881 = vmatmul.f32.gmra.mxu0 %v1812
        %v1882 = vpop.f32.mrf.mxu0
        %v1883 = vadd.f32 %v1861, %v1882
        %1884 = vmatmul.f32.gmra.mxu0 %v1813
        %v1885 = vpop.f32.mrf.mxu0
        %v1886 = vadd.f32 %v1861, %v1885
        %1887 = vmatmul.f32.gmra.mxu0 %v1814
        %v1888 = vpop.f32.mrf.mxu0
        %v1889 = vadd.f32 %v1861, %v1888
        %1890 = vmatmul.f32.gmra.mxu0 %v1815
        %v1891 = vpop.f32.mrf.mxu0
        %v1892 = vadd.f32 %v1861, %v1891
        %1893 = vmatmul.f32.gmra.mxu0 %v1816
        %v1894 = vpop.f32.mrf.mxu0
        %v1895 = vadd.f32 %v1861, %v1894
        %1896 = vmatmul.f32.gmra.mxu0 %v1817
        %v1897 = vpop.f32.mrf.mxu0
        %v1898 = vadd.f32 %v1861, %v1897
        %1899 = vmatmul.f32.gmra.mxu0 %v1818
        %v1900 = vpop.f32.mrf.mxu0
        %v1901 = vadd.f32 %v1861, %v1900
        %1902 = vmatmul.f32.gmra.mxu0 %v1819
        %v1903 = vpop.f32.mrf.mxu0
        %v1904 = vadd.f32 %v1861, %v1903
        %1905 = vmatmul.f32.gmra.mxu0 %v1820
        %v1906 = vpop.f32.mrf.mxu0
        %v1907 = vadd.f32 %v1861, %v1906
        %1908 = vmatmul.f32.gmra.mxu0 %v1821
        %v1909 = vpop.f32.mrf.mxu0
        %v1910 = vadd.f32 %v1861, %v1909
        %1911 = vmatmul.f32.gmra.mxu0 %v1822
        %v1912 = vpop.f32.mrf.mxu0
        %v1913 = vadd.f32 %v1861, %v1912
        %1914 = vmatmul.f32.gmra.mxu0 %v1823
        %v1915 = vpop.f32.mrf.mxu0
        %v1916 = vadd.f32 %v1861, %v1915
        %1917 = vmatmul.f32.gmra.mxu0 %v1824
        %v1918 = vpop.f32.mrf.mxu0
        %v1919 = vadd.f32 %v1861, %v1918
        %1920 = vmatmul.f32.gmra.mxu0 %v1825
        %v1921 = vpop.f32.mrf.mxu0
        %v1922 = vadd.f32 %v1861, %v1921
        %1923 = vmatmul.f32.gmra.mxu0 %v1826
        %v1924 = vpop.f32.mrf.mxu0
        %v1925 = vadd.f32 %v1861, %v1924
        %1926 = vmatmul.f32.gmra.mxu0 %v1827
        %v1927 = vpop.f32.mrf.mxu0
        %v1928 = vadd.f32 %v1861, %v1927
        %1929 = vmatmul.f32.gmra.mxu0 %v1828
        %v1930 = vpop.f32.mrf.mxu0
        %v1931 = vadd.f32 %v1861, %v1930
        %1932 = vmatmul.f32.gmra.mxu0 %v1829
        %v1933 = vpop.f32.mrf.mxu0
        %v1934 = vadd.f32 %v1861, %v1933
        %1935 = vmatmul.f32.gmra.mxu0 %v1830
        %v1936 = vpop.f32.mrf.mxu0
        %v1937 = vadd.f32 %v1861, %v1936
        %1938 = vmatmul.f32.gmra.mxu0 %v1831
        %v1939 = vpop.f32.mrf.mxu0
        %v1940 = vadd.f32 %v1861, %v1939
        %1941 = vmatmul.f32.gmra.mxu0 %v1832
        %v1942 = vpop.f32.mrf.mxu0
        %v1943 = vadd.f32 %v1861, %v1942
        %1944 = vmatmul.f32.gmra.mxu0 %v1833
        %v1945 = vpop.f32.mrf.mxu0
        %v1946 = vadd.f32 %v1861, %v1945
        %1947 = vmatmul.f32.gmra.mxu0 %v1834
        %v1948 = vpop.f32.mrf.mxu0
        %v1949 = vadd.f32 %v1861, %v1948
        %1950 = vmatmul.f32.gmra.mxu0 %v1835
        %v1951 = vpop.f32.mrf.mxu0
        %v1952 = vadd.f32 %v1861, %v1951
        %1953 = vmatmul.f32.gmra.mxu0 %v1836
        %v1954 = vpop.f32.mrf.mxu0
        %v1955 = vadd.f32 %v1861, %v1954
        %1956 = vmatmul.f32.gmra.mxu0 %v1837
        %v1957 = vpop.f32.mrf.mxu0
        %v1958 = vadd.f32 %v1861, %v1957
        %1959 = vmatmul.f32.gmra.mxu0 %v1838
        %v1960 = vpop.f32.mrf.mxu0
        %v1961 = vadd.f32 %v1861, %v1960
        %1962 = vmatmul.f32.gmra.mxu0 %v1839
        %v1963 = vpop.f32.mrf.mxu0
        %v1964 = vadd.f32 %v1861, %v1963
        %1965 = vmatmul.f32.gmra.mxu0 %v1840
        %v1966 = vpop.f32.mrf.mxu0
        %v1967 = vadd.f32 %v1861, %v1966
        %1968 = vmatmul.f32.gmra.mxu0 %v1841
        %v1969 = vpop.f32.mrf.mxu0
        %v1970 = vadd.f32 %v1861, %v1969
        %1971 = vmatmul.f32.gmra.mxu0 %v1842
        %v1972 = vpop.f32.mrf.mxu0
        %v1973 = vadd.f32 %v1861, %v1972
        %1974 = vdwg.mxu0
        %v1975 = vadd.f32 %v1880, %v1883
        %v1976 = vadd.f32 %v1975, %v1886
        %v1977 = vadd.f32 %v1976, %v1889
        %v1978 = vadd.f32 %v1977, %v1892
        %v1979 = vadd.f32 %v1978, %v1895
        %v1980 = vadd.f32 %v1979, %v1898
        %v1981 = vadd.f32 %v1980, %v1901
        %v1982 = vadd.f32 %v1981, %v1904
        %v1983 = vadd.f32 %v1982, %v1907
        %v1984 = vadd.f32 %v1983, %v1910
        %v1985 = vadd.f32 %v1984, %v1913
        %v1986 = vadd.f32 %v1985, %v1916
        %v1987 = vadd.f32 %v1986, %v1919
        %v1988 = vadd.f32 %v1987, %v1922
        %v1989 = vadd.f32 %v1988, %v1925
        %v1990 = vadd.f32 %v1989, %v1928
        %v1991 = vadd.f32 %v1990, %v1931
        %v1992 = vadd.f32 %v1991, %v1934
        %v1993 = vadd.f32 %v1992, %v1937
        %v1994 = vadd.f32 %v1993, %v1940
        %v1995 = vadd.f32 %v1994, %v1943
        %v1996 = vadd.f32 %v1995, %v1946
        %v1997 = vadd.f32 %v1996, %v1949
        %v1998 = vadd.f32 %v1997, %v1952
        %v1999 = vadd.f32 %v1998, %v1955
        %v2000 = vadd.f32 %v1999, %v1958
        %v2001 = vadd.f32 %v2000, %v1961
        %v2002 = vadd.f32 %v2001, %v1964
        %v2003 = vadd.f32 %v2002, %v1967
        %v2004 = vadd.f32 %v2003, %v1970
        %v2005 = vadd.f32 %v2004, %v1973
        %v2006 = vrot.slane %v2005, 4
        %v2007 = vadd.f32 %v2005, %v2006
        %v2008 = vrot.slane %v2007, 2
        %v2009 = vadd.f32 %v2007, %v2008
        %v2010 = vrot.slane %v2009, 1
        %v2011 = vadd.f32 %v2009, %v2010
        %v2012 = vmul.f32 %v2011, %v772
        %v2013 = vmul.f32 %v1880, %v1880
        %v2014 = vmul.f32 %v1883, %v1883
        %v2015 = vmul.f32 %v1886, %v1886
        %v2016 = vmul.f32 %v1889, %v1889
        %v2017 = vmul.f32 %v1892, %v1892
        %v2018 = vmul.f32 %v1895, %v1895
        %v2019 = vmul.f32 %v1898, %v1898
        %v2020 = vmul.f32 %v1901, %v1901
        %v2021 = vmul.f32 %v1904, %v1904
        %v2022 = vmul.f32 %v1907, %v1907
        %v2023 = vmul.f32 %v1910, %v1910
        %v2024 = vmul.f32 %v1913, %v1913
        %v2025 = vmul.f32 %v1916, %v1916
        %v2026 = vmul.f32 %v1919, %v1919
        %v2027 = vmul.f32 %v1922, %v1922
        %v2028 = vmul.f32 %v1925, %v1925
        %v2029 = vmul.f32 %v1928, %v1928
        %v2030 = vmul.f32 %v1931, %v1931
        %v2031 = vmul.f32 %v1934, %v1934
        %v2032 = vmul.f32 %v1937, %v1937
        %v2033 = vmul.f32 %v1940, %v1940
        %v2034 = vmul.f32 %v1943, %v1943
        %v2035 = vmul.f32 %v1946, %v1946
        %v2036 = vmul.f32 %v1949, %v1949
        %v2037 = vmul.f32 %v1952, %v1952
        %v2038 = vmul.f32 %v1955, %v1955
        %v2039 = vmul.f32 %v1958, %v1958
        %v2040 = vmul.f32 %v1961, %v1961
        %v2041 = vmul.f32 %v1964, %v1964
        %v2042 = vmul.f32 %v1967, %v1967
        %v2043 = vmul.f32 %v1970, %v1970
        %v2044 = vmul.f32 %v1973, %v1973
        %v2045 = vadd.f32 %v2013, %v2014
        %v2046 = vadd.f32 %v2045, %v2015
        %v2047 = vadd.f32 %v2046, %v2016
        %v2048 = vadd.f32 %v2047, %v2017
        %v2049 = vadd.f32 %v2048, %v2018
        %v2050 = vadd.f32 %v2049, %v2019
        %v2051 = vadd.f32 %v2050, %v2020
        %v2052 = vadd.f32 %v2051, %v2021
        %v2053 = vadd.f32 %v2052, %v2022
        %v2054 = vadd.f32 %v2053, %v2023
        %v2055 = vadd.f32 %v2054, %v2024
        %v2056 = vadd.f32 %v2055, %v2025
        %v2057 = vadd.f32 %v2056, %v2026
        %v2058 = vadd.f32 %v2057, %v2027
        %v2059 = vadd.f32 %v2058, %v2028
        %v2060 = vadd.f32 %v2059, %v2029
        %v2061 = vadd.f32 %v2060, %v2030
        %v2062 = vadd.f32 %v2061, %v2031
        %v2063 = vadd.f32 %v2062, %v2032
        %v2064 = vadd.f32 %v2063, %v2033
        %v2065 = vadd.f32 %v2064, %v2034
        %v2066 = vadd.f32 %v2065, %v2035
        %v2067 = vadd.f32 %v2066, %v2036
        %v2068 = vadd.f32 %v2067, %v2037
        %v2069 = vadd.f32 %v2068, %v2038
        %v2070 = vadd.f32 %v2069, %v2039
        %v2071 = vadd.f32 %v2070, %v2040
        %v2072 = vadd.f32 %v2071, %v2041
        %v2073 = vadd.f32 %v2072, %v2042
        %v2074 = vadd.f32 %v2073, %v2043
        %v2075 = vadd.f32 %v2074, %v2044
        %v2076 = vrot.slane %v2075, 4
        %v2077 = vadd.f32 %v2075, %v2076
        %v2078 = vrot.slane %v2077, 2
        %v2079 = vadd.f32 %v2077, %v2078
        %v2080 = vrot.slane %v2079, 1
        %v2081 = vadd.f32 %v2079, %v2080
        %v2082 = vmul.f32 %v2081, %v772
        %v2083 = vmul.f32 %v2012, %v2012
        %v2084 = vsub.f32 %v2082, %v2083
        %v2085 = vmax.f32 %v2084, 0.0
        %v2086 = vld [vmem:[%s274 + $0xc] sm:$0x1]
        %v2087 = vadd.f32 %v2085, 1e-05
        %v2088 = vrsqrt.pop %v2087
        %v2089 = vmul.f32 %v2088, %v2087
        %v2090 = vmul.f32 %v2089, %v2088
        %v2091 = vmul.f32 0.5, %v2090
        %v2092 = vsub.f32 1.5, %v2091
        %v2093 = vmul.f32 %v2088, %v2092
        %vm2094 = vweird.f32 %v2087
        %vm2095 = vweird.f32 %v2088
        %vm2096 = vmor %vm2094, %vm2095
        %v2097 = vsel %vm2096, %v2088, %v2093
        %v2098 = vmul.f32 %v2086, %v2097
        %v2099 = vperm.slane %v2098, 0
        %v2100 = vmul.f32 %v1880, %v2099
        %v2101 = vmul.f32 %v1883, %v2099
        %v2102 = vmul.f32 %v1886, %v2099
        %v2103 = vmul.f32 %v1889, %v2099
        %v2104 = vmul.f32 %v1892, %v2099
        %v2105 = vmul.f32 %v1895, %v2099
        %v2106 = vmul.f32 %v1898, %v2099
        %v2107 = vmul.f32 %v1901, %v2099
        %v2108 = vmul.f32 %v1904, %v2099
        %v2109 = vmul.f32 %v1907, %v2099
        %v2110 = vmul.f32 %v1910, %v2099
        %v2111 = vmul.f32 %v1913, %v2099
        %v2112 = vmul.f32 %v1916, %v2099
        %v2113 = vmul.f32 %v1919, %v2099
        %v2114 = vmul.f32 %v1922, %v2099
        %v2115 = vmul.f32 %v1925, %v2099
        %v2116 = vmul.f32 %v1928, %v2099
        %v2117 = vmul.f32 %v1931, %v2099
        %v2118 = vmul.f32 %v1934, %v2099
        %v2119 = vmul.f32 %v1937, %v2099
        %v2120 = vmul.f32 %v1940, %v2099
        %v2121 = vmul.f32 %v1943, %v2099
        %v2122 = vmul.f32 %v1946, %v2099
        %v2123 = vmul.f32 %v1949, %v2099
        %v2124 = vmul.f32 %v1952, %v2099
        %v2125 = vmul.f32 %v1955, %v2099
        %v2126 = vmul.f32 %v1958, %v2099
        %v2127 = vmul.f32 %v1961, %v2099
        %v2128 = vmul.f32 %v1964, %v2099
        %v2129 = vmul.f32 %v1967, %v2099
        %v2130 = vmul.f32 %v1970, %v2099
        %v2131 = vmul.f32 %v1973, %v2099
        %v2132 = vld [vmem:[%s274 + $0xd] sm:$0x1]
        %v2133 = vmul.f32 %v2012, %v2098
        %v2134 = vsub.f32 %v2132, %v2133
        %v2135 = vperm.slane %v2134, 0
        %v2136 = vadd.f32 %v2100, %v2135
        %v2137 = vadd.f32 %v2101, %v2135
        %v2138 = vadd.f32 %v2102, %v2135
        %v2139 = vadd.f32 %v2103, %v2135
        %v2140 = vadd.f32 %v2104, %v2135
        %v2141 = vadd.f32 %v2105, %v2135
        %v2142 = vadd.f32 %v2106, %v2135
        %v2143 = vadd.f32 %v2107, %v2135
        %v2144 = vadd.f32 %v2108, %v2135
        %v2145 = vadd.f32 %v2109, %v2135
        %v2146 = vadd.f32 %v2110, %v2135
        %v2147 = vadd.f32 %v2111, %v2135
        %v2148 = vadd.f32 %v2112, %v2135
        %v2149 = vadd.f32 %v2113, %v2135
        %v2150 = vadd.f32 %v2114, %v2135
        %v2151 = vadd.f32 %v2115, %v2135
        %v2152 = vadd.f32 %v2116, %v2135
        %v2153 = vadd.f32 %v2117, %v2135
        %v2154 = vadd.f32 %v2118, %v2135
        %v2155 = vadd.f32 %v2119, %v2135
        %v2156 = vadd.f32 %v2120, %v2135
        %v2157 = vadd.f32 %v2121, %v2135
        %v2158 = vadd.f32 %v2122, %v2135
        %v2159 = vadd.f32 %v2123, %v2135
        %v2160 = vadd.f32 %v2124, %v2135
        %v2161 = vadd.f32 %v2125, %v2135
        %v2162 = vadd.f32 %v2126, %v2135
        %v2163 = vadd.f32 %v2127, %v2135
        %v2164 = vadd.f32 %v2128, %v2135
        %v2165 = vadd.f32 %v2129, %v2135
        %v2166 = vadd.f32 %v2130, %v2135
        %v2167 = vadd.f32 %v2131, %v2135
        %v2168 = vmax.f32 %v2136, 0.0
        %v2169 = vmax.f32 %v2137, 0.0
        %v2170 = vmax.f32 %v2138, 0.0
        %v2171 = vmax.f32 %v2139, 0.0
        %v2172 = vmax.f32 %v2140, 0.0
        %v2173 = vmax.f32 %v2141, 0.0
        %v2174 = vmax.f32 %v2142, 0.0
        %v2175 = vmax.f32 %v2143, 0.0
        %v2176 = vmax.f32 %v2144, 0.0
        %v2177 = vmax.f32 %v2145, 0.0
        %v2178 = vmax.f32 %v2146, 0.0
        %v2179 = vmax.f32 %v2147, 0.0
        %v2180 = vmax.f32 %v2148, 0.0
        %v2181 = vmax.f32 %v2149, 0.0
        %v2182 = vmax.f32 %v2150, 0.0
        %v2183 = vmax.f32 %v2151, 0.0
        %v2184 = vmax.f32 %v2152, 0.0
        %v2185 = vmax.f32 %v2153, 0.0
        %v2186 = vmax.f32 %v2154, 0.0
        %v2187 = vmax.f32 %v2155, 0.0
        %v2188 = vmax.f32 %v2156, 0.0
        %v2189 = vmax.f32 %v2157, 0.0
        %v2190 = vmax.f32 %v2158, 0.0
        %v2191 = vmax.f32 %v2159, 0.0
        %v2192 = vmax.f32 %v2160, 0.0
        %v2193 = vmax.f32 %v2161, 0.0
        %v2194 = vmax.f32 %v2162, 0.0
        %v2195 = vmax.f32 %v2163, 0.0
        %v2196 = vmax.f32 %v2164, 0.0
        %v2197 = vmax.f32 %v2165, 0.0
        %v2198 = vmax.f32 %v2166, 0.0
        %v2199 = vmax.f32 %v2167, 0.0
        %s2200 = scalar_lea.vmem %s221, 512 [#allocation2]
        %v2201 = vld [vmem:[%s2200] sm:$0xff]
        %v2202 = vld [vmem:[%s2200 + $0x8] sm:$0xff]
        %v2203 = vld [vmem:[%s2200 + $0x10] sm:$0xff]
        %v2204 = vld [vmem:[%s2200 + $0x18] sm:$0xff]
        %v2205 = vld [vmem:[%s2200 + $0x20] sm:$0xff]
        %v2206 = vld [vmem:[%s2200 + $0x28] sm:$0xff]
        %v2207 = vld [vmem:[%s2200 + $0x30] sm:$0xff]
        %v2208 = vld [vmem:[%s2200 + $0x38] sm:$0xff]
        %v2209 = vld [vmem:[%s2200 + $0x40] sm:$0xff]
        %v2210 = vld [vmem:[%s2200 + $0x48] sm:$0xff]
        %v2211 = vld [vmem:[%s2200 + $0x50] sm:$0xff]
        %v2212 = vld [vmem:[%s2200 + $0x58] sm:$0xff]
        %v2213 = vld [vmem:[%s2200 + $0x60] sm:$0xff]
        %v2214 = vld [vmem:[%s2200 + $0x68] sm:$0xff]
        %v2215 = vld [vmem:[%s2200 + $0x70] sm:$0xff]
        %v2216 = vld [vmem:[%s2200 + $0x78] sm:$0xff]
        %v2217 = vld [vmem:[%s274 + $0xe] sm:$0x1]
        %v2218 = vperm.slane %v2217, 0
        %2219 = vmatpush.msra.mxu0 %v2216
        %2220 = vmatpush.msra.mxu0 %v2215
        %2221 = vmatpush.msra.mxu0 %v2214
        %2222 = vmatpush.msra.mxu0 %v2213
        %2223 = vmatpush.msra.mxu0 %v2212
        %2224 = vmatpush.msra.mxu0 %v2211
        %2225 = vmatpush.msra.mxu0 %v2210
        %2226 = vmatpush.msra.mxu0 %v2209
        %2227 = vmatpush.msra.mxu0 %v2208
        %2228 = vmatpush.msra.mxu0 %v2207
        %2229 = vmatpush.msra.mxu0 %v2206
        %2230 = vmatpush.msra.mxu0 %v2205
        %2231 = vmatpush.msra.mxu0 %v2204
        %2232 = vmatpush.msra.mxu0 %v2203
        %2233 = vmatpush.msra.mxu0 %v2202
        %2234 = vmatpush.msra.mxu0 %v2201
        %2235 = vmatmul.f32.gmra.mxu0 %v2168
        %v2236 = vpop.f32.mrf.mxu0
        %v2237 = vadd.f32 %v2218, %v2236
        %2238 = vmatmul.f32.gmra.mxu0 %v2169
        %v2239 = vpop.f32.mrf.mxu0
        %v2240 = vadd.f32 %v2218, %v2239
        %2241 = vmatmul.f32.gmra.mxu0 %v2170
        %v2242 = vpop.f32.mrf.mxu0
        %v2243 = vadd.f32 %v2218, %v2242
        %2244 = vmatmul.f32.gmra.mxu0 %v2171
        %v2245 = vpop.f32.mrf.mxu0
        %v2246 = vadd.f32 %v2218, %v2245
        %2247 = vmatmul.f32.gmra.mxu0 %v2172
        %v2248 = vpop.f32.mrf.mxu0
        %v2249 = vadd.f32 %v2218, %v2248
        %2250 = vmatmul.f32.gmra.mxu0 %v2173
        %v2251 = vpop.f32.mrf.mxu0
        %v2252 = vadd.f32 %v2218, %v2251
        %2253 = vmatmul.f32.gmra.mxu0 %v2174
        %v2254 = vpop.f32.mrf.mxu0
        %v2255 = vadd.f32 %v2218, %v2254
        %2256 = vmatmul.f32.gmra.mxu0 %v2175
        %v2257 = vpop.f32.mrf.mxu0
        %v2258 = vadd.f32 %v2218, %v2257
        %2259 = vmatmul.f32.gmra.mxu0 %v2176
        %v2260 = vpop.f32.mrf.mxu0
        %v2261 = vadd.f32 %v2218, %v2260
        %2262 = vmatmul.f32.gmra.mxu0 %v2177
        %v2263 = vpop.f32.mrf.mxu0
        %v2264 = vadd.f32 %v2218, %v2263
        %2265 = vmatmul.f32.gmra.mxu0 %v2178
        %v2266 = vpop.f32.mrf.mxu0
        %v2267 = vadd.f32 %v2218, %v2266
        %2268 = vmatmul.f32.gmra.mxu0 %v2179
        %v2269 = vpop.f32.mrf.mxu0
        %v2270 = vadd.f32 %v2218, %v2269
        %2271 = vmatmul.f32.gmra.mxu0 %v2180
        %v2272 = vpop.f32.mrf.mxu0
        %v2273 = vadd.f32 %v2218, %v2272
        %2274 = vmatmul.f32.gmra.mxu0 %v2181
        %v2275 = vpop.f32.mrf.mxu0
        %v2276 = vadd.f32 %v2218, %v2275
        %2277 = vmatmul.f32.gmra.mxu0 %v2182
        %v2278 = vpop.f32.mrf.mxu0
        %v2279 = vadd.f32 %v2218, %v2278
        %2280 = vmatmul.f32.gmra.mxu0 %v2183
        %v2281 = vpop.f32.mrf.mxu0
        %v2282 = vadd.f32 %v2218, %v2281
        %2283 = vmatmul.f32.gmra.mxu0 %v2184
        %v2284 = vpop.f32.mrf.mxu0
        %v2285 = vadd.f32 %v2218, %v2284
        %2286 = vmatmul.f32.gmra.mxu0 %v2185
        %v2287 = vpop.f32.mrf.mxu0
        %v2288 = vadd.f32 %v2218, %v2287
        %2289 = vmatmul.f32.gmra.mxu0 %v2186
        %v2290 = vpop.f32.mrf.mxu0
        %v2291 = vadd.f32 %v2218, %v2290
        %2292 = vmatmul.f32.gmra.mxu0 %v2187
        %v2293 = vpop.f32.mrf.mxu0
        %v2294 = vadd.f32 %v2218, %v2293
        %2295 = vmatmul.f32.gmra.mxu0 %v2188
        %v2296 = vpop.f32.mrf.mxu0
        %v2297 = vadd.f32 %v2218, %v2296
        %2298 = vmatmul.f32.gmra.mxu0 %v2189
        %v2299 = vpop.f32.mrf.mxu0
        %v2300 = vadd.f32 %v2218, %v2299
        %2301 = vmatmul.f32.gmra.mxu0 %v2190
        %v2302 = vpop.f32.mrf.mxu0
        %v2303 = vadd.f32 %v2218, %v2302
        %2304 = vmatmul.f32.gmra.mxu0 %v2191
        %v2305 = vpop.f32.mrf.mxu0
        %v2306 = vadd.f32 %v2218, %v2305
        %2307 = vmatmul.f32.gmra.mxu0 %v2192
        %v2308 = vpop.f32.mrf.mxu0
        %v2309 = vadd.f32 %v2218, %v2308
        %2310 = vmatmul.f32.gmra.mxu0 %v2193
        %v2311 = vpop.f32.mrf.mxu0
        %v2312 = vadd.f32 %v2218, %v2311
        %2313 = vmatmul.f32.gmra.mxu0 %v2194
        %v2314 = vpop.f32.mrf.mxu0
        %v2315 = vadd.f32 %v2218, %v2314
        %2316 = vmatmul.f32.gmra.mxu0 %v2195
        %v2317 = vpop.f32.mrf.mxu0
        %v2318 = vadd.f32 %v2218, %v2317
        %2319 = vmatmul.f32.gmra.mxu0 %v2196
        %v2320 = vpop.f32.mrf.mxu0
        %v2321 = vadd.f32 %v2218, %v2320
        %2322 = vmatmul.f32.gmra.mxu0 %v2197
        %v2323 = vpop.f32.mrf.mxu0
        %v2324 = vadd.f32 %v2218, %v2323
        %2325 = vmatmul.f32.gmra.mxu0 %v2198
        %v2326 = vpop.f32.mrf.mxu0
        %v2327 = vadd.f32 %v2218, %v2326
        %2328 = vmatmul.f32.gmra.mxu0 %v2199
        %v2329 = vpop.f32.mrf.mxu0
        %v2330 = vadd.f32 %v2218, %v2329
        %2331 = vdwg.mxu0
        %v2332 = vadd.f32 %v2237, %v2240
        %v2333 = vadd.f32 %v2332, %v2243
        %v2334 = vadd.f32 %v2333, %v2246
        %v2335 = vadd.f32 %v2334, %v2249
        %v2336 = vadd.f32 %v2335, %v2252
        %v2337 = vadd.f32 %v2336, %v2255
        %v2338 = vadd.f32 %v2337, %v2258
        %v2339 = vadd.f32 %v2338, %v2261
        %v2340 = vadd.f32 %v2339, %v2264
        %v2341 = vadd.f32 %v2340, %v2267
        %v2342 = vadd.f32 %v2341, %v2270
        %v2343 = vadd.f32 %v2342, %v2273
        %v2344 = vadd.f32 %v2343, %v2276
        %v2345 = vadd.f32 %v2344, %v2279
        %v2346 = vadd.f32 %v2345, %v2282
        %v2347 = vadd.f32 %v2346, %v2285
        %v2348 = vadd.f32 %v2347, %v2288
        %v2349 = vadd.f32 %v2348, %v2291
        %v2350 = vadd.f32 %v2349, %v2294
        %v2351 = vadd.f32 %v2350, %v2297
        %v2352 = vadd.f32 %v2351, %v2300
        %v2353 = vadd.f32 %v2352, %v2303
        %v2354 = vadd.f32 %v2353, %v2306
        %v2355 = vadd.f32 %v2354, %v2309
        %v2356 = vadd.f32 %v2355, %v2312
        %v2357 = vadd.f32 %v2356, %v2315
        %v2358 = vadd.f32 %v2357, %v2318
        %v2359 = vadd.f32 %v2358, %v2321
        %v2360 = vadd.f32 %v2359, %v2324
        %v2361 = vadd.f32 %v2360, %v2327
        %v2362 = vadd.f32 %v2361, %v2330
        %v2363 = vrot.slane %v2362, 4
        %v2364 = vadd.f32 %v2362, %v2363
        %v2365 = vrot.slane %v2364, 2
        %v2366 = vadd.f32 %v2364, %v2365
        %v2367 = vrot.slane %v2366, 1
        %v2368 = vadd.f32 %v2366, %v2367
        %v2369 = vmul.f32 %v2368, %v772
        %v2370 = vmul.f32 %v2237, %v2237
        %v2371 = vmul.f32 %v2240, %v2240
        %v2372 = vmul.f32 %v2243, %v2243
        %v2373 = vmul.f32 %v2246, %v2246
        %v2374 = vmul.f32 %v2249, %v2249
        %v2375 = vmul.f32 %v2252, %v2252
        %v2376 = vmul.f32 %v2255, %v2255
        %v2377 = vmul.f32 %v2258, %v2258
        %v2378 = vmul.f32 %v2261, %v2261
        %v2379 = vmul.f32 %v2264, %v2264
        %v2380 = vmul.f32 %v2267, %v2267
        %v2381 = vmul.f32 %v2270, %v2270
        %v2382 = vmul.f32 %v2273, %v2273
        %v2383 = vmul.f32 %v2276, %v2276
        %v2384 = vmul.f32 %v2279, %v2279
        %v2385 = vmul.f32 %v2282, %v2282
        %v2386 = vmul.f32 %v2285, %v2285
        %v2387 = vmul.f32 %v2288, %v2288
        %v2388 = vmul.f32 %v2291, %v2291
        %v2389 = vmul.f32 %v2294, %v2294
        %v2390 = vmul.f32 %v2297, %v2297
        %v2391 = vmul.f32 %v2300, %v2300
        %v2392 = vmul.f32 %v2303, %v2303
        %v2393 = vmul.f32 %v2306, %v2306
        %v2394 = vmul.f32 %v2309, %v2309
        %v2395 = vmul.f32 %v2312, %v2312
        %v2396 = vmul.f32 %v2315, %v2315
        %v2397 = vmul.f32 %v2318, %v2318
        %v2398 = vmul.f32 %v2321, %v2321
        %v2399 = vmul.f32 %v2324, %v2324
        %v2400 = vmul.f32 %v2327, %v2327
        %v2401 = vmul.f32 %v2330, %v2330
        %v2402 = vadd.f32 %v2370, %v2371
        %v2403 = vadd.f32 %v2402, %v2372
        %v2404 = vadd.f32 %v2403, %v2373
        %v2405 = vadd.f32 %v2404, %v2374
        %v2406 = vadd.f32 %v2405, %v2375
        %v2407 = vadd.f32 %v2406, %v2376
        %v2408 = vadd.f32 %v2407, %v2377
        %v2409 = vadd.f32 %v2408, %v2378
        %v2410 = vadd.f32 %v2409, %v2379
        %v2411 = vadd.f32 %v2410, %v2380
        %v2412 = vadd.f32 %v2411, %v2381
        %v2413 = vadd.f32 %v2412, %v2382
        %v2414 = vadd.f32 %v2413, %v2383
        %v2415 = vadd.f32 %v2414, %v2384
        %v2416 = vadd.f32 %v2415, %v2385
        %v2417 = vadd.f32 %v2416, %v2386
        %v2418 = vadd.f32 %v2417, %v2387
        %v2419 = vadd.f32 %v2418, %v2388
        %v2420 = vadd.f32 %v2419, %v2389
        %v2421 = vadd.f32 %v2420, %v2390
        %v2422 = vadd.f32 %v2421, %v2391
        %v2423 = vadd.f32 %v2422, %v2392
        %v2424 = vadd.f32 %v2423, %v2393
        %v2425 = vadd.f32 %v2424, %v2394
        %v2426 = vadd.f32 %v2425, %v2395
        %v2427 = vadd.f32 %v2426, %v2396
        %v2428 = vadd.f32 %v2427, %v2397
        %v2429 = vadd.f32 %v2428, %v2398
        %v2430 = vadd.f32 %v2429, %v2399
        %v2431 = vadd.f32 %v2430, %v2400
        %v2432 = vadd.f32 %v2431, %v2401
        %v2433 = vrot.slane %v2432, 4
        %v2434 = vadd.f32 %v2432, %v2433
        %v2435 = vrot.slane %v2434, 2
        %v2436 = vadd.f32 %v2434, %v2435
        %v2437 = vrot.slane %v2436, 1
        %v2438 = vadd.f32 %v2436, %v2437
        %v2439 = vmul.f32 %v2438, %v772
        %v2440 = vmul.f32 %v2369, %v2369
        %v2441 = vsub.f32 %v2439, %v2440
        %v2442 = vmax.f32 %v2441, 0.0
        %v2443 = vld [vmem:[%s274 + $0xf] sm:$0x1]
        %v2444 = vadd.f32 %v2442, 1e-05
        %v2445 = vrsqrt.pop %v2444
        %v2446 = vmul.f32 %v2445, %v2444
        %v2447 = vmul.f32 %v2446, %v2445
        %v2448 = vmul.f32 0.5, %v2447
        %v2449 = vsub.f32 1.5, %v2448
        %v2450 = vmul.f32 %v2445, %v2449
        %vm2451 = vweird.f32 %v2444
        %vm2452 = vweird.f32 %v2445
        %vm2453 = vmor %vm2451, %vm2452
        %v2454 = vsel %vm2453, %v2445, %v2450
        %v2455 = vmul.f32 %v2443, %v2454
        %v2456 = vperm.slane %v2455, 0
        %v2457 = vmul.f32 %v2237, %v2456
        %v2458 = vmul.f32 %v2240, %v2456
        %v2459 = vmul.f32 %v2243, %v2456
        %v2460 = vmul.f32 %v2246, %v2456
        %v2461 = vmul.f32 %v2249, %v2456
        %v2462 = vmul.f32 %v2252, %v2456
        %v2463 = vmul.f32 %v2255, %v2456
        %v2464 = vmul.f32 %v2258, %v2456
        %v2465 = vmul.f32 %v2261, %v2456
        %v2466 = vmul.f32 %v2264, %v2456
        %v2467 = vmul.f32 %v2267, %v2456
        %v2468 = vmul.f32 %v2270, %v2456
        %v2469 = vmul.f32 %v2273, %v2456
        %v2470 = vmul.f32 %v2276, %v2456
        %v2471 = vmul.f32 %v2279, %v2456
        %v2472 = vmul.f32 %v2282, %v2456
        %v2473 = vmul.f32 %v2285, %v2456
        %v2474 = vmul.f32 %v2288, %v2456
        %v2475 = vmul.f32 %v2291, %v2456
        %v2476 = vmul.f32 %v2294, %v2456
        %v2477 = vmul.f32 %v2297, %v2456
        %v2478 = vmul.f32 %v2300, %v2456
        %v2479 = vmul.f32 %v2303, %v2456
        %v2480 = vmul.f32 %v2306, %v2456
        %v2481 = vmul.f32 %v2309, %v2456
        %v2482 = vmul.f32 %v2312, %v2456
        %v2483 = vmul.f32 %v2315, %v2456
        %v2484 = vmul.f32 %v2318, %v2456
        %v2485 = vmul.f32 %v2321, %v2456
        %v2486 = vmul.f32 %v2324, %v2456
        %v2487 = vmul.f32 %v2327, %v2456
        %v2488 = vmul.f32 %v2330, %v2456
        %v2489 = vld [vmem:[%s274 + $0x10] sm:$0x1]
        %v2490 = vmul.f32 %v2369, %v2455
        %v2491 = vsub.f32 %v2489, %v2490
        %v2492 = vperm.slane %v2491, 0
        %v2493 = vadd.f32 %v2457, %v2492
        %v2494 = vadd.f32 %v2458, %v2492
        %v2495 = vadd.f32 %v2459, %v2492
        %v2496 = vadd.f32 %v2460, %v2492
        %v2497 = vadd.f32 %v2461, %v2492
        %v2498 = vadd.f32 %v2462, %v2492
        %v2499 = vadd.f32 %v2463, %v2492
        %v2500 = vadd.f32 %v2464, %v2492
        %v2501 = vadd.f32 %v2465, %v2492
        %v2502 = vadd.f32 %v2466, %v2492
        %v2503 = vadd.f32 %v2467, %v2492
        %v2504 = vadd.f32 %v2468, %v2492
        %v2505 = vadd.f32 %v2469, %v2492
        %v2506 = vadd.f32 %v2470, %v2492
        %v2507 = vadd.f32 %v2471, %v2492
        %v2508 = vadd.f32 %v2472, %v2492
        %v2509 = vadd.f32 %v2473, %v2492
        %v2510 = vadd.f32 %v2474, %v2492
        %v2511 = vadd.f32 %v2475, %v2492
        %v2512 = vadd.f32 %v2476, %v2492
        %v2513 = vadd.f32 %v2477, %v2492
        %v2514 = vadd.f32 %v2478, %v2492
        %v2515 = vadd.f32 %v2479, %v2492
        %v2516 = vadd.f32 %v2480, %v2492
        %v2517 = vadd.f32 %v2481, %v2492
        %v2518 = vadd.f32 %v2482, %v2492
        %v2519 = vadd.f32 %v2483, %v2492
        %v2520 = vadd.f32 %v2484, %v2492
        %v2521 = vadd.f32 %v2485, %v2492
        %v2522 = vadd.f32 %v2486, %v2492
        %v2523 = vadd.f32 %v2487, %v2492
        %v2524 = vadd.f32 %v2488, %v2492
        %v2525 = vmax.f32 %v2493, 0.0
        %v2526 = vmax.f32 %v2494, 0.0
        %v2527 = vmax.f32 %v2495, 0.0
        %v2528 = vmax.f32 %v2496, 0.0
        %v2529 = vmax.f32 %v2497, 0.0
        %v2530 = vmax.f32 %v2498, 0.0
        %v2531 = vmax.f32 %v2499, 0.0
        %v2532 = vmax.f32 %v2500, 0.0
        %v2533 = vmax.f32 %v2501, 0.0
        %v2534 = vmax.f32 %v2502, 0.0
        %v2535 = vmax.f32 %v2503, 0.0
        %v2536 = vmax.f32 %v2504, 0.0
        %v2537 = vmax.f32 %v2505, 0.0
        %v2538 = vmax.f32 %v2506, 0.0
        %v2539 = vmax.f32 %v2507, 0.0
        %v2540 = vmax.f32 %v2508, 0.0
        %v2541 = vmax.f32 %v2509, 0.0
        %v2542 = vmax.f32 %v2510, 0.0
        %v2543 = vmax.f32 %v2511, 0.0
        %v2544 = vmax.f32 %v2512, 0.0
        %v2545 = vmax.f32 %v2513, 0.0
        %v2546 = vmax.f32 %v2514, 0.0
        %v2547 = vmax.f32 %v2515, 0.0
        %v2548 = vmax.f32 %v2516, 0.0
        %v2549 = vmax.f32 %v2517, 0.0
        %v2550 = vmax.f32 %v2518, 0.0
        %v2551 = vmax.f32 %v2519, 0.0
        %v2552 = vmax.f32 %v2520, 0.0
        %v2553 = vmax.f32 %v2521, 0.0
        %v2554 = vmax.f32 %v2522, 0.0
        %v2555 = vmax.f32 %v2523, 0.0
        %v2556 = vmax.f32 %v2524, 0.0
        %s2557 = scalar_lea.vmem %s221, 640 [#allocation2]
        %v2558 = vld [vmem:[%s2557] sm:$0xff]
        %v2559 = vld [vmem:[%s2557 + $0x8] sm:$0xff]
        %v2560 = vld [vmem:[%s2557 + $0x10] sm:$0xff]
        %v2561 = vld [vmem:[%s2557 + $0x18] sm:$0xff]
        %v2562 = vld [vmem:[%s2557 + $0x20] sm:$0xff]
        %v2563 = vld [vmem:[%s2557 + $0x28] sm:$0xff]
        %v2564 = vld [vmem:[%s2557 + $0x30] sm:$0xff]
        %v2565 = vld [vmem:[%s2557 + $0x38] sm:$0xff]
        %v2566 = vld [vmem:[%s2557 + $0x40] sm:$0xff]
        %v2567 = vld [vmem:[%s2557 + $0x48] sm:$0xff]
        %v2568 = vld [vmem:[%s2557 + $0x50] sm:$0xff]
        %v2569 = vld [vmem:[%s2557 + $0x58] sm:$0xff]
        %v2570 = vld [vmem:[%s2557 + $0x60] sm:$0xff]
        %v2571 = vld [vmem:[%s2557 + $0x68] sm:$0xff]
        %v2572 = vld [vmem:[%s2557 + $0x70] sm:$0xff]
        %v2573 = vld [vmem:[%s2557 + $0x78] sm:$0xff]
        %v2574 = vld [vmem:[%s274 + $0x11] sm:$0x1]
        %v2575 = vperm.slane %v2574, 0
        %2576 = vmatpush.msra.mxu0 %v2573
        %2577 = vmatpush.msra.mxu0 %v2572
        %2578 = vmatpush.msra.mxu0 %v2571
        %2579 = vmatpush.msra.mxu0 %v2570
        %2580 = vmatpush.msra.mxu0 %v2569
        %2581 = vmatpush.msra.mxu0 %v2568
        %2582 = vmatpush.msra.mxu0 %v2567
        %2583 = vmatpush.msra.mxu0 %v2566
        %2584 = vmatpush.msra.mxu0 %v2565
        %2585 = vmatpush.msra.mxu0 %v2564
        %2586 = vmatpush.msra.mxu0 %v2563
        %2587 = vmatpush.msra.mxu0 %v2562
        %2588 = vmatpush.msra.mxu0 %v2561
        %2589 = vmatpush.msra.mxu0 %v2560
        %2590 = vmatpush.msra.mxu0 %v2559
        %2591 = vmatpush.msra.mxu0 %v2558
        %2592 = vmatmul.f32.gmra.mxu0 %v2525
        %v2593 = vpop.f32.mrf.mxu0
        %v2594 = vadd.f32 %v2575, %v2593
        %2595 = vmatmul.f32.gmra.mxu0 %v2526
        %v2596 = vpop.f32.mrf.mxu0
        %v2597 = vadd.f32 %v2575, %v2596
        %2598 = vmatmul.f32.gmra.mxu0 %v2527
        %v2599 = vpop.f32.mrf.mxu0
        %v2600 = vadd.f32 %v2575, %v2599
        %2601 = vmatmul.f32.gmra.mxu0 %v2528
        %v2602 = vpop.f32.mrf.mxu0
        %v2603 = vadd.f32 %v2575, %v2602
        %2604 = vmatmul.f32.gmra.mxu0 %v2529
        %v2605 = vpop.f32.mrf.mxu0
        %v2606 = vadd.f32 %v2575, %v2605
        %2607 = vmatmul.f32.gmra.mxu0 %v2530
        %v2608 = vpop.f32.mrf.mxu0
        %v2609 = vadd.f32 %v2575, %v2608
        %2610 = vmatmul.f32.gmra.mxu0 %v2531
        %v2611 = vpop.f32.mrf.mxu0
        %v2612 = vadd.f32 %v2575, %v2611
        %2613 = vmatmul.f32.gmra.mxu0 %v2532
        %v2614 = vpop.f32.mrf.mxu0
        %v2615 = vadd.f32 %v2575, %v2614
        %2616 = vmatmul.f32.gmra.mxu0 %v2533
        %v2617 = vpop.f32.mrf.mxu0
        %v2618 = vadd.f32 %v2575, %v2617
        %2619 = vmatmul.f32.gmra.mxu0 %v2534
        %v2620 = vpop.f32.mrf.mxu0
        %v2621 = vadd.f32 %v2575, %v2620
        %2622 = vmatmul.f32.gmra.mxu0 %v2535
        %v2623 = vpop.f32.mrf.mxu0
        %v2624 = vadd.f32 %v2575, %v2623
        %2625 = vmatmul.f32.gmra.mxu0 %v2536
        %v2626 = vpop.f32.mrf.mxu0
        %v2627 = vadd.f32 %v2575, %v2626
        %2628 = vmatmul.f32.gmra.mxu0 %v2537
        %v2629 = vpop.f32.mrf.mxu0
        %v2630 = vadd.f32 %v2575, %v2629
        %2631 = vmatmul.f32.gmra.mxu0 %v2538
        %v2632 = vpop.f32.mrf.mxu0
        %v2633 = vadd.f32 %v2575, %v2632
        %2634 = vmatmul.f32.gmra.mxu0 %v2539
        %v2635 = vpop.f32.mrf.mxu0
        %v2636 = vadd.f32 %v2575, %v2635
        %2637 = vmatmul.f32.gmra.mxu0 %v2540
        %v2638 = vpop.f32.mrf.mxu0
        %v2639 = vadd.f32 %v2575, %v2638
        %2640 = vmatmul.f32.gmra.mxu0 %v2541
        %v2641 = vpop.f32.mrf.mxu0
        %v2642 = vadd.f32 %v2575, %v2641
        %2643 = vmatmul.f32.gmra.mxu0 %v2542
        %v2644 = vpop.f32.mrf.mxu0
        %v2645 = vadd.f32 %v2575, %v2644
        %2646 = vmatmul.f32.gmra.mxu0 %v2543
        %v2647 = vpop.f32.mrf.mxu0
        %v2648 = vadd.f32 %v2575, %v2647
        %2649 = vmatmul.f32.gmra.mxu0 %v2544
        %v2650 = vpop.f32.mrf.mxu0
        %v2651 = vadd.f32 %v2575, %v2650
        %2652 = vmatmul.f32.gmra.mxu0 %v2545
        %v2653 = vpop.f32.mrf.mxu0
        %v2654 = vadd.f32 %v2575, %v2653
        %2655 = vmatmul.f32.gmra.mxu0 %v2546
        %v2656 = vpop.f32.mrf.mxu0
        %v2657 = vadd.f32 %v2575, %v2656
        %2658 = vmatmul.f32.gmra.mxu0 %v2547
        %v2659 = vpop.f32.mrf.mxu0
        %v2660 = vadd.f32 %v2575, %v2659
        %2661 = vmatmul.f32.gmra.mxu0 %v2548
        %v2662 = vpop.f32.mrf.mxu0
        %v2663 = vadd.f32 %v2575, %v2662
        %2664 = vmatmul.f32.gmra.mxu0 %v2549
        %v2665 = vpop.f32.mrf.mxu0
        %v2666 = vadd.f32 %v2575, %v2665
        %2667 = vmatmul.f32.gmra.mxu0 %v2550
        %v2668 = vpop.f32.mrf.mxu0
        %v2669 = vadd.f32 %v2575, %v2668
        %2670 = vmatmul.f32.gmra.mxu0 %v2551
        %v2671 = vpop.f32.mrf.mxu0
        %v2672 = vadd.f32 %v2575, %v2671
        %2673 = vmatmul.f32.gmra.mxu0 %v2552
        %v2674 = vpop.f32.mrf.mxu0
        %v2675 = vadd.f32 %v2575, %v2674
        %2676 = vmatmul.f32.gmra.mxu0 %v2553
        %v2677 = vpop.f32.mrf.mxu0
        %v2678 = vadd.f32 %v2575, %v2677
        %2679 = vmatmul.f32.gmra.mxu0 %v2554
        %v2680 = vpop.f32.mrf.mxu0
        %v2681 = vadd.f32 %v2575, %v2680
        %2682 = vmatmul.f32.gmra.mxu0 %v2555
        %v2683 = vpop.f32.mrf.mxu0
        %v2684 = vadd.f32 %v2575, %v2683
        %2685 = vmatmul.f32.gmra.mxu0 %v2556
        %v2686 = vpop.f32.mrf.mxu0
        %v2687 = vadd.f32 %v2575, %v2686
        %2688 = vdwg.mxu0
        %v2689 = vtanh.pop %v2594
        %v2690 = vtanh.pop %v2597
        %v2691 = vtanh.pop %v2600
        %v2692 = vtanh.pop %v2603
        %v2693 = vtanh.pop %v2606
        %v2694 = vtanh.pop %v2609
        %v2695 = vtanh.pop %v2612
        %v2696 = vtanh.pop %v2615
        %v2697 = vtanh.pop %v2618
        %v2698 = vtanh.pop %v2621
        %v2699 = vtanh.pop %v2624
        %v2700 = vtanh.pop %v2627
        %v2701 = vtanh.pop %v2630
        %v2702 = vtanh.pop %v2633
        %v2703 = vtanh.pop %v2636
        %v2704 = vtanh.pop %v2639
        %v2705 = vtanh.pop %v2642
        %v2706 = vtanh.pop %v2645
        %v2707 = vtanh.pop %v2648
        %v2708 = vtanh.pop %v2651
        %v2709 = vtanh.pop %v2654
        %v2710 = vtanh.pop %v2657
        %v2711 = vtanh.pop %v2660
        %v2712 = vtanh.pop %v2663
        %v2713 = vtanh.pop %v2666
        %v2714 = vtanh.pop %v2669
        %v2715 = vtanh.pop %v2672
        %v2716 = vtanh.pop %v2675
        %v2717 = vtanh.pop %v2678
        %v2718 = vtanh.pop %v2681
        %v2719 = vtanh.pop %v2684
        %v2720 = vtanh.pop %v2687
        %v2721 = vmul.f32 %v2689, 0.5
        %v2722 = vmul.f32 %v2690, 0.5
        %v2723 = vmul.f32 %v2691, 0.5
        %v2724 = vmul.f32 %v2692, 0.5
        %v2725 = vmul.f32 %v2693, 0.5
        %v2726 = vmul.f32 %v2694, 0.5
        %v2727 = vmul.f32 %v2695, 0.5
        %v2728 = vmul.f32 %v2696, 0.5
        %v2729 = vmul.f32 %v2697, 0.5
        %v2730 = vmul.f32 %v2698, 0.5
        %v2731 = vmul.f32 %v2699, 0.5
        %v2732 = vmul.f32 %v2700, 0.5
        %v2733 = vmul.f32 %v2701, 0.5
        %v2734 = vmul.f32 %v2702, 0.5
        %v2735 = vmul.f32 %v2703, 0.5
        %v2736 = vmul.f32 %v2704, 0.5
        %v2737 = vmul.f32 %v2705, 0.5
        %v2738 = vmul.f32 %v2706, 0.5
        %v2739 = vmul.f32 %v2707, 0.5
        %v2740 = vmul.f32 %v2708, 0.5
        %v2741 = vmul.f32 %v2709, 0.5
        %v2742 = vmul.f32 %v2710, 0.5
        %v2743 = vmul.f32 %v2711, 0.5
        %v2744 = vmul.f32 %v2712, 0.5
        %v2745 = vmul.f32 %v2713, 0.5
        %v2746 = vmul.f32 %v2714, 0.5
        %v2747 = vmul.f32 %v2715, 0.5
        %v2748 = vmul.f32 %v2716, 0.5
        %v2749 = vmul.f32 %v2717, 0.5
        %v2750 = vmul.f32 %v2718, 0.5
        %v2751 = vmul.f32 %v2719, 0.5
        %v2752 = vmul.f32 %v2720, 0.5
        %2753 = vst [vmem:[%s260] sm:$0xff] %v2721
        %2754 = vst [vmem:[%s260 + $0x8] sm:$0xff] %v2722
        %2755 = vst [vmem:[%s260 + $0x10] sm:$0xff] %v2723
        %2756 = vst [vmem:[%s260 + $0x18] sm:$0xff] %v2724
        %2757 = vst [vmem:[%s260 + $0x20] sm:$0xff] %v2725
        %2758 = vst [vmem:[%s260 + $0x28] sm:$0xff] %v2726
        %2759 = vst [vmem:[%s260 + $0x30] sm:$0xff] %v2727
        %2760 = vst [vmem:[%s260 + $0x38] sm:$0xff] %v2728
        %2761 = vst [vmem:[%s260 + $0x40] sm:$0xff] %v2729
        %2762 = vst [vmem:[%s260 + $0x48] sm:$0xff] %v2730
        %2763 = vst [vmem:[%s260 + $0x50] sm:$0xff] %v2731
        %2764 = vst [vmem:[%s260 + $0x58] sm:$0xff] %v2732
        %2765 = vst [vmem:[%s260 + $0x60] sm:$0xff] %v2733
        %2766 = vst [vmem:[%s260 + $0x68] sm:$0xff] %v2734
        %2767 = vst [vmem:[%s260 + $0x70] sm:$0xff] %v2735
        %2768 = vst [vmem:[%s260 + $0x78] sm:$0xff] %v2736
        %2769 = vst [vmem:[%s260 + $0x80] sm:$0xff] %v2737
        %2770 = vst [vmem:[%s260 + $0x88] sm:$0xff] %v2738
        %2771 = vst [vmem:[%s260 + $0x90] sm:$0xff] %v2739
        %2772 = vst [vmem:[%s260 + $0x98] sm:$0xff] %v2740
        %2773 = vst [vmem:[%s260 + $0xa0] sm:$0xff] %v2741
        %2774 = vst [vmem:[%s260 + $0xa8] sm:$0xff] %v2742
        %2775 = vst [vmem:[%s260 + $0xb0] sm:$0xff] %v2743
        %2776 = vst [vmem:[%s260 + $0xb8] sm:$0xff] %v2744
        %2777 = vst [vmem:[%s260 + $0xc0] sm:$0xff] %v2745
        %2778 = vst [vmem:[%s260 + $0xc8] sm:$0xff] %v2746
        %2779 = vst [vmem:[%s260 + $0xd0] sm:$0xff] %v2747
        %2780 = vst [vmem:[%s260 + $0xd8] sm:$0xff] %v2748
        %2781 = vst [vmem:[%s260 + $0xe0] sm:$0xff] %v2749
        %2782 = vst [vmem:[%s260 + $0xe8] sm:$0xff] %v2750
        %2783 = vst [vmem:[%s260 + $0xf0] sm:$0xff] %v2751
        %2784 = vst [vmem:[%s260 + $0xf8] sm:$0xff] %v2752
        %s2785 = sand.u32 %s133, 1
        %s2786 = scalar_lea.sflag [#allocation4], %s2785
        %s2787 = sand.u32 %s133, 1
        %s2788 = smul.addr %s2787, 256
        %s2789 = scalar_lea.vmem [#allocation5], %s2788
        // Predicated region
        $region41: #{tpu_custom_call.1} parent=35 // pred_check
          %p2790 = pneg %p143
        $region42: #{tpu_custom_call.1} parent=35 // pred_check_branch
          %2792 = sbr.rel (%p2790) target = $region44
        $region43: #{tpu_custom_call.1} parent=35 // pred_region
          %2794 = vsyncadd %s2786, 0
          %s2795 = smul.addr %s21, 32
          %s2796 = smul.addr %s2795, 8
          %s2797 = scalar_lea.hbm %s4, %s2796
          %s2798 = sshll.u32 %s2789, 4
          %s2799 = int_to_ptr.vmem [resolvable:$true] %s2798
          %s2800 = sshll.u32 %s2797, 4
          %s2801 = int_to_ptr.hbm [resolvable:$true] %s2800
          %2806 = dma.vmem_to_hbm [thread:$0]  %s2799, 4096, %s2801, %s2786, 128, 128, 8
        $region44: #{tpu_custom_call.1} parent=35 // pred_fallthru
          _
      $region36: #{tpu_custom_call.1} parent=5 // pred_fallthru
        _
      %p2807 = scmp.le.s32.totalorder 2, %s16
      // Predicated region
      $region45: #{tpu_custom_call.1} parent=5 // pred_check
        %p2808 = pneg %p2807
      $region46: #{tpu_custom_call.1} parent=5 // pred_check_branch
        %2810 = sbr.rel (%p2808) target = $region48
      $region47: #{tpu_custom_call.1} parent=5 // pred_region
        %s2811 = ssub.s32 %s16, 2
        // Predicated region
        $region49: #{tpu_custom_call.1} parent=47 // pred_check
          %p2812 = pneg %p149
        $region50: #{tpu_custom_call.1} parent=47 // pred_check_branch
          %2814 = sbr.rel (%p2812) target = $region52
        $region51: #{tpu_custom_call.1} parent=47 // pred_region
          %s2815 = sand.u32 %s134, 1
          %s2816 = scalar_lea.sflag [#allocation4], %s2815
          %s2817 = sand.u32 %s134, 1
          %s2818 = smul.addr %s2817, 256
          %s2819 = scalar_lea.vmem [#allocation5], %s2818
          %2821 = dma.done %s2816, 4096
        $region52: #{tpu_custom_call.1} parent=47 // pred_fallthru
          _
      $region48: #{tpu_custom_call.1} parent=5 // pred_fallthru
        _
    $region6: #{tpu_custom_call.1} parent=1 // loop_footer
      %s20 = sadd.s32 1, %s16
    $region7: #{tpu_custom_call.1} parent=1 // loop_footer_branch
      %15 = sbr.rel target = $region3
    $region8: #{tpu_custom_call.1} parent=1 // loop_exit
      _
    %2822 = vsyncpa [#allocation3], 1
    %s2823 = scalar_lea.sflag [#allocation3], 1
    %2824 = vsyncpa %s2823, 1
    %2825 = vsyncpa [#allocation4], 1
    %s2826 = scalar_lea.sflag [#allocation4], 1
    %2827 = vsyncpa %s2826, 1

</llo_original>
